<compile_context>
chip_gen: v6e
topology: v6e:2x2x1
jax: 0.10.0
libtpu: 0.0.40
codegen_flags: <defaults>
</compile_context>

<pallas_src>
import math
import functools

import jax
import jax.numpy as jnp
from jax import lax
from jax.experimental import pallas as pl
from jax.experimental.pallas import tpu as pltpu

# ---- small, module-consistent problem sizes ----
B = 2            # batch
S = 16           # sequence length
H = 128          # hidden_size
NH = 4           # num_heads
HD = H // NH     # head_size
FF = 256         # intermediate_size (BaseMLP width)
EPS = 1e-6       # layer_norm_epsilon
NUM_BUCKETS = 32
MAX_DISTANCE = 128
SCALE = 1.0 / math.sqrt(HD)


def _rmsnorm(x, w):
    # T5LayerNorm: weight * x * rsqrt(mean(x^2) + eps)
    var = jnp.mean(x * x, axis=-1, keepdims=True)
    return w * (x * lax.rsqrt(var + EPS))


# ----------------------------- fused Pallas kernel -----------------------------

def _make_block_kernel(with_cross: bool):
    def kernel(x_ref, bias_ref, wln_ref,
               wqkv0_ref, bqkv0_ref, wo0_ref, bo0_ref,
               wqkv1_ref, bqkv1_ref, wo1_ref, bo1_ref,
               w1_ref, b1_ref, w2_ref, b2_ref,
               out_ref):
        x = x_ref[0]                                   # (S, H)
        wln = wln_ref[...]                             # (1, H)

        def attention(h_in, wqkv, bqkv, wo_heads, bo, bias):
            ln = _rmsnorm(h_in, wln)                   # (S, H)
            # Fused QKV projection: one (S, H) @ (H, 3H) matmul.
            qkv = jnp.dot(ln, wqkv, preferred_element_type=jnp.float32) + bqkv
            q = qkv[:, 0:H]                            # tile-aligned slices
            k = qkv[:, H:2 * H]
            v = qkv[:, 2 * H:3 * H]
            # Head split into a leading batch dim: (NH, S, HD).
            qh = jnp.stack([q[:, h * HD:(h + 1) * HD] for h in range(NH)], axis=0)
            kh = jnp.stack([k[:, h * HD:(h + 1) * HD] for h in range(NH)], axis=0)
            vh = jnp.stack([v[:, h * HD:(h + 1) * HD] for h in range(NH)], axis=0)
            # Batched scores over heads: (NH, S, S).
            s = lax.dot_general(qh, kh, (((2,), (2,)), ((0,), (0,))),
                                preferred_element_type=jnp.float32) * SCALE
            if bias is not None:
                s = s + bias                           # relative-position bias
            s = s - jnp.max(s, axis=-1, keepdims=True)
            p = jnp.exp(s)
            p = p * pl.reciprocal(jnp.sum(p, axis=-1, keepdims=True), approx=True)
            # Batched context: (NH, S, HD).
            ctx = lax.dot_general(p, vh, (((2,), (1,)), ((0,), (0,))),
                                  preferred_element_type=jnp.float32)
            # Output projection: batched against (NH, HD, H), reduce over heads.
            proj = lax.dot_general(ctx, wo_heads, (((2,), (1,)), ((0,), (0,))),
                                   preferred_element_type=jnp.float32)
            return jnp.sum(proj, axis=0) + bo          # (S, H)

        # self-attention sub-layer (residual folded in, shared layer norm)
        h = x + attention(x, wqkv0_ref[...], bqkv0_ref[...], wo0_ref[...],
                          bo0_ref[...], bias_ref[...])
        if with_cross:
            # NOTE: the reference T5Block's "cross" attention only uses
            # encoder_hidden_states as a gate; it re-attends over the decoder
            # states with no position bias.  Reproduced exactly.
            h = h + attention(h, wqkv1_ref[...], bqkv1_ref[...], wo1_ref[...],
                              bo1_ref[...], None)

        # feed-forward sub-layer
        ln = _rmsnorm(h, wln)
        f = jnp.dot(ln, w1_ref[...], preferred_element_type=jnp.float32) + b1_ref[...]
        # TODO(synk): BaseMLP source not given; using ReLU (config
        # feed_forward_proj='relu') with nn.Linear-style biases.
        f = jnp.maximum(f, 0.0)
        f = jnp.dot(f, w2_ref[...], preferred_element_type=jnp.float32) + b2_ref[...]
        out_ref[0] = h + f

    return kernel


# ------------------------------ wrapper ------------------------------

def _rep_spec(shape):
    return pl.BlockSpec(shape, lambda b, _n=len(shape): (0,) * _n)


@functools.partial(jax.jit, static_argnames=("with_cross",))
def _t5_block_jit(hidden_states, params, with_cross):
    pos_bias = compute_position_bias(params["rel_bias"], S, S)     # (1,NH,S,S)
    wqkv0, bqkv0, wo0, bo0 = params["attn0"]
    wqkv1, bqkv1, wo1, bo1 = params["attn1"]
    w1, b1, w2, b2 = params["mlp"]
    wln = params["ln_w"]

    out = pl.pallas_call(
        _make_block_kernel(with_cross),
        out_shape=jax.ShapeDtypeStruct(hidden_states.shape, hidden_states.dtype),
        grid=(B,),
        in_specs=[
            pl.BlockSpec((1, S, H), lambda b: (b, 0, 0)),      # x
            _rep_spec((NH, S, S)),                             # position bias
            _rep_spec((1, H)),                                 # shared layer norm
            _rep_spec((H, 3 * H)), _rep_spec((1, 3 * H)),      # attn0 Wqkv, bqkv
            _rep_spec((NH, HD, H)), _rep_spec((1, H)),         # attn0 Wo, bo
            _rep_spec((H, 3 * H)), _rep_spec((1, 3 * H)),      # attn1 Wqkv, bqkv
            _rep_spec((NH, HD, H)), _rep_spec((1, H)),         # attn1 Wo, bo
            _rep_spec((H, FF)), _rep_spec((1, FF)),            # W1, b1
            _rep_spec((FF, H)), _rep_spec((1, H)),             # W2, b2
        ],
        out_specs=pl.BlockSpec((1, S, H), lambda b: (b, 0, 0)),
        compiler_params=pltpu.CompilerParams(
            dimension_semantics=("parallel",)),
    )(hidden_states, pos_bias[0], wln,
      wqkv0, bqkv0, wo0, bo0, wqkv1, bqkv1, wo1, bo1, w1, b1, w2, b2)
    return out, pos_bias


def t5_block_forward(hidden_states, params, encoder_hidden_states=None):
    """Matches T5Block(config, has_relative_attention_bias=True).forward with
    attention_mask=None, encoder_attention_mask=None, dropout in eval mode.
    Returns (hidden_states, position_bias)."""
    return _t5_block_jit(hidden_states, params,
                         with_cross=encoder_hidden_states is not None)


# ---------------- relative position bias (plain-JAX glue) ----------------

def _relative_position_bucket(rp, num_buckets=NUM_BUCKETS, max_distance=MAX_DISTANCE):
    num_buckets = num_buckets // 2                  # bidirectional=True
    rb = (rp > 0).astype(jnp.int32) * num_buckets
    rp = jnp.abs(rp)
    max_exact = num_buckets // 2
    is_small = rp < max_exact
    rp_large = max_exact + (
        jnp.log(jnp.maximum(rp, 1).astype(jnp.float32) / max_exact)
        / math.log(max_distance / max_exact) * (num_buckets - max_exact)
    ).astype(jnp.int32)
    rp_large = jnp.minimum(rp_large, num_buckets - 1)
    return rb + jnp.where(is_small, rp, rp_large)


def compute_position_bias(rel_emb, q_len, k_len):
    ctx = jnp.arange(q_len)[:, None]
    mem = jnp.arange(k_len)[None, :]
    buckets = _relative_position_bucket(mem - ctx)   # (q, k)
    values = rel_emb[buckets]                        # (q, k, NH)
    return jnp.transpose(values, (2, 0, 1))[None]    # (1, NH, q, k)


# ------------------------------ pure-JAX reference ------------------------------

def _ref_attention(x, wln, wqkv, bqkv, wo_heads, bo, bias):
    ln = _rmsnorm(x, wln)
    qkv = ln @ wqkv + bqkv                           # (B, S, 3H)
    q, k, v = qkv[..., 0:H], qkv[..., H:2 * H], qkv[..., 2 * H:3 * H]
    q = q.reshape(B, S, NH, HD).transpose(0, 2, 1, 3)
    k = k.reshape(B, S, NH, HD).transpose(0, 2, 1, 3)
    v = v.reshape(B, S, NH, HD).transpose(0, 2, 1, 3)
    scores = jnp.einsum("bhqd,bhkd->bhqk", q, k) / math.sqrt(HD)
    if bias is not None:
        scores = scores + bias
    w = jax.nn.softmax(scores, axis=-1)
    ctxv = jnp.einsum("bhqk,bhkd->bhqd", w, v).transpose(0, 2, 1, 3).reshape(B, S, H)
    return x + ctxv @ wo_heads.reshape(H, H) + bo


def _ref_ffn(x, wln, w1, b1, w2, b2):
    ln = _rmsnorm(x, wln)
    return x + jnp.maximum(ln @ w1 + b1, 0.0) @ w2 + b2


def ref_block(x, params, encoder_hidden_states=None):
    pos_bias = compute_position_bias(params["rel_bias"], S, S)
    wln = params["ln_w"]
    h = _ref_attention(x, wln, *params["attn0"], bias=pos_bias)
    if encoder_hidden_states is not None:
        h = _ref_attention(h, wln, *params["attn1"], bias=None)
    h = _ref_ffn(h, wln, *params["mlp"])
    return h, pos_bias


# ------------------------------ param init ------------------------------

def init_params(key):
    std = 0.02
    ks = list(jax.random.split(key, 6))

    def lin(k, din, dout):
        kw, kb = jax.random.split(k)
        return (jax.random.normal(kw, (din, dout), jnp.float32) * std,
                jax.random.normal(kb, (1, dout), jnp.float32) * std)

    def attn_params(k):
        kq, kk, kv, ko = jax.random.split(k, 4)
        wq, bq = lin(kq, H, H)
        wk, bk = lin(kk, H, H)
        wv, bv = lin(kv, H, H)
        wo, bo = lin(ko, H, H)
        wqkv = jnp.concatenate([wq, wk, wv], axis=1)     # (H, 3H) fused QKV
        bqkv = jnp.concatenate([bq, bk, bv], axis=1)     # (1, 3H)
        wo_heads = wo.reshape(NH, HD, H)                 # per-head Wo blocks
        return (wqkv, bqkv, wo_heads, bo)

    attn0 = attn_params(ks[0])
    attn1 = attn_params(ks[1])
    w1, b1 = lin(ks[2], H, FF)
    w2, b2 = lin(ks[3], FF, H)
    ln_w = jnp.ones((1, H), jnp.float32)
    rel_bias = jax.random.normal(ks[4], (NUM_BUCKETS, NH), jnp.float32) * std
    return {"attn0": attn0, "attn1": attn1, "mlp": (w1, b1, w2, b2),
            "ln_w": ln_w, "rel_bias": rel_bias}


if __name__ == "__main__":
    key = jax.random.PRNGKey(0)
    kx, ke, kp = jax.random.split(key, 3)
    hidden_states = jax.random.normal(kx, (B, S, H), jnp.float32)
    encoder_hidden_states = jax.random.normal(ke, (B, S, H), jnp.float32)
    params = init_params(kp)

    out, pos_bias = t5_block_forward(hidden_states, params,
                                     encoder_hidden_states=encoder_hidden_states)
    out = jax.block_until_ready(out)
    pos_bias = jax.block_until_ready(pos_bias)

    ref_out, ref_bias = ref_block(hidden_states, params, encoder_hidden_states)
    assert out.shape == (B, S, H) and pos_bias.shape == (1, NH, S, S)
    assert jnp.allclose(out, ref_out, atol=1e-3, rtol=1e-3), "kernel mismatch vs reference"
    assert jnp.allclose(pos_bias, ref_bias, atol=1e-6), "position bias mismatch"
    print("KERNEL_OK")
</pallas_src>

<mosaic_0001>
module attributes {stable_mosaic.version = 11 : i64} {
  func.func @kernel(%arg0: i32, %arg1: memref<1x16x128xf32, #tpu.memory_space<vmem>>, %arg2: memref<4x16x16xf32, #tpu.memory_space<vmem>>, %arg3: memref<1x128xf32, #tpu.memory_space<vmem>>, %arg4: memref<128x384xf32, #tpu.memory_space<vmem>>, %arg5: memref<1x384xf32, #tpu.memory_space<vmem>>, %arg6: memref<4x32x128xf32, #tpu.memory_space<vmem>>, %arg7: memref<1x128xf32, #tpu.memory_space<vmem>>, %arg8: memref<128x384xf32, #tpu.memory_space<vmem>>, %arg9: memref<1x384xf32, #tpu.memory_space<vmem>>, %arg10: memref<4x32x128xf32, #tpu.memory_space<vmem>>, %arg11: memref<1x128xf32, #tpu.memory_space<vmem>>, %arg12: memref<128x256xf32, #tpu.memory_space<vmem>>, %arg13: memref<1x256xf32, #tpu.memory_space<vmem>>, %arg14: memref<256x128xf32, #tpu.memory_space<vmem>>, %arg15: memref<1x128xf32, #tpu.memory_space<vmem>>, %arg16: memref<1x16x128xf32, #tpu.memory_space<vmem>>) attributes {dimension_semantics = [#tpu.dimension_semantics<parallel>], iteration_bounds = array<i64: 2>, scalar_prefetch = 0 : i64, scratch_operands = 0 : i64, tpu.core_type = #tpu.core_type<tc>, window_params = [{transform_indices = @transform_0, window_bounds = array<i64: 1, 16, 128>}, {pipeline_mode = #tpu.pipeline_mode<synchronous>, transform_indices = @transform_1, window_bounds = array<i64: 4, 16, 16>}, {pipeline_mode = #tpu.pipeline_mode<synchronous>, transform_indices = @transform_2, window_bounds = array<i64: 1, 128>}, {pipeline_mode = #tpu.pipeline_mode<synchronous>, transform_indices = @transform_3, window_bounds = array<i64: 128, 384>}, {pipeline_mode = #tpu.pipeline_mode<synchronous>, transform_indices = @transform_4, window_bounds = array<i64: 1, 384>}, {pipeline_mode = #tpu.pipeline_mode<synchronous>, transform_indices = @transform_5, window_bounds = array<i64: 4, 32, 128>}, {pipeline_mode = #tpu.pipeline_mode<synchronous>, transform_indices = @transform_6, window_bounds = array<i64: 1, 128>}, {pipeline_mode = #tpu.pipeline_mode<synchronous>, transform_indices = @transform_7, window_bounds = array<i64: 128, 384>}, {pipeline_mode = #tpu.pipeline_mode<synchronous>, transform_indices = @transform_8, window_bounds = array<i64: 1, 384>}, {pipeline_mode = #tpu.pipeline_mode<synchronous>, transform_indices = @transform_9, window_bounds = array<i64: 4, 32, 128>}, {pipeline_mode = #tpu.pipeline_mode<synchronous>, transform_indices = @transform_10, window_bounds = array<i64: 1, 128>}, {pipeline_mode = #tpu.pipeline_mode<synchronous>, transform_indices = @transform_11, window_bounds = array<i64: 128, 256>}, {pipeline_mode = #tpu.pipeline_mode<synchronous>, transform_indices = @transform_12, window_bounds = array<i64: 1, 256>}, {pipeline_mode = #tpu.pipeline_mode<synchronous>, transform_indices = @transform_13, window_bounds = array<i64: 256, 128>}, {pipeline_mode = #tpu.pipeline_mode<synchronous>, transform_indices = @transform_14, window_bounds = array<i64: 1, 128>}, {transform_indices = @transform_15, window_bounds = array<i64: 1, 16, 128>}]} {
    %c0 = arith.constant 0 : index
    %c0_0 = arith.constant 0 : index
    %c0_1 = arith.constant 0 : index
    %0 = vector.load %arg1[%c0, %c0_0, %c0_1] : memref<1x16x128xf32, #tpu.memory_space<vmem>>, vector<1x16x128xf32>
    %1 = vector.shape_cast %0 : vector<1x16x128xf32> to vector<16x128xf32>
    %c0_2 = arith.constant 0 : index
    %c0_3 = arith.constant 0 : index
    %2 = vector.load %arg3[%c0_2, %c0_3] : memref<1x128xf32, #tpu.memory_space<vmem>>, vector<1x128xf32>
    %c0_4 = arith.constant 0 : index
    %c0_5 = arith.constant 0 : index
    %3 = vector.load %arg4[%c0_4, %c0_5] : memref<128x384xf32, #tpu.memory_space<vmem>>, vector<128x384xf32>
    %c0_6 = arith.constant 0 : index
    %c0_7 = arith.constant 0 : index
    %4 = vector.load %arg5[%c0_6, %c0_7] : memref<1x384xf32, #tpu.memory_space<vmem>>, vector<1x384xf32>
    %c0_8 = arith.constant 0 : index
    %c0_9 = arith.constant 0 : index
    %c0_10 = arith.constant 0 : index
    %5 = vector.load %arg6[%c0_8, %c0_9, %c0_10] : memref<4x32x128xf32, #tpu.memory_space<vmem>>, vector<4x32x128xf32>
    %c0_11 = arith.constant 0 : index
    %c0_12 = arith.constant 0 : index
    %6 = vector.load %arg7[%c0_11, %c0_12] : memref<1x128xf32, #tpu.memory_space<vmem>>, vector<1x128xf32>
    %c0_13 = arith.constant 0 : index
    %c0_14 = arith.constant 0 : index
    %c0_15 = arith.constant 0 : index
    %7 = vector.load %arg2[%c0_13, %c0_14, %c0_15] : memref<4x16x16xf32, #tpu.memory_space<vmem>>, vector<4x16x16xf32>
    %8 = arith.mulf %1, %1 : vector<16x128xf32>
    %cst = arith.constant dense<0.000000e+00> : vector<16xf32>
    %9 = vector.multi_reduction <add>, %8, %cst [1] : vector<16x128xf32> to vector<16xf32>
    %10 = vector.shape_cast %9 : vector<16xf32> to vector<16x1xf32>
    %cst_16 = arith.constant 1.280000e+02 : f32
    %11 = vector.broadcast %cst_16 : f32 to vector<16x1xf32>
    %12 = arith.divf %10, %11 : vector<16x1xf32>
    %cst_17 = arith.constant 9.99999997E-7 : f32
    %13 = vector.broadcast %cst_17 : f32 to vector<16x1xf32>
    %14 = arith.addf %12, %13 : vector<16x1xf32>
    %15 = math.rsqrt %14 : vector<16x1xf32>
    %16 = vector.broadcast %15 : vector<16x1xf32> to vector<16x128xf32>
    %17 = arith.mulf %1, %16 : vector<16x128xf32>
    %18 = vector.broadcast %2 : vector<1x128xf32> to vector<16x128xf32>
    %19 = arith.mulf %18, %17 : vector<16x128xf32>
    %cst_18 = arith.constant dense<0.000000e+00> : vector<16x384xf32>
    %20 = tpu.matmul %19, %3, %cst_18 {dimension_numbers = #tpu.dot_dimension_numbers<[1], [0], [0], [1], [0, 0, 1, 1], [], []>} : vector<16x128xf32>, vector<128x384xf32>, vector<16x384xf32> -> vector<16x384xf32>
    %21 = vector.broadcast %4 : vector<1x384xf32> to vector<16x384xf32>
    %22 = arith.addf %20, %21 : vector<16x384xf32>
    %23 = vector.extract_strided_slice %22 {offsets = [0, 0], sizes = [16, 128], strides = [1, 1]} : vector<16x384xf32> to vector<16x128xf32>
    %24 = vector.extract_strided_slice %22 {offsets = [0, 128], sizes = [16, 128], strides = [1, 1]} : vector<16x384xf32> to vector<16x128xf32>
    %25 = vector.extract_strided_slice %22 {offsets = [0, 256], sizes = [16, 128], strides = [1, 1]} : vector<16x384xf32> to vector<16x128xf32>
    %26 = vector.extract_strided_slice %23 {offsets = [0, 0], sizes = [16, 32], strides = [1, 1]} : vector<16x128xf32> to vector<16x32xf32>
    %27 = vector.extract_strided_slice %23 {offsets = [0, 32], sizes = [16, 32], strides = [1, 1]} : vector<16x128xf32> to vector<16x32xf32>
    %28 = vector.extract_strided_slice %23 {offsets = [0, 64], sizes = [16, 32], strides = [1, 1]} : vector<16x128xf32> to vector<16x32xf32>
    %29 = vector.extract_strided_slice %23 {offsets = [0, 96], sizes = [16, 32], strides = [1, 1]} : vector<16x128xf32> to vector<16x32xf32>
    %30 = vector.shape_cast %26 : vector<16x32xf32> to vector<1x16x32xf32>
    %31 = vector.shape_cast %27 : vector<16x32xf32> to vector<1x16x32xf32>
    %32 = vector.shape_cast %28 : vector<16x32xf32> to vector<1x16x32xf32>
    %33 = vector.shape_cast %29 : vector<16x32xf32> to vector<1x16x32xf32>
    %34 = tpu.concatenate %30, %31, %32, %33 in 0 : vector<1x16x32xf32>, vector<1x16x32xf32>, vector<1x16x32xf32>, vector<1x16x32xf32> -> vector<4x16x32xf32>
    %35 = vector.extract_strided_slice %24 {offsets = [0, 0], sizes = [16, 32], strides = [1, 1]} : vector<16x128xf32> to vector<16x32xf32>
    %36 = vector.extract_strided_slice %24 {offsets = [0, 32], sizes = [16, 32], strides = [1, 1]} : vector<16x128xf32> to vector<16x32xf32>
    %37 = vector.extract_strided_slice %24 {offsets = [0, 64], sizes = [16, 32], strides = [1, 1]} : vector<16x128xf32> to vector<16x32xf32>
    %38 = vector.extract_strided_slice %24 {offsets = [0, 96], sizes = [16, 32], strides = [1, 1]} : vector<16x128xf32> to vector<16x32xf32>
    %39 = vector.shape_cast %35 : vector<16x32xf32> to vector<1x16x32xf32>
    %40 = vector.shape_cast %36 : vector<16x32xf32> to vector<1x16x32xf32>
    %41 = vector.shape_cast %37 : vector<16x32xf32> to vector<1x16x32xf32>
    %42 = vector.shape_cast %38 : vector<16x32xf32> to vector<1x16x32xf32>
    %43 = tpu.concatenate %39, %40, %41, %42 in 0 : vector<1x16x32xf32>, vector<1x16x32xf32>, vector<1x16x32xf32>, vector<1x16x32xf32> -> vector<4x16x32xf32>
    %44 = vector.extract_strided_slice %25 {offsets = [0, 0], sizes = [16, 32], strides = [1, 1]} : vector<16x128xf32> to vector<16x32xf32>
    %45 = vector.extract_strided_slice %25 {offsets = [0, 32], sizes = [16, 32], strides = [1, 1]} : vector<16x128xf32> to vector<16x32xf32>
    %46 = vector.extract_strided_slice %25 {offsets = [0, 64], sizes = [16, 32], strides = [1, 1]} : vector<16x128xf32> to vector<16x32xf32>
    %47 = vector.extract_strided_slice %25 {offsets = [0, 96], sizes = [16, 32], strides = [1, 1]} : vector<16x128xf32> to vector<16x32xf32>
    %48 = vector.shape_cast %44 : vector<16x32xf32> to vector<1x16x32xf32>
    %49 = vector.shape_cast %45 : vector<16x32xf32> to vector<1x16x32xf32>
    %50 = vector.shape_cast %46 : vector<16x32xf32> to vector<1x16x32xf32>
    %51 = vector.shape_cast %47 : vector<16x32xf32> to vector<1x16x32xf32>
    %52 = tpu.concatenate %48, %49, %50, %51 in 0 : vector<1x16x32xf32>, vector<1x16x32xf32>, vector<1x16x32xf32>, vector<1x16x32xf32> -> vector<4x16x32xf32>
    %cst_19 = arith.constant dense<0.000000e+00> : vector<4x16x16xf32>
    %53 = tpu.matmul %34, %43, %cst_19 {dimension_numbers = #tpu.dot_dimension_numbers<[2], [2], [1], [1], [0, 0, 0, 1, 1, 1], [0], [0]>} : vector<4x16x32xf32>, vector<4x16x32xf32>, vector<4x16x16xf32> -> vector<4x16x16xf32>
    %cst_20 = arith.constant 0.176776692 : f32
    %54 = vector.broadcast %cst_20 : f32 to vector<4x16x16xf32>
    %55 = arith.mulf %53, %54 : vector<4x16x16xf32>
    %56 = arith.addf %55, %7 : vector<4x16x16xf32>
    %cst_21 = arith.constant dense<0xFF800000> : vector<4x16xf32>
    %57 = vector.multi_reduction <maximumf>, %56, %cst_21 [2] : vector<4x16x16xf32> to vector<4x16xf32>
    %58 = vector.shape_cast %57 : vector<4x16xf32> to vector<4x16x1xf32>
    %59 = vector.broadcast %58 : vector<4x16x1xf32> to vector<4x16x16xf32>
    %60 = arith.subf %56, %59 : vector<4x16x16xf32>
    %61 = math.exp %60 : vector<4x16x16xf32>
    %cst_22 = arith.constant dense<0.000000e+00> : vector<4x16xf32>
    %62 = vector.multi_reduction <add>, %61, %cst_22 [2] : vector<4x16x16xf32> to vector<4x16xf32>
    %63 = vector.shape_cast %62 : vector<4x16xf32> to vector<4x16x1xf32>
    %64 = tpu.reciprocal %63 {approx = true} : vector<4x16x1xf32> -> vector<4x16x1xf32>
    %65 = vector.broadcast %64 : vector<4x16x1xf32> to vector<4x16x16xf32>
    %66 = arith.mulf %61, %65 : vector<4x16x16xf32>
    %cst_23 = arith.constant dense<0.000000e+00> : vector<4x16x32xf32>
    %67 = tpu.matmul %66, %52, %cst_23 {dimension_numbers = #tpu.dot_dimension_numbers<[2], [1], [1], [2], [0, 0, 0, 1, 1, 2], [0], [0]>} : vector<4x16x16xf32>, vector<4x16x32xf32>, vector<4x16x32xf32> -> vector<4x16x32xf32>
    %cst_24 = arith.constant dense<0.000000e+00> : vector<4x16x128xf32>
    %68 = tpu.matmul %67, %5, %cst_24 {dimension_numbers = #tpu.dot_dimension_numbers<[2], [1], [1], [2], [0, 0, 0, 1, 1, 2], [0], [0]>} : vector<4x16x32xf32>, vector<4x32x128xf32>, vector<4x16x128xf32> -> vector<4x16x128xf32>
    %cst_25 = arith.constant dense<0.000000e+00> : vector<16x128xf32>
    %69 = vector.multi_reduction <add>, %68, %cst_25 [0] : vector<4x16x128xf32> to vector<16x128xf32>
    %70 = vector.broadcast %6 : vector<1x128xf32> to vector<16x128xf32>
    %71 = arith.addf %69, %70 : vector<16x128xf32>
    %72 = arith.addf %1, %71 : vector<16x128xf32>
    %c0_26 = arith.constant 0 : index
    %c0_27 = arith.constant 0 : index
    %73 = vector.load %arg8[%c0_26, %c0_27] : memref<128x384xf32, #tpu.memory_space<vmem>>, vector<128x384xf32>
    %c0_28 = arith.constant 0 : index
    %c0_29 = arith.constant 0 : index
    %74 = vector.load %arg9[%c0_28, %c0_29] : memref<1x384xf32, #tpu.memory_space<vmem>>, vector<1x384xf32>
    %c0_30 = arith.constant 0 : index
    %c0_31 = arith.constant 0 : index
    %c0_32 = arith.constant 0 : index
    %75 = vector.load %arg10[%c0_30, %c0_31, %c0_32] : memref<4x32x128xf32, #tpu.memory_space<vmem>>, vector<4x32x128xf32>
    %c0_33 = arith.constant 0 : index
    %c0_34 = arith.constant 0 : index
    %76 = vector.load %arg11[%c0_33, %c0_34] : memref<1x128xf32, #tpu.memory_space<vmem>>, vector<1x128xf32>
    %77 = arith.mulf %72, %72 : vector<16x128xf32>
    %cst_35 = arith.constant dense<0.000000e+00> : vector<16xf32>
    %78 = vector.multi_reduction <add>, %77, %cst_35 [1] : vector<16x128xf32> to vector<16xf32>
    %79 = vector.shape_cast %78 : vector<16xf32> to vector<16x1xf32>
    %cst_36 = arith.constant 1.280000e+02 : f32
    %80 = vector.broadcast %cst_36 : f32 to vector<16x1xf32>
    %81 = arith.divf %79, %80 : vector<16x1xf32>
    %cst_37 = arith.constant 9.99999997E-7 : f32
    %82 = vector.broadcast %cst_37 : f32 to vector<16x1xf32>
    %83 = arith.addf %81, %82 : vector<16x1xf32>
    %84 = math.rsqrt %83 : vector<16x1xf32>
    %85 = vector.broadcast %84 : vector<16x1xf32> to vector<16x128xf32>
    %86 = arith.mulf %72, %85 : vector<16x128xf32>
    %87 = vector.broadcast %2 : vector<1x128xf32> to vector<16x128xf32>
    %88 = arith.mulf %87, %86 : vector<16x128xf32>
    %cst_38 = arith.constant dense<0.000000e+00> : vector<16x384xf32>
    %89 = tpu.matmul %88, %73, %cst_38 {dimension_numbers = #tpu.dot_dimension_numbers<[1], [0], [0], [1], [0, 0, 1, 1], [], []>} : vector<16x128xf32>, vector<128x384xf32>, vector<16x384xf32> -> vector<16x384xf32>
    %90 = vector.broadcast %74 : vector<1x384xf32> to vector<16x384xf32>
    %91 = arith.addf %89, %90 : vector<16x384xf32>
    %92 = vector.extract_strided_slice %91 {offsets = [0, 0], sizes = [16, 128], strides = [1, 1]} : vector<16x384xf32> to vector<16x128xf32>
    %93 = vector.extract_strided_slice %91 {offsets = [0, 128], sizes = [16, 128], strides = [1, 1]} : vector<16x384xf32> to vector<16x128xf32>
    %94 = vector.extract_strided_slice %91 {offsets = [0, 256], sizes = [16, 128], strides = [1, 1]} : vector<16x384xf32> to vector<16x128xf32>
    %95 = vector.extract_strided_slice %92 {offsets = [0, 0], sizes = [16, 32], strides = [1, 1]} : vector<16x128xf32> to vector<16x32xf32>
    %96 = vector.extract_strided_slice %92 {offsets = [0, 32], sizes = [16, 32], strides = [1, 1]} : vector<16x128xf32> to vector<16x32xf32>
    %97 = vector.extract_strided_slice %92 {offsets = [0, 64], sizes = [16, 32], strides = [1, 1]} : vector<16x128xf32> to vector<16x32xf32>
    %98 = vector.extract_strided_slice %92 {offsets = [0, 96], sizes = [16, 32], strides = [1, 1]} : vector<16x128xf32> to vector<16x32xf32>
    %99 = vector.shape_cast %95 : vector<16x32xf32> to vector<1x16x32xf32>
    %100 = vector.shape_cast %96 : vector<16x32xf32> to vector<1x16x32xf32>
    %101 = vector.shape_cast %97 : vector<16x32xf32> to vector<1x16x32xf32>
    %102 = vector.shape_cast %98 : vector<16x32xf32> to vector<1x16x32xf32>
    %103 = tpu.concatenate %99, %100, %101, %102 in 0 : vector<1x16x32xf32>, vector<1x16x32xf32>, vector<1x16x32xf32>, vector<1x16x32xf32> -> vector<4x16x32xf32>
    %104 = vector.extract_strided_slice %93 {offsets = [0, 0], sizes = [16, 32], strides = [1, 1]} : vector<16x128xf32> to vector<16x32xf32>
    %105 = vector.extract_strided_slice %93 {offsets = [0, 32], sizes = [16, 32], strides = [1, 1]} : vector<16x128xf32> to vector<16x32xf32>
    %106 = vector.extract_strided_slice %93 {offsets = [0, 64], sizes = [16, 32], strides = [1, 1]} : vector<16x128xf32> to vector<16x32xf32>
    %107 = vector.extract_strided_slice %93 {offsets = [0, 96], sizes = [16, 32], strides = [1, 1]} : vector<16x128xf32> to vector<16x32xf32>
    %108 = vector.shape_cast %104 : vector<16x32xf32> to vector<1x16x32xf32>
    %109 = vector.shape_cast %105 : vector<16x32xf32> to vector<1x16x32xf32>
    %110 = vector.shape_cast %106 : vector<16x32xf32> to vector<1x16x32xf32>
    %111 = vector.shape_cast %107 : vector<16x32xf32> to vector<1x16x32xf32>
    %112 = tpu.concatenate %108, %109, %110, %111 in 0 : vector<1x16x32xf32>, vector<1x16x32xf32>, vector<1x16x32xf32>, vector<1x16x32xf32> -> vector<4x16x32xf32>
    %113 = vector.extract_strided_slice %94 {offsets = [0, 0], sizes = [16, 32], strides = [1, 1]} : vector<16x128xf32> to vector<16x32xf32>
    %114 = vector.extract_strided_slice %94 {offsets = [0, 32], sizes = [16, 32], strides = [1, 1]} : vector<16x128xf32> to vector<16x32xf32>
    %115 = vector.extract_strided_slice %94 {offsets = [0, 64], sizes = [16, 32], strides = [1, 1]} : vector<16x128xf32> to vector<16x32xf32>
    %116 = vector.extract_strided_slice %94 {offsets = [0, 96], sizes = [16, 32], strides = [1, 1]} : vector<16x128xf32> to vector<16x32xf32>
    %117 = vector.shape_cast %113 : vector<16x32xf32> to vector<1x16x32xf32>
    %118 = vector.shape_cast %114 : vector<16x32xf32> to vector<1x16x32xf32>
    %119 = vector.shape_cast %115 : vector<16x32xf32> to vector<1x16x32xf32>
    %120 = vector.shape_cast %116 : vector<16x32xf32> to vector<1x16x32xf32>
    %121 = tpu.concatenate %117, %118, %119, %120 in 0 : vector<1x16x32xf32>, vector<1x16x32xf32>, vector<1x16x32xf32>, vector<1x16x32xf32> -> vector<4x16x32xf32>
    %cst_39 = arith.constant dense<0.000000e+00> : vector<4x16x16xf32>
    %122 = tpu.matmul %103, %112, %cst_39 {dimension_numbers = #tpu.dot_dimension_numbers<[2], [2], [1], [1], [0, 0, 0, 1, 1, 1], [0], [0]>} : vector<4x16x32xf32>, vector<4x16x32xf32>, vector<4x16x16xf32> -> vector<4x16x16xf32>
    %cst_40 = arith.constant 0.176776692 : f32
    %123 = vector.broadcast %cst_40 : f32 to vector<4x16x16xf32>
    %124 = arith.mulf %122, %123 : vector<4x16x16xf32>
    %cst_41 = arith.constant dense<0xFF800000> : vector<4x16xf32>
    %125 = vector.multi_reduction <maximumf>, %124, %cst_41 [2] : vector<4x16x16xf32> to vector<4x16xf32>
    %126 = vector.shape_cast %125 : vector<4x16xf32> to vector<4x16x1xf32>
    %127 = vector.broadcast %126 : vector<4x16x1xf32> to vector<4x16x16xf32>
    %128 = arith.subf %124, %127 : vector<4x16x16xf32>
    %129 = math.exp %128 : vector<4x16x16xf32>
    %cst_42 = arith.constant dense<0.000000e+00> : vector<4x16xf32>
    %130 = vector.multi_reduction <add>, %129, %cst_42 [2] : vector<4x16x16xf32> to vector<4x16xf32>
    %131 = vector.shape_cast %130 : vector<4x16xf32> to vector<4x16x1xf32>
    %132 = tpu.reciprocal %131 {approx = true} : vector<4x16x1xf32> -> vector<4x16x1xf32>
    %133 = vector.broadcast %132 : vector<4x16x1xf32> to vector<4x16x16xf32>
    %134 = arith.mulf %129, %133 : vector<4x16x16xf32>
    %cst_43 = arith.constant dense<0.000000e+00> : vector<4x16x32xf32>
    %135 = tpu.matmul %134, %121, %cst_43 {dimension_numbers = #tpu.dot_dimension_numbers<[2], [1], [1], [2], [0, 0, 0, 1, 1, 2], [0], [0]>} : vector<4x16x16xf32>, vector<4x16x32xf32>, vector<4x16x32xf32> -> vector<4x16x32xf32>
    %cst_44 = arith.constant dense<0.000000e+00> : vector<4x16x128xf32>
    %136 = tpu.matmul %135, %75, %cst_44 {dimension_numbers = #tpu.dot_dimension_numbers<[2], [1], [1], [2], [0, 0, 0, 1, 1, 2], [0], [0]>} : vector<4x16x32xf32>, vector<4x32x128xf32>, vector<4x16x128xf32> -> vector<4x16x128xf32>
    %cst_45 = arith.constant dense<0.000000e+00> : vector<16x128xf32>
    %137 = vector.multi_reduction <add>, %136, %cst_45 [0] : vector<4x16x128xf32> to vector<16x128xf32>
    %138 = vector.broadcast %76 : vector<1x128xf32> to vector<16x128xf32>
    %139 = arith.addf %137, %138 : vector<16x128xf32>
    %140 = arith.addf %72, %139 : vector<16x128xf32>
    %141 = arith.mulf %140, %140 : vector<16x128xf32>
    %cst_46 = arith.constant dense<0.000000e+00> : vector<16xf32>
    %142 = vector.multi_reduction <add>, %141, %cst_46 [1] : vector<16x128xf32> to vector<16xf32>
    %143 = vector.shape_cast %142 : vector<16xf32> to vector<16x1xf32>
    %cst_47 = arith.constant 1.280000e+02 : f32
    %144 = vector.broadcast %cst_47 : f32 to vector<16x1xf32>
    %145 = arith.divf %143, %144 : vector<16x1xf32>
    %cst_48 = arith.constant 9.99999997E-7 : f32
    %146 = vector.broadcast %cst_48 : f32 to vector<16x1xf32>
    %147 = arith.addf %145, %146 : vector<16x1xf32>
    %148 = math.rsqrt %147 : vector<16x1xf32>
    %149 = vector.broadcast %148 : vector<16x1xf32> to vector<16x128xf32>
    %150 = arith.mulf %140, %149 : vector<16x128xf32>
    %151 = vector.broadcast %2 : vector<1x128xf32> to vector<16x128xf32>
    %152 = arith.mulf %151, %150 : vector<16x128xf32>
    %c0_49 = arith.constant 0 : index
    %c0_50 = arith.constant 0 : index
    %153 = vector.load %arg12[%c0_49, %c0_50] : memref<128x256xf32, #tpu.memory_space<vmem>>, vector<128x256xf32>
    %cst_51 = arith.constant dense<0.000000e+00> : vector<16x256xf32>
    %154 = tpu.matmul %152, %153, %cst_51 {dimension_numbers = #tpu.dot_dimension_numbers<[1], [0], [0], [1], [0, 0, 1, 1], [], []>} : vector<16x128xf32>, vector<128x256xf32>, vector<16x256xf32> -> vector<16x256xf32>
    %c0_52 = arith.constant 0 : index
    %c0_53 = arith.constant 0 : index
    %155 = vector.load %arg13[%c0_52, %c0_53] : memref<1x256xf32, #tpu.memory_space<vmem>>, vector<1x256xf32>
    %156 = vector.broadcast %155 : vector<1x256xf32> to vector<16x256xf32>
    %157 = arith.addf %154, %156 : vector<16x256xf32>
    %cst_54 = arith.constant 0.000000e+00 : f32
    %158 = vector.broadcast %cst_54 : f32 to vector<16x256xf32>
    %159 = arith.maximumf %157, %158 : vector<16x256xf32>
    %c0_55 = arith.constant 0 : index
    %c0_56 = arith.constant 0 : index
    %160 = vector.load %arg14[%c0_55, %c0_56] : memref<256x128xf32, #tpu.memory_space<vmem>>, vector<256x128xf32>
    %cst_57 = arith.constant dense<0.000000e+00> : vector<16x128xf32>
    %161 = tpu.matmul %159, %160, %cst_57 {dimension_numbers = #tpu.dot_dimension_numbers<[1], [0], [0], [1], [0, 0, 1, 1], [], []>} : vector<16x256xf32>, vector<256x128xf32>, vector<16x128xf32> -> vector<16x128xf32>
    %c0_58 = arith.constant 0 : index
    %c0_59 = arith.constant 0 : index
    %162 = vector.load %arg15[%c0_58, %c0_59] : memref<1x128xf32, #tpu.memory_space<vmem>>, vector<1x128xf32>
    %163 = vector.broadcast %162 : vector<1x128xf32> to vector<16x128xf32>
    %164 = arith.addf %161, %163 : vector<16x128xf32>
    %165 = arith.addf %140, %164 : vector<16x128xf32>
    %c0_60 = arith.constant 0 : index
    %c0_61 = arith.constant 0 : index
    %c0_62 = arith.constant 0 : index
    %166 = vector.load %arg16[%c0_60, %c0_61, %c0_62] : memref<1x16x128xf32, #tpu.memory_space<vmem>>, vector<1x16x128xf32>
    %167 = vector.shape_cast %166 : vector<1x16x128xf32> to vector<16x128xf32>
    %168 = vector.shape_cast %165 : vector<16x128xf32> to vector<1x16x128xf32>
    tpu.vector_store %arg16[%c0_60, %c0_61, %c0_62], %168 {strides = array<i32>} : memref<1x16x128xf32, #tpu.memory_space<vmem>>, vector<1x16x128xf32>,
    return
  }
  func.func @transform_0(%arg0: i32) -> (i32, i32, i32) {
    %c0_i32 = arith.constant 0 : i32
    %c0_i32_0 = arith.constant 0 : i32
    %c0_i32_1 = arith.constant 0 : i32
    return %arg0, %c0_i32, %c0_i32_0 : i32, i32, i32
  }
  func.func @transform_1(%arg0: i32) -> (i32, i32, i32) {
    %c0_i32 = arith.constant 0 : i32
    %c0_i32_0 = arith.constant 0 : i32
    %c0_i32_1 = arith.constant 0 : i32
    %c0_i32_2 = arith.constant 0 : i32
    return %c0_i32, %c0_i32_0, %c0_i32_1 : i32, i32, i32
  }
  func.func @transform_2(%arg0: i32) -> (i32, i32) {
    %c0_i32 = arith.constant 0 : i32
    %c0_i32_0 = arith.constant 0 : i32
    %c0_i32_1 = arith.constant 0 : i32
    return %c0_i32, %c0_i32_0 : i32, i32
  }
  func.func @transform_3(%arg0: i32) -> (i32, i32) {
    %c0_i32 = arith.constant 0 : i32
    %c0_i32_0 = arith.constant 0 : i32
    %c0_i32_1 = arith.constant 0 : i32
    return %c0_i32, %c0_i32_0 : i32, i32
  }
  func.func @transform_4(%arg0: i32) -> (i32, i32) {
    %c0_i32 = arith.constant 0 : i32
    %c0_i32_0 = arith.constant 0 : i32
    %c0_i32_1 = arith.constant 0 : i32
    return %c0_i32, %c0_i32_0 : i32, i32
  }
  func.func @transform_5(%arg0: i32) -> (i32, i32, i32) {
    %c0_i32 = arith.constant 0 : i32
    %c0_i32_0 = arith.constant 0 : i32
    %c0_i32_1 = arith.constant 0 : i32
    %c0_i32_2 = arith.constant 0 : i32
    return %c0_i32, %c0_i32_0, %c0_i32_1 : i32, i32, i32
  }
  func.func @transform_6(%arg0: i32) -> (i32, i32) {
    %c0_i32 = arith.constant 0 : i32
    %c0_i32_0 = arith.constant 0 : i32
    %c0_i32_1 = arith.constant 0 : i32
    return %c0_i32, %c0_i32_0 : i32, i32
  }
  func.func @transform_7(%arg0: i32) -> (i32, i32) {
    %c0_i32 = arith.constant 0 : i32
    %c0_i32_0 = arith.constant 0 : i32
    %c0_i32_1 = arith.constant 0 : i32
    return %c0_i32, %c0_i32_0 : i32, i32
  }
  func.func @transform_8(%arg0: i32) -> (i32, i32) {
    %c0_i32 = arith.constant 0 : i32
    %c0_i32_0 = arith.constant 0 : i32
    %c0_i32_1 = arith.constant 0 : i32
    return %c0_i32, %c0_i32_0 : i32, i32
  }
  func.func @transform_9(%arg0: i32) -> (i32, i32, i32) {
    %c0_i32 = arith.constant 0 : i32
    %c0_i32_0 = arith.constant 0 : i32
    %c0_i32_1 = arith.constant 0 : i32
    %c0_i32_2 = arith.constant 0 : i32
    return %c0_i32, %c0_i32_0, %c0_i32_1 : i32, i32, i32
  }
  func.func @transform_10(%arg0: i32) -> (i32, i32) {
    %c0_i32 = arith.constant 0 : i32
    %c0_i32_0 = arith.constant 0 : i32
    %c0_i32_1 = arith.constant 0 : i32
    return %c0_i32, %c0_i32_0 : i32, i32
  }
  func.func @transform_11(%arg0: i32) -> (i32, i32) {
    %c0_i32 = arith.constant 0 : i32
    %c0_i32_0 = arith.constant 0 : i32
    %c0_i32_1 = arith.constant 0 : i32
    return %c0_i32, %c0_i32_0 : i32, i32
  }
  func.func @transform_12(%arg0: i32) -> (i32, i32) {
    %c0_i32 = arith.constant 0 : i32
    %c0_i32_0 = arith.constant 0 : i32
    %c0_i32_1 = arith.constant 0 : i32
    return %c0_i32, %c0_i32_0 : i32, i32
  }
  func.func @transform_13(%arg0: i32) -> (i32, i32) {
    %c0_i32 = arith.constant 0 : i32
    %c0_i32_0 = arith.constant 0 : i32
    %c0_i32_1 = arith.constant 0 : i32
    return %c0_i32, %c0_i32_0 : i32, i32
  }
  func.func @transform_14(%arg0: i32) -> (i32, i32) {
    %c0_i32 = arith.constant 0 : i32
    %c0_i32_0 = arith.constant 0 : i32
    %c0_i32_1 = arith.constant 0 : i32
    return %c0_i32, %c0_i32_0 : i32, i32
  }
  func.func @transform_15(%arg0: i32) -> (i32, i32, i32) {
    %c0_i32 = arith.constant 0 : i32
    %c0_i32_0 = arith.constant 0 : i32
    %c0_i32_1 = arith.constant 0 : i32
    return %arg0, %c0_i32, %c0_i32_0 : i32, i32, i32
  }
}

</mosaic_0001>

<llo_original>
// kernel: _t5_block_jit.1
$region0: #{_t5_block_jit.1}
  #allocation0 [shape = 'u32[]', space=smem, size = 0x4, offset = 0x4, fixed_abs, tag = 'smem constant byte address 0x4 - core index']
  #allocation1 [shape = 'u32[144,128]{1,0:T(1,128)}', space=vmem, size = 0x12000, scoped, tag = 'internal scratch']
  %s0 = inlined_call_operand.vmem [shape: f32[2,16,128], index: 0, kind: input, shape index: {}]
  %s1 = inlined_call_operand.vmem [shape: f32[4,16,16], index: 1, kind: input, shape index: {}]
  %s2 = inlined_call_operand.vmem [shape: f32[1,128], index: 2, kind: input, shape index: {}]
  %s3 = inlined_call_operand.vmem [shape: f32[128,384], index: 3, kind: input, shape index: {}]
  %s4 = inlined_call_operand.vmem [shape: f32[1,384], index: 4, kind: input, shape index: {}]
  %s5 = inlined_call_operand.vmem [shape: f32[4,32,128], index: 5, kind: input, shape index: {}]
  %s6 = inlined_call_operand.vmem [shape: f32[1,128], index: 6, kind: input, shape index: {}]
  %s7 = inlined_call_operand.vmem [shape: f32[128,384], index: 7, kind: input, shape index: {}]
  %s8 = inlined_call_operand.vmem [shape: f32[1,384], index: 8, kind: input, shape index: {}]
  %s9 = inlined_call_operand.vmem [shape: f32[4,32,128], index: 9, kind: input, shape index: {}]
  %s10 = inlined_call_operand.vmem [shape: f32[1,128], index: 10, kind: input, shape index: {}]
  %s11 = inlined_call_operand.vmem [shape: f32[128,256], index: 11, kind: input, shape index: {}]
  %s12 = inlined_call_operand.vmem [shape: f32[1,256], index: 12, kind: input, shape index: {}]
  %s13 = inlined_call_operand.vmem [shape: f32[256,128], index: 13, kind: input, shape index: {}]
  %s14 = inlined_call_operand.vmem [shape: f32[1,128], index: 14, kind: input, shape index: {}]
  %s15 = inlined_call_operand.hbm [shape: f32[2,16,128], index: 15, kind: output, shape index: {}]
  %s16 = sld [smem:[#allocation0]]
  $region93: #{_t5_block_jit.1} parent=0
    _
  %s18 = ssub.s32 1, %s16
  %s19 = scalar_select 0, %s18, %s16
  $region1: #{_t5_block_jit.1} parent=0
    #allocation2 [shape = 'u8[16384]{0}', space=vmem, size = 0x4000, scoped, tag = 'output window, operand 0']
    #allocation3 [shape = 's32[2]{0}', space=sflag, size = 0x8, scoped, tag = 'scoped memory for _t5_block_jit.1']
    %20 = vsyncpa [#allocation3], 0
    %s21 = scalar_lea.sflag [#allocation3], 1
    %22 = vsyncpa %s21, 0
    loop: start=0, step=1, limit=4
    $region2: #{_t5_block_jit.1} parent=1 // loop_pre_header
      _
    $region3: #{_t5_block_jit.1} parent=1 // loop_header
      %s24 = sphi 0, %s28
      %p25 = scmp.ge.s32.totalorder %s24, 4
      %s34 = sphi 0, %s36
      %s37 = sphi 0, %s34
      %s38 = sphi 0, %s37
      %s54 = sphi 0, %s38
      %s58 = sphi 0, %s58
      %s60 = sphi 0, %s58
      %s61 = sphi 0, %s60
      %s75 = sphi 0, %s61
      %s79 = sphi 0, %s79
      %s81 = sphi 0, %s79
      %s82 = sphi 0, %s81
      %s96 = sphi 0, %s82
      %s100 = sphi 0, %s100
      %s102 = sphi 0, %s100
      %s103 = sphi 0, %s102
      %s117 = sphi 0, %s103
      %s121 = sphi 0, %s121
      %s123 = sphi 0, %s121
      %s124 = sphi 0, %s123
      %s138 = sphi 0, %s124
      %s142 = sphi 0, %s142
      %s144 = sphi 0, %s142
      %s145 = sphi 0, %s144
      %s159 = sphi 0, %s145
      %s163 = sphi 0, %s163
      %s165 = sphi 0, %s163
      %s166 = sphi 0, %s165
      %s180 = sphi 0, %s166
      %s184 = sphi 0, %s184
      %s186 = sphi 0, %s184
      %s187 = sphi 0, %s186
      %s201 = sphi 0, %s187
      %s205 = sphi 0, %s205
      %s207 = sphi 0, %s205
      %s208 = sphi 0, %s207
      %s222 = sphi 0, %s208
      %s226 = sphi 0, %s226
      %s228 = sphi 0, %s226
      %s229 = sphi 0, %s228
      %s243 = sphi 0, %s229
      %s247 = sphi 0, %s247
      %s249 = sphi 0, %s247
      %s250 = sphi 0, %s249
      %s264 = sphi 0, %s250
      %s268 = sphi 0, %s268
      %s270 = sphi 0, %s268
      %s271 = sphi 0, %s270
      %s285 = sphi 0, %s271
      %s289 = sphi 0, %s289
      %s291 = sphi 0, %s289
      %s292 = sphi 0, %s291
      %s306 = sphi 0, %s292
      %s310 = sphi 0, %s310
      %s312 = sphi 0, %s310
      %s313 = sphi 0, %s312
      %s327 = sphi 0, %s313
      %s331 = sphi 0, %s331
      %s333 = sphi 0, %s331
      %s334 = sphi 0, %s333
      %s348 = sphi 0, %s334
      %s354 = sphi 0, %s356
      %s357 = sphi 0, %s354
      %s358 = sphi 0, %s357
      %s374 = sphi 0, %s358
    $region4: #{_t5_block_jit.1} parent=1 // loop_header_branch
      %27 = sbr.rel (%p25) target = $region8
    $region5: #{_t5_block_jit.1} parent=1 // loop_body
      %s29 = ssub.s32 %s24, 1
      %s30 = ssub.s32 %s24, 2
      %s31 = sadd.s32 %s24, 1
      %s32 = ssub.s32 %s24, %s31
      %p33 = scmp.eq.s32.totalorder %s32, 0
      %s35 = sadd.s32 %s34, 1
      %s36 = scalar_select %p33, %s34, %s35
      %p39 = pneg %p33
      %p40 = scmp.eq.s32.totalorder %s24, 1
      %p41 = por %p39, %p40
      %p42 = scmp.ne.s32.totalorder %s34, %s37
      %p43 = scmp.eq.s32.totalorder %s24, 0
      %p44 = por %p42, %p43
      %p45 = scmp.ne.s32.totalorder %s34, %s37
      %p46 = scmp.eq.s32.totalorder %s29, 1
      %p47 = por %p45, %p46
      %p48 = scmp.ne.s32.totalorder %s37, %s38
      %p49 = scmp.eq.s32.totalorder %s29, 0
      %p50 = por %p48, %p49
      %p51 = scmp.ne.s32.totalorder %s37, %s38
      %p52 = scmp.eq.s32.totalorder %s30, 1
      %p53 = por %p51, %p52
      %p55 = scmp.ne.s32.totalorder %s38, %s54
      %p56 = scmp.eq.s32.totalorder %s30, 0
      %p57 = por %p55, %p56
      %s59 = sadd.s32 %s58, 1
      %p62 = scmp.eq.s32.totalorder %s24, 1
      %p63 = scmp.ne.s32.totalorder %s58, %s60
      %p64 = scmp.eq.s32.totalorder %s24, 0
      %p65 = por %p63, %p64
      %p66 = scmp.ne.s32.totalorder %s58, %s60
      %p67 = scmp.eq.s32.totalorder %s29, 1
      %p68 = por %p66, %p67
      %p69 = scmp.ne.s32.totalorder %s60, %s61
      %p70 = scmp.eq.s32.totalorder %s29, 0
      %p71 = por %p69, %p70
      %p72 = scmp.ne.s32.totalorder %s60, %s61
      %p73 = scmp.eq.s32.totalorder %s30, 1
      %p74 = por %p72, %p73
      %p76 = scmp.ne.s32.totalorder %s61, %s75
      %p77 = scmp.eq.s32.totalorder %s30, 0
      %p78 = por %p76, %p77
      %s80 = sadd.s32 %s79, 1
      %p83 = scmp.eq.s32.totalorder %s24, 1
      %p84 = scmp.ne.s32.totalorder %s79, %s81
      %p85 = scmp.eq.s32.totalorder %s24, 0
      %p86 = por %p84, %p85
      %p87 = scmp.ne.s32.totalorder %s79, %s81
      %p88 = scmp.eq.s32.totalorder %s29, 1
      %p89 = por %p87, %p88
      %p90 = scmp.ne.s32.totalorder %s81, %s82
      %p91 = scmp.eq.s32.totalorder %s29, 0
      %p92 = por %p90, %p91
      %p93 = scmp.ne.s32.totalorder %s81, %s82
      %p94 = scmp.eq.s32.totalorder %s30, 1
      %p95 = por %p93, %p94
      %p97 = scmp.ne.s32.totalorder %s82, %s96
      %p98 = scmp.eq.s32.totalorder %s30, 0
      %p99 = por %p97, %p98
      %s101 = sadd.s32 %s100, 1
      %p104 = scmp.eq.s32.totalorder %s24, 1
      %p105 = scmp.ne.s32.totalorder %s100, %s102
      %p106 = scmp.eq.s32.totalorder %s24, 0
      %p107 = por %p105, %p106
      %p108 = scmp.ne.s32.totalorder %s100, %s102
      %p109 = scmp.eq.s32.totalorder %s29, 1
      %p110 = por %p108, %p109
      %p111 = scmp.ne.s32.totalorder %s102, %s103
      %p112 = scmp.eq.s32.totalorder %s29, 0
      %p113 = por %p111, %p112
      %p114 = scmp.ne.s32.totalorder %s102, %s103
      %p115 = scmp.eq.s32.totalorder %s30, 1
      %p116 = por %p114, %p115
      %p118 = scmp.ne.s32.totalorder %s103, %s117
      %p119 = scmp.eq.s32.totalorder %s30, 0
      %p120 = por %p118, %p119
      %s122 = sadd.s32 %s121, 1
      %p125 = scmp.eq.s32.totalorder %s24, 1
      %p126 = scmp.ne.s32.totalorder %s121, %s123
      %p127 = scmp.eq.s32.totalorder %s24, 0
      %p128 = por %p126, %p127
      %p129 = scmp.ne.s32.totalorder %s121, %s123
      %p130 = scmp.eq.s32.totalorder %s29, 1
      %p131 = por %p129, %p130
      %p132 = scmp.ne.s32.totalorder %s123, %s124
      %p133 = scmp.eq.s32.totalorder %s29, 0
      %p134 = por %p132, %p133
      %p135 = scmp.ne.s32.totalorder %s123, %s124
      %p136 = scmp.eq.s32.totalorder %s30, 1
      %p137 = por %p135, %p136
      %p139 = scmp.ne.s32.totalorder %s124, %s138
      %p140 = scmp.eq.s32.totalorder %s30, 0
      %p141 = por %p139, %p140
      %s143 = sadd.s32 %s142, 1
      %p146 = scmp.eq.s32.totalorder %s24, 1
      %p147 = scmp.ne.s32.totalorder %s142, %s144
      %p148 = scmp.eq.s32.totalorder %s24, 0
      %p149 = por %p147, %p148
      %p150 = scmp.ne.s32.totalorder %s142, %s144
      %p151 = scmp.eq.s32.totalorder %s29, 1
      %p152 = por %p150, %p151
      %p153 = scmp.ne.s32.totalorder %s144, %s145
      %p154 = scmp.eq.s32.totalorder %s29, 0
      %p155 = por %p153, %p154
      %p156 = scmp.ne.s32.totalorder %s144, %s145
      %p157 = scmp.eq.s32.totalorder %s30, 1
      %p158 = por %p156, %p157
      %p160 = scmp.ne.s32.totalorder %s145, %s159
      %p161 = scmp.eq.s32.totalorder %s30, 0
      %p162 = por %p160, %p161
      %s164 = sadd.s32 %s163, 1
      %p167 = scmp.eq.s32.totalorder %s24, 1
      %p168 = scmp.ne.s32.totalorder %s163, %s165
      %p169 = scmp.eq.s32.totalorder %s24, 0
      %p170 = por %p168, %p169
      %p171 = scmp.ne.s32.totalorder %s163, %s165
      %p172 = scmp.eq.s32.totalorder %s29, 1
      %p173 = por %p171, %p172
      %p174 = scmp.ne.s32.totalorder %s165, %s166
      %p175 = scmp.eq.s32.totalorder %s29, 0
      %p176 = por %p174, %p175
      %p177 = scmp.ne.s32.totalorder %s165, %s166
      %p178 = scmp.eq.s32.totalorder %s30, 1
      %p179 = por %p177, %p178
      %p181 = scmp.ne.s32.totalorder %s166, %s180
      %p182 = scmp.eq.s32.totalorder %s30, 0
      %p183 = por %p181, %p182
      %s185 = sadd.s32 %s184, 1
      %p188 = scmp.eq.s32.totalorder %s24, 1
      %p189 = scmp.ne.s32.totalorder %s184, %s186
      %p190 = scmp.eq.s32.totalorder %s24, 0
      %p191 = por %p189, %p190
      %p192 = scmp.ne.s32.totalorder %s184, %s186
      %p193 = scmp.eq.s32.totalorder %s29, 1
      %p194 = por %p192, %p193
      %p195 = scmp.ne.s32.totalorder %s186, %s187
      %p196 = scmp.eq.s32.totalorder %s29, 0
      %p197 = por %p195, %p196
      %p198 = scmp.ne.s32.totalorder %s186, %s187
      %p199 = scmp.eq.s32.totalorder %s30, 1
      %p200 = por %p198, %p199
      %p202 = scmp.ne.s32.totalorder %s187, %s201
      %p203 = scmp.eq.s32.totalorder %s30, 0
      %p204 = por %p202, %p203
      %s206 = sadd.s32 %s205, 1
      %p209 = scmp.eq.s32.totalorder %s24, 1
      %p210 = scmp.ne.s32.totalorder %s205, %s207
      %p211 = scmp.eq.s32.totalorder %s24, 0
      %p212 = por %p210, %p211
      %p213 = scmp.ne.s32.totalorder %s205, %s207
      %p214 = scmp.eq.s32.totalorder %s29, 1
      %p215 = por %p213, %p214
      %p216 = scmp.ne.s32.totalorder %s207, %s208
      %p217 = scmp.eq.s32.totalorder %s29, 0
      %p218 = por %p216, %p217
      %p219 = scmp.ne.s32.totalorder %s207, %s208
      %p220 = scmp.eq.s32.totalorder %s30, 1
      %p221 = por %p219, %p220
      %p223 = scmp.ne.s32.totalorder %s208, %s222
      %p224 = scmp.eq.s32.totalorder %s30, 0
      %p225 = por %p223, %p224
      %s227 = sadd.s32 %s226, 1
      %p230 = scmp.eq.s32.totalorder %s24, 1
      %p231 = scmp.ne.s32.totalorder %s226, %s228
      %p232 = scmp.eq.s32.totalorder %s24, 0
      %p233 = por %p231, %p232
      %p234 = scmp.ne.s32.totalorder %s226, %s228
      %p235 = scmp.eq.s32.totalorder %s29, 1
      %p236 = por %p234, %p235
      %p237 = scmp.ne.s32.totalorder %s228, %s229
      %p238 = scmp.eq.s32.totalorder %s29, 0
      %p239 = por %p237, %p238
      %p240 = scmp.ne.s32.totalorder %s228, %s229
      %p241 = scmp.eq.s32.totalorder %s30, 1
      %p242 = por %p240, %p241
      %p244 = scmp.ne.s32.totalorder %s229, %s243
      %p245 = scmp.eq.s32.totalorder %s30, 0
      %p246 = por %p244, %p245
      %s248 = sadd.s32 %s247, 1
      %p251 = scmp.eq.s32.totalorder %s24, 1
      %p252 = scmp.ne.s32.totalorder %s247, %s249
      %p253 = scmp.eq.s32.totalorder %s24, 0
      %p254 = por %p252, %p253
      %p255 = scmp.ne.s32.totalorder %s247, %s249
      %p256 = scmp.eq.s32.totalorder %s29, 1
      %p257 = por %p255, %p256
      %p258 = scmp.ne.s32.totalorder %s249, %s250
      %p259 = scmp.eq.s32.totalorder %s29, 0
      %p260 = por %p258, %p259
      %p261 = scmp.ne.s32.totalorder %s249, %s250
      %p262 = scmp.eq.s32.totalorder %s30, 1
      %p263 = por %p261, %p262
      %p265 = scmp.ne.s32.totalorder %s250, %s264
      %p266 = scmp.eq.s32.totalorder %s30, 0
      %p267 = por %p265, %p266
      %s269 = sadd.s32 %s268, 1
      %p272 = scmp.eq.s32.totalorder %s24, 1
      %p273 = scmp.ne.s32.totalorder %s268, %s270
      %p274 = scmp.eq.s32.totalorder %s24, 0
      %p275 = por %p273, %p274
      %p276 = scmp.ne.s32.totalorder %s268, %s270
      %p277 = scmp.eq.s32.totalorder %s29, 1
      %p278 = por %p276, %p277
      %p279 = scmp.ne.s32.totalorder %s270, %s271
      %p280 = scmp.eq.s32.totalorder %s29, 0
      %p281 = por %p279, %p280
      %p282 = scmp.ne.s32.totalorder %s270, %s271
      %p283 = scmp.eq.s32.totalorder %s30, 1
      %p284 = por %p282, %p283
      %p286 = scmp.ne.s32.totalorder %s271, %s285
      %p287 = scmp.eq.s32.totalorder %s30, 0
      %p288 = por %p286, %p287
      %s290 = sadd.s32 %s289, 1
      %p293 = scmp.eq.s32.totalorder %s24, 1
      %p294 = scmp.ne.s32.totalorder %s289, %s291
      %p295 = scmp.eq.s32.totalorder %s24, 0
      %p296 = por %p294, %p295
      %p297 = scmp.ne.s32.totalorder %s289, %s291
      %p298 = scmp.eq.s32.totalorder %s29, 1
      %p299 = por %p297, %p298
      %p300 = scmp.ne.s32.totalorder %s291, %s292
      %p301 = scmp.eq.s32.totalorder %s29, 0
      %p302 = por %p300, %p301
      %p303 = scmp.ne.s32.totalorder %s291, %s292
      %p304 = scmp.eq.s32.totalorder %s30, 1
      %p305 = por %p303, %p304
      %p307 = scmp.ne.s32.totalorder %s292, %s306
      %p308 = scmp.eq.s32.totalorder %s30, 0
      %p309 = por %p307, %p308
      %s311 = sadd.s32 %s310, 1
      %p314 = scmp.eq.s32.totalorder %s24, 1
      %p315 = scmp.ne.s32.totalorder %s310, %s312
      %p316 = scmp.eq.s32.totalorder %s24, 0
      %p317 = por %p315, %p316
      %p318 = scmp.ne.s32.totalorder %s310, %s312
      %p319 = scmp.eq.s32.totalorder %s29, 1
      %p320 = por %p318, %p319
      %p321 = scmp.ne.s32.totalorder %s312, %s313
      %p322 = scmp.eq.s32.totalorder %s29, 0
      %p323 = por %p321, %p322
      %p324 = scmp.ne.s32.totalorder %s312, %s313
      %p325 = scmp.eq.s32.totalorder %s30, 1
      %p326 = por %p324, %p325
      %p328 = scmp.ne.s32.totalorder %s313, %s327
      %p329 = scmp.eq.s32.totalorder %s30, 0
      %p330 = por %p328, %p329
      %s332 = sadd.s32 %s331, 1
      %p335 = scmp.eq.s32.totalorder %s24, 1
      %p336 = scmp.ne.s32.totalorder %s331, %s333
      %p337 = scmp.eq.s32.totalorder %s24, 0
      %p338 = por %p336, %p337
      %p339 = scmp.ne.s32.totalorder %s331, %s333
      %p340 = scmp.eq.s32.totalorder %s29, 1
      %p341 = por %p339, %p340
      %p342 = scmp.ne.s32.totalorder %s333, %s334
      %p343 = scmp.eq.s32.totalorder %s29, 0
      %p344 = por %p342, %p343
      %p345 = scmp.ne.s32.totalorder %s333, %s334
      %p346 = scmp.eq.s32.totalorder %s30, 1
      %p347 = por %p345, %p346
      %p349 = scmp.ne.s32.totalorder %s334, %s348
      %p350 = scmp.eq.s32.totalorder %s30, 0
      %p351 = por %p349, %p350
      %s352 = ssub.s32 %s24, %s31
      %p353 = scmp.eq.s32.totalorder %s352, 0
      %s355 = sadd.s32 %s354, 1
      %s356 = scalar_select %p353, %s354, %s355
      %p359 = pneg %p353
      %p360 = scmp.eq.s32.totalorder %s24, 1
      %p361 = por %p359, %p360
      %p362 = scmp.ne.s32.totalorder %s354, %s357
      %p363 = scmp.eq.s32.totalorder %s24, 0
      %p364 = por %p362, %p363
      %p365 = scmp.ne.s32.totalorder %s354, %s357
      %p366 = scmp.eq.s32.totalorder %s29, 1
      %p367 = por %p365, %p366
      %p368 = scmp.ne.s32.totalorder %s357, %s358
      %p369 = scmp.eq.s32.totalorder %s29, 0
      %p370 = por %p368, %p369
      %p371 = scmp.ne.s32.totalorder %s357, %s358
      %p372 = scmp.eq.s32.totalorder %s30, 1
      %p373 = por %p371, %p372
      %p375 = scmp.ne.s32.totalorder %s358, %s374
      %p376 = scmp.eq.s32.totalorder %s30, 0
      %p377 = por %p375, %p376
      %p378 = scmp.le.s32.totalorder 1, %s24
      %p379 = scmp.lt.s32.totalorder %s24, 3
      %p380 = pnand %p378, %p379
      %p381 = pneg %p380
      // Predicated region
      $region9: #{_t5_block_jit.1} parent=5 // pred_check
        _
      $region10: #{_t5_block_jit.1} parent=5 // pred_check_branch
        %383 = sbr.rel (%p380) target = $region12
      $region11: #{_t5_block_jit.1} parent=5 // pred_region
        %s384 = ssub.s32 %s24, 1
        // Predicated region
        $region13: #{_t5_block_jit.1} parent=11 // pred_check
          %p385 = pneg %p71
        $region14: #{_t5_block_jit.1} parent=11 // pred_check_branch
          %387 = sbr.rel (%p385) target = $region16
        $region15: #{_t5_block_jit.1} parent=11 // pred_region
          _
        $region16: #{_t5_block_jit.1} parent=11 // pred_fallthru
          _
        // Predicated region
        $region17: #{_t5_block_jit.1} parent=11 // pred_check
          %p388 = pneg %p92
        $region18: #{_t5_block_jit.1} parent=11 // pred_check_branch
          %390 = sbr.rel (%p388) target = $region20
        $region19: #{_t5_block_jit.1} parent=11 // pred_region
          _
        $region20: #{_t5_block_jit.1} parent=11 // pred_fallthru
          _
        // Predicated region
        $region21: #{_t5_block_jit.1} parent=11 // pred_check
          %p391 = pneg %p113
        $region22: #{_t5_block_jit.1} parent=11 // pred_check_branch
          %393 = sbr.rel (%p391) target = $region24
        $region23: #{_t5_block_jit.1} parent=11 // pred_region
          _
        $region24: #{_t5_block_jit.1} parent=11 // pred_fallthru
          _
        // Predicated region
        $region25: #{_t5_block_jit.1} parent=11 // pred_check
          %p394 = pneg %p134
        $region26: #{_t5_block_jit.1} parent=11 // pred_check_branch
          %396 = sbr.rel (%p394) target = $region28
        $region27: #{_t5_block_jit.1} parent=11 // pred_region
          _
        $region28: #{_t5_block_jit.1} parent=11 // pred_fallthru
          _
        // Predicated region
        $region29: #{_t5_block_jit.1} parent=11 // pred_check
          %p397 = pneg %p155
        $region30: #{_t5_block_jit.1} parent=11 // pred_check_branch
          %399 = sbr.rel (%p397) target = $region32
        $region31: #{_t5_block_jit.1} parent=11 // pred_region
          _
        $region32: #{_t5_block_jit.1} parent=11 // pred_fallthru
          _
        // Predicated region
        $region33: #{_t5_block_jit.1} parent=11 // pred_check
          %p400 = pneg %p176
        $region34: #{_t5_block_jit.1} parent=11 // pred_check_branch
          %402 = sbr.rel (%p400) target = $region36
        $region35: #{_t5_block_jit.1} parent=11 // pred_region
          _
        $region36: #{_t5_block_jit.1} parent=11 // pred_fallthru
          _
        // Predicated region
        $region37: #{_t5_block_jit.1} parent=11 // pred_check
          %p403 = pneg %p197
        $region38: #{_t5_block_jit.1} parent=11 // pred_check_branch
          %405 = sbr.rel (%p403) target = $region40
        $region39: #{_t5_block_jit.1} parent=11 // pred_region
          _
        $region40: #{_t5_block_jit.1} parent=11 // pred_fallthru
          _
        // Predicated region
        $region41: #{_t5_block_jit.1} parent=11 // pred_check
          %p406 = pneg %p218
        $region42: #{_t5_block_jit.1} parent=11 // pred_check_branch
          %408 = sbr.rel (%p406) target = $region44
        $region43: #{_t5_block_jit.1} parent=11 // pred_region
          _
        $region44: #{_t5_block_jit.1} parent=11 // pred_fallthru
          _
        // Predicated region
        $region45: #{_t5_block_jit.1} parent=11 // pred_check
          %p409 = pneg %p239
        $region46: #{_t5_block_jit.1} parent=11 // pred_check_branch
          %411 = sbr.rel (%p409) target = $region48
        $region47: #{_t5_block_jit.1} parent=11 // pred_region
          _
        $region48: #{_t5_block_jit.1} parent=11 // pred_fallthru
          _
        // Predicated region
        $region49: #{_t5_block_jit.1} parent=11 // pred_check
          %p412 = pneg %p260
        $region50: #{_t5_block_jit.1} parent=11 // pred_check_branch
          %414 = sbr.rel (%p412) target = $region52
        $region51: #{_t5_block_jit.1} parent=11 // pred_region
          _
        $region52: #{_t5_block_jit.1} parent=11 // pred_fallthru
          _
        // Predicated region
        $region53: #{_t5_block_jit.1} parent=11 // pred_check
          %p415 = pneg %p281
        $region54: #{_t5_block_jit.1} parent=11 // pred_check_branch
          %417 = sbr.rel (%p415) target = $region56
        $region55: #{_t5_block_jit.1} parent=11 // pred_region
          _
        $region56: #{_t5_block_jit.1} parent=11 // pred_fallthru
          _
        // Predicated region
        $region57: #{_t5_block_jit.1} parent=11 // pred_check
          %p418 = pneg %p302
        $region58: #{_t5_block_jit.1} parent=11 // pred_check_branch
          %420 = sbr.rel (%p418) target = $region60
        $region59: #{_t5_block_jit.1} parent=11 // pred_region
          _
        $region60: #{_t5_block_jit.1} parent=11 // pred_fallthru
          _
        // Predicated region
        $region61: #{_t5_block_jit.1} parent=11 // pred_check
          %p421 = pneg %p323
        $region62: #{_t5_block_jit.1} parent=11 // pred_check_branch
          %423 = sbr.rel (%p421) target = $region64
        $region63: #{_t5_block_jit.1} parent=11 // pred_region
          _
        $region64: #{_t5_block_jit.1} parent=11 // pred_fallthru
          _
        // Predicated region
        $region65: #{_t5_block_jit.1} parent=11 // pred_check
          %p424 = pneg %p344
        $region66: #{_t5_block_jit.1} parent=11 // pred_check_branch
          %426 = sbr.rel (%p424) target = $region68
        $region67: #{_t5_block_jit.1} parent=11 // pred_region
          _
        $region68: #{_t5_block_jit.1} parent=11 // pred_fallthru
          _
      $region12: #{_t5_block_jit.1} parent=5 // pred_fallthru
        _
      %p427 = scmp.lt.s32.totalorder %s24, 2
      // Predicated region
      $region69: #{_t5_block_jit.1} parent=5 // pred_check
        %p428 = pneg %p427
      $region70: #{_t5_block_jit.1} parent=5 // pred_check_branch
        %430 = sbr.rel (%p428) target = $region72
      $region71: #{_t5_block_jit.1} parent=5 // pred_region
        // Predicated region
        $region73: #{_t5_block_jit.1} parent=71 // pred_check
          %p431 = pneg %p44
        $region74: #{_t5_block_jit.1} parent=71 // pred_check_branch
          %433 = sbr.rel (%p431) target = $region76
        $region75: #{_t5_block_jit.1} parent=71 // pred_region
          %p434 = scmp.lt.s32.totalorder %s24, 1
          %s435 = scalar_select %p434, %s24, 1
          %s436 = smul.addr %s435, 2
          %s437 = smul.addr %s436, 8
          %s438 = scalar_lea.vmem %s0, %s437
        $region76: #{_t5_block_jit.1} parent=71 // pred_fallthru
          _
      $region72: #{_t5_block_jit.1} parent=5 // pred_fallthru
        _
      %p439 = scmp.le.s32.totalorder 1, %s24
      %p440 = scmp.lt.s32.totalorder %s24, 3
      %p441 = pnand %p439, %p440
      %p442 = pneg %p441
      // Predicated region
      $region77: #{_t5_block_jit.1} parent=5 // pred_check
        _
      $region78: #{_t5_block_jit.1} parent=5 // pred_check_branch
        %444 = sbr.rel (%p441) target = $region80
      $region79: #{_t5_block_jit.1} parent=5 // pred_region
        %s445 = ssub.s32 %s24, 1
        %p446 = scmp.lt.s32.totalorder %s29, 1
        %s447 = scalar_select %p446, %s29, 1
        %s448 = smul.addr %s447, 2
        %s449 = smul.addr %s448, 8
        %s450 = scalar_lea.vmem %s0, %s449
        %p451 = pneg %p50
        %p452 = pneg %p47
        %p453 = pneg %p71
        %p454 = pneg %p68
        %p455 = pneg %p92
        %p456 = pneg %p89
        %p457 = pneg %p113
        %p458 = pneg %p110
        %p459 = pneg %p134
        %p460 = pneg %p131
        %p461 = pneg %p155
        %p462 = pneg %p152
        %p463 = pneg %p176
        %p464 = pneg %p173
        %p465 = pneg %p197
        %p466 = pneg %p194
        %p467 = pneg %p218
        %p468 = pneg %p215
        %p469 = pneg %p239
        %p470 = pneg %p236
        %p471 = pneg %p260
        %p472 = pneg %p257
        %p473 = pneg %p281
        %p474 = pneg %p278
        %p475 = pneg %p302
        %p476 = pneg %p299
        %p477 = pneg %p323
        %p478 = pneg %p320
        %p479 = pneg %p344
        %p480 = pneg %p341
        %p481 = pneg %p370
        %p482 = pneg %p367
        %s483 = sand.u32 %s357, 1
        %s484 = scalar_lea.sflag [#allocation3], %s483
        %s485 = sand.u32 %s357, 1
        %s486 = smul.addr %s485, 16
        %s487 = scalar_lea.vmem [#allocation2], %s486
        %p488 = scmp.lt.s32.totalorder %s29, 1
        %s489 = scalar_select %p488, %s29, 1
        %s490 = smul.addr %s489, 2
        %s491 = smul.addr %s490, 8
        %s492 = scalar_lea.vmem %s0, %s491
        %v493 = vld [vmem:[%s492] sm:$0xff]
        %v494 = vld [vmem:[%s492 + $0x8] sm:$0xff]
        %v495 = vld [vmem:[%s2] sm:$0x1]
        %v496 = vld [vmem:[%s3] sm:$0xff]
        %v497 = vld [vmem:[%s3 + $0x8] sm:$0xff]
        %v498 = vld [vmem:[%s3 + $0x10] sm:$0xff]
        %v499 = vld [vmem:[%s3 + $0x18] sm:$0xff]
        %v500 = vld [vmem:[%s3 + $0x20] sm:$0xff]
        %v501 = vld [vmem:[%s3 + $0x28] sm:$0xff]
        %v502 = vld [vmem:[%s3 + $0x30] sm:$0xff]
        %v503 = vld [vmem:[%s3 + $0x38] sm:$0xff]
        %v504 = vld [vmem:[%s3 + $0x40] sm:$0xff]
        %v505 = vld [vmem:[%s3 + $0x48] sm:$0xff]
        %v506 = vld [vmem:[%s3 + $0x50] sm:$0xff]
        %v507 = vld [vmem:[%s3 + $0x58] sm:$0xff]
        %v508 = vld [vmem:[%s3 + $0x60] sm:$0xff]
        %v509 = vld [vmem:[%s3 + $0x68] sm:$0xff]
        %v510 = vld [vmem:[%s3 + $0x70] sm:$0xff]
        %v511 = vld [vmem:[%s3 + $0x78] sm:$0xff]
        %v512 = vld [vmem:[%s3 + $0x80] sm:$0xff]
        %v513 = vld [vmem:[%s3 + $0x88] sm:$0xff]
        %v514 = vld [vmem:[%s3 + $0x90] sm:$0xff]
        %v515 = vld [vmem:[%s3 + $0x98] sm:$0xff]
        %v516 = vld [vmem:[%s3 + $0xa0] sm:$0xff]
        %v517 = vld [vmem:[%s3 + $0xa8] sm:$0xff]
        %v518 = vld [vmem:[%s3 + $0xb0] sm:$0xff]
        %v519 = vld [vmem:[%s3 + $0xb8] sm:$0xff]
        %v520 = vld [vmem:[%s3 + $0xc0] sm:$0xff]
        %v521 = vld [vmem:[%s3 + $0xc8] sm:$0xff]
        %v522 = vld [vmem:[%s3 + $0xd0] sm:$0xff]
        %v523 = vld [vmem:[%s3 + $0xd8] sm:$0xff]
        %v524 = vld [vmem:[%s3 + $0xe0] sm:$0xff]
        %v525 = vld [vmem:[%s3 + $0xe8] sm:$0xff]
        %v526 = vld [vmem:[%s3 + $0xf0] sm:$0xff]
        %v527 = vld [vmem:[%s3 + $0xf8] sm:$0xff]
        %v528 = vld [vmem:[%s3 + $0x100] sm:$0xff]
        %v529 = vld [vmem:[%s3 + $0x108] sm:$0xff]
        %v530 = vld [vmem:[%s3 + $0x110] sm:$0xff]
        %v531 = vld [vmem:[%s3 + $0x118] sm:$0xff]
        %v532 = vld [vmem:[%s3 + $0x120] sm:$0xff]
        %v533 = vld [vmem:[%s3 + $0x128] sm:$0xff]
        %v534 = vld [vmem:[%s3 + $0x130] sm:$0xff]
        %v535 = vld [vmem:[%s3 + $0x138] sm:$0xff]
        %v536 = vld [vmem:[%s3 + $0x140] sm:$0xff]
        %v537 = vld [vmem:[%s3 + $0x148] sm:$0xff]
        %v538 = vld [vmem:[%s3 + $0x150] sm:$0xff]
        %v539 = vld [vmem:[%s3 + $0x158] sm:$0xff]
        %v540 = vld [vmem:[%s3 + $0x160] sm:$0xff]
        %v541 = vld [vmem:[%s3 + $0x168] sm:$0xff]
        %v542 = vld [vmem:[%s3 + $0x170] sm:$0xff]
        %v543 = vld [vmem:[%s3 + $0x178] sm:$0xff]
        %v544 = vld [vmem:[%s4] sm:$0x7]
        %v545 = vld [vmem:[%s5] sm:$0xff]
        %v546 = vld [vmem:[%s5 + $0x8] sm:$0xff]
        %v547 = vld [vmem:[%s5 + $0x10] sm:$0xff]
        %v548 = vld [vmem:[%s5 + $0x18] sm:$0xff]
        %v549 = vld [vmem:[%s5 + $0x20] sm:$0xff]
        %v550 = vld [vmem:[%s5 + $0x28] sm:$0xff]
        %v551 = vld [vmem:[%s5 + $0x30] sm:$0xff]
        %v552 = vld [vmem:[%s5 + $0x38] sm:$0xff]
        %v553 = vld [vmem:[%s5 + $0x40] sm:$0xff]
        %v554 = vld [vmem:[%s5 + $0x48] sm:$0xff]
        %v555 = vld [vmem:[%s5 + $0x50] sm:$0xff]
        %v556 = vld [vmem:[%s5 + $0x58] sm:$0xff]
        %v557 = vld [vmem:[%s5 + $0x60] sm:$0xff]
        %v558 = vld [vmem:[%s5 + $0x68] sm:$0xff]
        %v559 = vld [vmem:[%s5 + $0x70] sm:$0xff]
        %v560 = vld [vmem:[%s5 + $0x78] sm:$0xff]
        %v561 = vld [vmem:[%s6] sm:$0x1]
        %v562 = vld [vmem:[%s1] sm:$0xff]
        %v563 = vld [vmem:[%s1 + $0x8] sm:$0xff]
        %v564 = vld [vmem:[%s1 + $0x10] sm:$0xff]
        %v565 = vld [vmem:[%s1 + $0x18] sm:$0xff]
        %v566 = vld [vmem:[%s1 + $0x20] sm:$0xff]
        %v567 = vld [vmem:[%s1 + $0x28] sm:$0xff]
        %v568 = vld [vmem:[%s1 + $0x30] sm:$0xff]
        %v569 = vld [vmem:[%s1 + $0x38] sm:$0xff]
        %v570 = vmul.f32 %v493, %v493
        %v571 = vmul.f32 %v494, %v494
        %572 = vadd.xlane.f32.xlu0 %v570
        %v573 = vpop.xlane.xlu0 %572
        %574 = vadd.xlane.f32.xlu0 %v571
        %v575 = vpop.xlane.xlu0 %574
        %v576 = vrcp.pop 128.0
        %v577 = vmul.f32 %v573, %v576
        %v578 = vmul.f32 %v575, %v576
        %v579 = vadd.f32 %v577, 1e-06
        %v580 = vadd.f32 %v578, 1e-06
        %v581 = vrsqrt.pop %v579
        %v582 = vrsqrt.pop %v580
        %v583 = vmul.f32 %v493, %v581
        %v584 = vmul.f32 %v494, %v582
        %v586 = vlaneseq
        %v587 = vshrl.u32 %v586, 7
        %v588 = vsub.s32 0, %v587
        %v589 = vrot.slane %v495, %v588
        %v591 = vmul.f32 %v589, %v583
        %v592 = vmul.f32 %v589, %v584
        %v594 = vlaneseq
        %v595 = vshrl.u32 %v594, 7
        %v596 = vsub.s32 0, %v595
        %v597 = vrot.slane %v544, %v596
        %v598 = vlaneseq
        %v599 = vshrl.u32 %v598, 7
        %v600 = vsub.s32 1, %v599
        %v601 = vrot.slane %v544, %v600
        %v602 = vlaneseq
        %v603 = vshrl.u32 %v602, 7
        %v604 = vsub.s32 2, %v603
        %v605 = vrot.slane %v544, %v604
        %609 = vmatprep.subr.mxu0 %v542
        %610 = vmatpush1.msra.mxu0 %v541
        %611 = vmatprep.subr.mxu0 %v539
        %612 = vmatpush1.msra.mxu0 %v538
        %613 = vmatprep.subr.mxu0 %v536
        %614 = vmatpush1.msra.mxu0 %v535
        %615 = vmatprep.subr.mxu0 %v533
        %616 = vmatpush1.msra.mxu0 %v532
        %617 = vmatprep.subr.mxu0 %v530
        %618 = vmatpush1.msra.mxu0 %v529
        %619 = vmatprep.subr.mxu0 %v527
        %620 = vmatpush1.msra.mxu0 %v526
        %621 = vmatprep.subr.mxu0 %v524
        %622 = vmatpush1.msra.mxu0 %v523
        %623 = vmatprep.subr.mxu0 %v521
        %624 = vmatpush1.msra.mxu0 %v520
        %625 = vmatprep.subr.mxu0 %v518
        %626 = vmatpush1.msra.mxu0 %v517
        %627 = vmatprep.subr.mxu0 %v515
        %628 = vmatpush1.msra.mxu0 %v514
        %629 = vmatprep.subr.mxu0 %v512
        %630 = vmatpush1.msra.mxu0 %v511
        %631 = vmatprep.subr.mxu0 %v509
        %632 = vmatpush1.msra.mxu0 %v508
        %633 = vmatprep.subr.mxu0 %v506
        %634 = vmatpush1.msra.mxu0 %v505
        %635 = vmatprep.subr.mxu0 %v503
        %636 = vmatpush1.msra.mxu0 %v502
        %637 = vmatprep.subr.mxu0 %v500
        %638 = vmatpush1.msra.mxu0 %v499
        %639 = vmatprep.subr.mxu0 %v497
        %640 = vmatpush1.msra.mxu0 %v496
        %641 = vmatprep.subr.mxu0 0.0
        %642 = vmatpush2.msra.mxu0 0.0
        %643 = vmatprep.subr.mxu0 0.0
        %644 = vmatpush2.msra.mxu0 0.0
        %645 = vmatprep.subr.mxu0 0.0
        %646 = vmatpush2.msra.mxu0 0.0
        %647 = vmatprep.subr.mxu0 0.0
        %648 = vmatpush2.msra.mxu0 0.0
        %649 = vmatprep.subr.mxu0 0.0
        %650 = vmatpush2.msra.mxu0 0.0
        %651 = vmatprep.subr.mxu0 0.0
        %652 = vmatpush2.msra.mxu0 0.0
        %653 = vmatprep.subr.mxu0 0.0
        %654 = vmatpush2.msra.mxu0 0.0
        %655 = vmatprep.subr.mxu0 0.0
        %656 = vmatpush2.msra.mxu0 0.0
        %657 = vmatprep.subr.mxu0 0.0
        %658 = vmatpush2.msra.mxu0 0.0
        %659 = vmatprep.subr.mxu0 0.0
        %660 = vmatpush2.msra.mxu0 0.0
        %661 = vmatprep.subr.mxu0 0.0
        %662 = vmatpush2.msra.mxu0 0.0
        %663 = vmatprep.subr.mxu0 0.0
        %664 = vmatpush2.msra.mxu0 0.0
        %665 = vmatprep.subr.mxu0 0.0
        %666 = vmatpush2.msra.mxu0 0.0
        %667 = vmatprep.subr.mxu0 0.0
        %668 = vmatpush2.msra.mxu0 0.0
        %669 = vmatprep.subr.mxu0 0.0
        %670 = vmatpush2.msra.mxu0 0.0
        %671 = vmatprep.subr.mxu0 0.0
        %672 = vmatpush2.msra.mxu0 0.0
        %673 = vmatprep.mubr.f32.mxu0 0.0
        %674 = vmatmul.mubr.f32.gmra.mxu0 %v591
        %v675 = vpop.f32.mrf.mxu0
        %v676 = vadd.f32 %v597, %v675
        %v677 = vpop.f32.mrf.mxu0
        %v678 = vadd.f32 %v601, %v677
        %679 = vmatprep.mubr.f32.mxu0 0.0
        %680 = vmatmul.mubr.f32.gmra.mxu0 %v592
        %v681 = vpop.f32.mrf.mxu0
        %v682 = vadd.f32 %v597, %v681
        %v683 = vpop.f32.mrf.mxu0
        %v684 = vadd.f32 %v601, %v683
        %685 = vdwg.mxu0
        %686 = vmatprep.subr.mxu0 0.0
        %687 = vmatpush1.msra.mxu0 %v543
        %688 = vmatprep.subr.mxu0 0.0
        %689 = vmatpush1.msra.mxu0 %v540
        %690 = vmatprep.subr.mxu0 0.0
        %691 = vmatpush1.msra.mxu0 %v537
        %692 = vmatprep.subr.mxu0 0.0
        %693 = vmatpush1.msra.mxu0 %v534
        %694 = vmatprep.subr.mxu0 0.0
        %695 = vmatpush1.msra.mxu0 %v531
        %696 = vmatprep.subr.mxu0 0.0
        %697 = vmatpush1.msra.mxu0 %v528
        %698 = vmatprep.subr.mxu0 0.0
        %699 = vmatpush1.msra.mxu0 %v525
        %700 = vmatprep.subr.mxu0 0.0
        %701 = vmatpush1.msra.mxu0 %v522
        %702 = vmatprep.subr.mxu0 0.0
        %703 = vmatpush1.msra.mxu0 %v519
        %704 = vmatprep.subr.mxu0 0.0
        %705 = vmatpush1.msra.mxu0 %v516
        %706 = vmatprep.subr.mxu0 0.0
        %707 = vmatpush1.msra.mxu0 %v513
        %708 = vmatprep.subr.mxu0 0.0
        %709 = vmatpush1.msra.mxu0 %v510
        %710 = vmatprep.subr.mxu0 0.0
        %711 = vmatpush1.msra.mxu0 %v507
        %712 = vmatprep.subr.mxu0 0.0
        %713 = vmatpush1.msra.mxu0 %v504
        %714 = vmatprep.subr.mxu0 0.0
        %715 = vmatpush1.msra.mxu0 %v501
        %716 = vmatprep.subr.mxu0 0.0
        %717 = vmatpush1.msra.mxu0 %v498
        %718 = vmatprep.subr.mxu0 0.0
        %719 = vmatpush2.msra.mxu0 0.0
        %720 = vmatprep.subr.mxu0 0.0
        %721 = vmatpush2.msra.mxu0 0.0
        %722 = vmatprep.subr.mxu0 0.0
        %723 = vmatpush2.msra.mxu0 0.0
        %724 = vmatprep.subr.mxu0 0.0
        %725 = vmatpush2.msra.mxu0 0.0
        %726 = vmatprep.subr.mxu0 0.0
        %727 = vmatpush2.msra.mxu0 0.0
        %728 = vmatprep.subr.mxu0 0.0
        %729 = vmatpush2.msra.mxu0 0.0
        %730 = vmatprep.subr.mxu0 0.0
        %731 = vmatpush2.msra.mxu0 0.0
        %732 = vmatprep.subr.mxu0 0.0
        %733 = vmatpush2.msra.mxu0 0.0
        %734 = vmatprep.subr.mxu0 0.0
        %735 = vmatpush2.msra.mxu0 0.0
        %736 = vmatprep.subr.mxu0 0.0
        %737 = vmatpush2.msra.mxu0 0.0
        %738 = vmatprep.subr.mxu0 0.0
        %739 = vmatpush2.msra.mxu0 0.0
        %740 = vmatprep.subr.mxu0 0.0
        %741 = vmatpush2.msra.mxu0 0.0
        %742 = vmatprep.subr.mxu0 0.0
        %743 = vmatpush2.msra.mxu0 0.0
        %744 = vmatprep.subr.mxu0 0.0
        %745 = vmatpush2.msra.mxu0 0.0
        %746 = vmatprep.subr.mxu0 0.0
        %747 = vmatpush2.msra.mxu0 0.0
        %748 = vmatprep.subr.mxu0 0.0
        %749 = vmatpush2.msra.mxu0 0.0
        %750 = vmatprep.mubr.f32.mxu0 0.0
        %751 = vmatmul.mubr.f32.gmra.mxu0 %v591
        %v752 = vpop.f32.mrf.mxu0
        %v753 = vadd.f32 %v605, %v752
        %v754 = vpop.f32.mrf.mxu0
        %755 = vmatprep.mubr.f32.mxu0 0.0
        %756 = vmatmul.mubr.f32.gmra.mxu0 %v592
        %v757 = vpop.f32.mrf.mxu0
        %v758 = vadd.f32 %v605, %v757
        %v759 = vpop.f32.mrf.mxu0
        %760 = vdwg.mxu0
        %763 = vrot.lane.b32.xlu0 %v676, 96
        %v764 = vpop.permute.xlu0 %763
        %765 = vrot.lane.b32.xlu0 %v682, 96
        %v766 = vpop.permute.xlu0 %765
        %767 = vrot.lane.b32.xlu0 %v676, 64
        %v768 = vpop.permute.xlu0 %767
        %769 = vrot.lane.b32.xlu0 %v682, 64
        %v770 = vpop.permute.xlu0 %769
        %771 = vrot.lane.b32.xlu0 %v676, 32
        %v772 = vpop.permute.xlu0 %771
        %773 = vrot.lane.b32.xlu0 %v682, 32
        %v774 = vpop.permute.xlu0 %773
        %777 = vrot.lane.b32.xlu0 %v678, 96
        %v778 = vpop.permute.xlu0 %777
        %779 = vrot.lane.b32.xlu0 %v684, 96
        %v780 = vpop.permute.xlu0 %779
        %781 = vrot.lane.b32.xlu0 %v678, 64
        %v782 = vpop.permute.xlu0 %781
        %783 = vrot.lane.b32.xlu0 %v684, 64
        %v784 = vpop.permute.xlu0 %783
        %785 = vrot.lane.b32.xlu0 %v678, 32
        %v786 = vpop.permute.xlu0 %785
        %787 = vrot.lane.b32.xlu0 %v684, 32
        %v788 = vpop.permute.xlu0 %787
        %791 = vrot.lane.b32.xlu0 %v753, 96
        %v792 = vpop.permute.xlu0 %791
        %793 = vrot.lane.b32.xlu0 %v758, 96
        %v794 = vpop.permute.xlu0 %793
        %797 = vrot.lane.b32.xlu0 %v753, 64
        %v798 = vpop.permute.xlu0 %797
        %799 = vrot.lane.b32.xlu0 %v758, 64
        %v800 = vpop.permute.xlu0 %799
        %803 = vrot.lane.b32.xlu0 %v753, 32
        %v804 = vpop.permute.xlu0 %803
        %805 = vrot.lane.b32.xlu0 %v758, 32
        %v806 = vpop.permute.xlu0 %805
        %vm809 = vcmask 261120
        %v810 = vsel %vm809, %v676, 0
        %v812 = vsel %vm809, %v682, 0
        %v814 = vsel %vm809, %v678, 0
        %v816 = vsel %vm809, %v684, 0
        %818 = vmatprep.subr.mxu0 0.0
        %819 = vmatpush1.xpose.msra.mxu0 0.0
        %820 = vmatprep.subr.mxu0 0.0
        %821 = vmatpush1.xpose.msra.mxu0 0.0
        %822 = vmatprep.subr.mxu0 0.0
        %823 = vmatpush1.xpose.msra.mxu0 0.0
        %824 = vmatprep.subr.mxu0 0.0
        %825 = vmatpush1.xpose.msra.mxu0 0.0
        %826 = vmatprep.subr.mxu0 0.0
        %827 = vmatpush1.xpose.msra.mxu0 0.0
        %828 = vmatprep.subr.mxu0 0.0
        %829 = vmatpush1.xpose.msra.mxu0 0.0
        %830 = vmatprep.subr.mxu0 0.0
        %831 = vmatpush1.xpose.msra.mxu0 0.0
        %832 = vmatprep.subr.mxu0 0.0
        %833 = vmatpush1.xpose.msra.mxu0 0.0
        %834 = vmatprep.subr.mxu0 0.0
        %835 = vmatpush1.xpose.msra.mxu0 0.0
        %836 = vmatprep.subr.mxu0 0.0
        %837 = vmatpush1.xpose.msra.mxu0 0.0
        %838 = vmatprep.subr.mxu0 0.0
        %839 = vmatpush1.xpose.msra.mxu0 0.0
        %840 = vmatprep.subr.mxu0 0.0
        %841 = vmatpush1.xpose.msra.mxu0 0.0
        %842 = vmatprep.subr.mxu0 0.0
        %843 = vmatpush1.xpose.msra.mxu0 0.0
        %844 = vmatprep.subr.mxu0 0.0
        %845 = vmatpush1.xpose.msra.mxu0 0.0
        %846 = vmatprep.subr.mxu0 0.0
        %847 = vmatpush1.xpose.msra.mxu0 %v816
        %848 = vmatprep.subr.mxu0 0.0
        %849 = vmatpush1.xpose.msra.mxu0 %v814
        %850 = vmatprep.subr.mxu0 0.0
        %851 = vmatpush2.xpose.msra.mxu0 0.0
        %852 = vmatprep.subr.mxu0 0.0
        %853 = vmatpush2.xpose.msra.mxu0 0.0
        %854 = vmatprep.subr.mxu0 0.0
        %855 = vmatpush2.xpose.msra.mxu0 0.0
        %856 = vmatprep.subr.mxu0 0.0
        %857 = vmatpush2.xpose.msra.mxu0 0.0
        %858 = vmatprep.subr.mxu0 0.0
        %859 = vmatpush2.xpose.msra.mxu0 0.0
        %860 = vmatprep.subr.mxu0 0.0
        %861 = vmatpush2.xpose.msra.mxu0 0.0
        %862 = vmatprep.subr.mxu0 0.0
        %863 = vmatpush2.xpose.msra.mxu0 0.0
        %864 = vmatprep.subr.mxu0 0.0
        %865 = vmatpush2.xpose.msra.mxu0 0.0
        %866 = vmatprep.subr.mxu0 0.0
        %867 = vmatpush2.xpose.msra.mxu0 0.0
        %868 = vmatprep.subr.mxu0 0.0
        %869 = vmatpush2.xpose.msra.mxu0 0.0
        %870 = vmatprep.subr.mxu0 0.0
        %871 = vmatpush2.xpose.msra.mxu0 0.0
        %872 = vmatprep.subr.mxu0 0.0
        %873 = vmatpush2.xpose.msra.mxu0 0.0
        %874 = vmatprep.subr.mxu0 0.0
        %875 = vmatpush2.xpose.msra.mxu0 0.0
        %876 = vmatprep.subr.mxu0 0.0
        %877 = vmatpush2.xpose.msra.mxu0 0.0
        %878 = vmatprep.subr.mxu0 0.0
        %879 = vmatpush2.xpose.msra.mxu0 0.0
        %880 = vmatprep.subr.mxu0 0.0
        %881 = vmatpush2.xpose.msra.mxu0 0.0
        %882 = vmatprep.mubr.f32.mxu0 0.0
        %883 = vmatmul.mubr.f32.gmra.mxu0 %v810
        %v884 = vpop.f32.mrf.mxu0
        %v885 = vadd.f32 0.0, %v884
        %v886 = vpop.f32.mrf.mxu0
        %887 = vmatprep.mubr.f32.mxu0 0.0
        %888 = vmatmul.mubr.f32.gmra.mxu0 %v812
        %v889 = vpop.f32.mrf.mxu0
        %v890 = vadd.f32 0.0, %v889
        %v891 = vpop.f32.mrf.mxu0
        %892 = vdwg.mxu0
        %v893 = vsel %vm809, %v764, 0
        %v895 = vsel %vm809, %v766, 0
        %v897 = vsel %vm809, %v778, 0
        %v899 = vsel %vm809, %v780, 0
        %901 = vmatprep.subr.mxu0 0.0
        %902 = vmatpush1.xpose.msra.mxu0 0.0
        %903 = vmatprep.subr.mxu0 0.0
        %904 = vmatpush1.xpose.msra.mxu0 0.0
        %905 = vmatprep.subr.mxu0 0.0
        %906 = vmatpush1.xpose.msra.mxu0 0.0
        %907 = vmatprep.subr.mxu0 0.0
        %908 = vmatpush1.xpose.msra.mxu0 0.0
        %909 = vmatprep.subr.mxu0 0.0
        %910 = vmatpush1.xpose.msra.mxu0 0.0
        %911 = vmatprep.subr.mxu0 0.0
        %912 = vmatpush1.xpose.msra.mxu0 0.0
        %913 = vmatprep.subr.mxu0 0.0
        %914 = vmatpush1.xpose.msra.mxu0 0.0
        %915 = vmatprep.subr.mxu0 0.0
        %916 = vmatpush1.xpose.msra.mxu0 0.0
        %917 = vmatprep.subr.mxu0 0.0
        %918 = vmatpush1.xpose.msra.mxu0 0.0
        %919 = vmatprep.subr.mxu0 0.0
        %920 = vmatpush1.xpose.msra.mxu0 0.0
        %921 = vmatprep.subr.mxu0 0.0
        %922 = vmatpush1.xpose.msra.mxu0 0.0
        %923 = vmatprep.subr.mxu0 0.0
        %924 = vmatpush1.xpose.msra.mxu0 0.0
        %925 = vmatprep.subr.mxu0 0.0
        %926 = vmatpush1.xpose.msra.mxu0 0.0
        %927 = vmatprep.subr.mxu0 0.0
        %928 = vmatpush1.xpose.msra.mxu0 0.0
        %929 = vmatprep.subr.mxu0 0.0
        %930 = vmatpush1.xpose.msra.mxu0 %v899
        %931 = vmatprep.subr.mxu0 0.0
        %932 = vmatpush1.xpose.msra.mxu0 %v897
        %933 = vmatprep.subr.mxu0 0.0
        %934 = vmatpush2.xpose.msra.mxu0 0.0
        %935 = vmatprep.subr.mxu0 0.0
        %936 = vmatpush2.xpose.msra.mxu0 0.0
        %937 = vmatprep.subr.mxu0 0.0
        %938 = vmatpush2.xpose.msra.mxu0 0.0
        %939 = vmatprep.subr.mxu0 0.0
        %940 = vmatpush2.xpose.msra.mxu0 0.0
        %941 = vmatprep.subr.mxu0 0.0
        %942 = vmatpush2.xpose.msra.mxu0 0.0
        %943 = vmatprep.subr.mxu0 0.0
        %944 = vmatpush2.xpose.msra.mxu0 0.0
        %945 = vmatprep.subr.mxu0 0.0
        %946 = vmatpush2.xpose.msra.mxu0 0.0
        %947 = vmatprep.subr.mxu0 0.0
        %948 = vmatpush2.xpose.msra.mxu0 0.0
        %949 = vmatprep.subr.mxu0 0.0
        %950 = vmatpush2.xpose.msra.mxu0 0.0
        %951 = vmatprep.subr.mxu0 0.0
        %952 = vmatpush2.xpose.msra.mxu0 0.0
        %953 = vmatprep.subr.mxu0 0.0
        %954 = vmatpush2.xpose.msra.mxu0 0.0
        %955 = vmatprep.subr.mxu0 0.0
        %956 = vmatpush2.xpose.msra.mxu0 0.0
        %957 = vmatprep.subr.mxu0 0.0
        %958 = vmatpush2.xpose.msra.mxu0 0.0
        %959 = vmatprep.subr.mxu0 0.0
        %960 = vmatpush2.xpose.msra.mxu0 0.0
        %961 = vmatprep.subr.mxu0 0.0
        %962 = vmatpush2.xpose.msra.mxu0 0.0
        %963 = vmatprep.subr.mxu0 0.0
        %964 = vmatpush2.xpose.msra.mxu0 0.0
        %965 = vmatprep.mubr.f32.mxu0 0.0
        %966 = vmatmul.mubr.f32.gmra.mxu0 %v893
        %v967 = vpop.f32.mrf.mxu0
        %v968 = vadd.f32 0.0, %v967
        %v969 = vpop.f32.mrf.mxu0
        %970 = vmatprep.mubr.f32.mxu0 0.0
        %971 = vmatmul.mubr.f32.gmra.mxu0 %v895
        %v972 = vpop.f32.mrf.mxu0
        %v973 = vadd.f32 0.0, %v972
        %v974 = vpop.f32.mrf.mxu0
        %975 = vdwg.mxu0
        %v976 = vsel %vm809, %v768, 0
        %v978 = vsel %vm809, %v770, 0
        %v980 = vsel %vm809, %v782, 0
        %v982 = vsel %vm809, %v784, 0
        %984 = vmatprep.subr.mxu0 0.0
        %985 = vmatpush1.xpose.msra.mxu0 0.0
        %986 = vmatprep.subr.mxu0 0.0
        %987 = vmatpush1.xpose.msra.mxu0 0.0
        %988 = vmatprep.subr.mxu0 0.0
        %989 = vmatpush1.xpose.msra.mxu0 0.0
        %990 = vmatprep.subr.mxu0 0.0
        %991 = vmatpush1.xpose.msra.mxu0 0.0
        %992 = vmatprep.subr.mxu0 0.0
        %993 = vmatpush1.xpose.msra.mxu0 0.0
        %994 = vmatprep.subr.mxu0 0.0
        %995 = vmatpush1.xpose.msra.mxu0 0.0
        %996 = vmatprep.subr.mxu0 0.0
        %997 = vmatpush1.xpose.msra.mxu0 0.0
        %998 = vmatprep.subr.mxu0 0.0
        %999 = vmatpush1.xpose.msra.mxu0 0.0
        %1000 = vmatprep.subr.mxu0 0.0
        %1001 = vmatpush1.xpose.msra.mxu0 0.0
        %1002 = vmatprep.subr.mxu0 0.0
        %1003 = vmatpush1.xpose.msra.mxu0 0.0
        %1004 = vmatprep.subr.mxu0 0.0
        %1005 = vmatpush1.xpose.msra.mxu0 0.0
        %1006 = vmatprep.subr.mxu0 0.0
        %1007 = vmatpush1.xpose.msra.mxu0 0.0
        %1008 = vmatprep.subr.mxu0 0.0
        %1009 = vmatpush1.xpose.msra.mxu0 0.0
        %1010 = vmatprep.subr.mxu0 0.0
        %1011 = vmatpush1.xpose.msra.mxu0 0.0
        %1012 = vmatprep.subr.mxu0 0.0
        %1013 = vmatpush1.xpose.msra.mxu0 %v982
        %1014 = vmatprep.subr.mxu0 0.0
        %1015 = vmatpush1.xpose.msra.mxu0 %v980
        %1016 = vmatprep.subr.mxu0 0.0
        %1017 = vmatpush2.xpose.msra.mxu0 0.0
        %1018 = vmatprep.subr.mxu0 0.0
        %1019 = vmatpush2.xpose.msra.mxu0 0.0
        %1020 = vmatprep.subr.mxu0 0.0
        %1021 = vmatpush2.xpose.msra.mxu0 0.0
        %1022 = vmatprep.subr.mxu0 0.0
        %1023 = vmatpush2.xpose.msra.mxu0 0.0
        %1024 = vmatprep.subr.mxu0 0.0
        %1025 = vmatpush2.xpose.msra.mxu0 0.0
        %1026 = vmatprep.subr.mxu0 0.0
        %1027 = vmatpush2.xpose.msra.mxu0 0.0
        %1028 = vmatprep.subr.mxu0 0.0
        %1029 = vmatpush2.xpose.msra.mxu0 0.0
        %1030 = vmatprep.subr.mxu0 0.0
        %1031 = vmatpush2.xpose.msra.mxu0 0.0
        %1032 = vmatprep.subr.mxu0 0.0
        %1033 = vmatpush2.xpose.msra.mxu0 0.0
        %1034 = vmatprep.subr.mxu0 0.0
        %1035 = vmatpush2.xpose.msra.mxu0 0.0
        %1036 = vmatprep.subr.mxu0 0.0
        %1037 = vmatpush2.xpose.msra.mxu0 0.0
        %1038 = vmatprep.subr.mxu0 0.0
        %1039 = vmatpush2.xpose.msra.mxu0 0.0
        %1040 = vmatprep.subr.mxu0 0.0
        %1041 = vmatpush2.xpose.msra.mxu0 0.0
        %1042 = vmatprep.subr.mxu0 0.0
        %1043 = vmatpush2.xpose.msra.mxu0 0.0
        %1044 = vmatprep.subr.mxu0 0.0
        %1045 = vmatpush2.xpose.msra.mxu0 0.0
        %1046 = vmatprep.subr.mxu0 0.0
        %1047 = vmatpush2.xpose.msra.mxu0 0.0
        %1048 = vmatprep.mubr.f32.mxu0 0.0
        %1049 = vmatmul.mubr.f32.gmra.mxu0 %v976
        %v1050 = vpop.f32.mrf.mxu0
        %v1051 = vadd.f32 0.0, %v1050
        %v1052 = vpop.f32.mrf.mxu0
        %1053 = vmatprep.mubr.f32.mxu0 0.0
        %1054 = vmatmul.mubr.f32.gmra.mxu0 %v978
        %v1055 = vpop.f32.mrf.mxu0
        %v1056 = vadd.f32 0.0, %v1055
        %v1057 = vpop.f32.mrf.mxu0
        %1058 = vdwg.mxu0
        %v1059 = vsel %vm809, %v772, 0
        %v1061 = vsel %vm809, %v774, 0
        %v1063 = vsel %vm809, %v786, 0
        %v1065 = vsel %vm809, %v788, 0
        %1067 = vmatprep.subr.mxu0 0.0
        %1068 = vmatpush1.xpose.msra.mxu0 0.0
        %1069 = vmatprep.subr.mxu0 0.0
        %1070 = vmatpush1.xpose.msra.mxu0 0.0
        %1071 = vmatprep.subr.mxu0 0.0
        %1072 = vmatpush1.xpose.msra.mxu0 0.0
        %1073 = vmatprep.subr.mxu0 0.0
        %1074 = vmatpush1.xpose.msra.mxu0 0.0
        %1075 = vmatprep.subr.mxu0 0.0
        %1076 = vmatpush1.xpose.msra.mxu0 0.0
        %1077 = vmatprep.subr.mxu0 0.0
        %1078 = vmatpush1.xpose.msra.mxu0 0.0
        %1079 = vmatprep.subr.mxu0 0.0
        %1080 = vmatpush1.xpose.msra.mxu0 0.0
        %1081 = vmatprep.subr.mxu0 0.0
        %1082 = vmatpush1.xpose.msra.mxu0 0.0
        %1083 = vmatprep.subr.mxu0 0.0
        %1084 = vmatpush1.xpose.msra.mxu0 0.0
        %1085 = vmatprep.subr.mxu0 0.0
        %1086 = vmatpush1.xpose.msra.mxu0 0.0
        %1087 = vmatprep.subr.mxu0 0.0
        %1088 = vmatpush1.xpose.msra.mxu0 0.0
        %1089 = vmatprep.subr.mxu0 0.0
        %1090 = vmatpush1.xpose.msra.mxu0 0.0
        %1091 = vmatprep.subr.mxu0 0.0
        %1092 = vmatpush1.xpose.msra.mxu0 0.0
        %1093 = vmatprep.subr.mxu0 0.0
        %1094 = vmatpush1.xpose.msra.mxu0 0.0
        %1095 = vmatprep.subr.mxu0 0.0
        %1096 = vmatpush1.xpose.msra.mxu0 %v1065
        %1097 = vmatprep.subr.mxu0 0.0
        %1098 = vmatpush1.xpose.msra.mxu0 %v1063
        %1099 = vmatprep.subr.mxu0 0.0
        %1100 = vmatpush2.xpose.msra.mxu0 0.0
        %1101 = vmatprep.subr.mxu0 0.0
        %1102 = vmatpush2.xpose.msra.mxu0 0.0
        %1103 = vmatprep.subr.mxu0 0.0
        %1104 = vmatpush2.xpose.msra.mxu0 0.0
        %1105 = vmatprep.subr.mxu0 0.0
        %1106 = vmatpush2.xpose.msra.mxu0 0.0
        %1107 = vmatprep.subr.mxu0 0.0
        %1108 = vmatpush2.xpose.msra.mxu0 0.0
        %1109 = vmatprep.subr.mxu0 0.0
        %1110 = vmatpush2.xpose.msra.mxu0 0.0
        %1111 = vmatprep.subr.mxu0 0.0
        %1112 = vmatpush2.xpose.msra.mxu0 0.0
        %1113 = vmatprep.subr.mxu0 0.0
        %1114 = vmatpush2.xpose.msra.mxu0 0.0
        %1115 = vmatprep.subr.mxu0 0.0
        %1116 = vmatpush2.xpose.msra.mxu0 0.0
        %1117 = vmatprep.subr.mxu0 0.0
        %1118 = vmatpush2.xpose.msra.mxu0 0.0
        %1119 = vmatprep.subr.mxu0 0.0
        %1120 = vmatpush2.xpose.msra.mxu0 0.0
        %1121 = vmatprep.subr.mxu0 0.0
        %1122 = vmatpush2.xpose.msra.mxu0 0.0
        %1123 = vmatprep.subr.mxu0 0.0
        %1124 = vmatpush2.xpose.msra.mxu0 0.0
        %1125 = vmatprep.subr.mxu0 0.0
        %1126 = vmatpush2.xpose.msra.mxu0 0.0
        %1127 = vmatprep.subr.mxu0 0.0
        %1128 = vmatpush2.xpose.msra.mxu0 0.0
        %1129 = vmatprep.subr.mxu0 0.0
        %1130 = vmatpush2.xpose.msra.mxu0 0.0
        %1131 = vmatprep.mubr.f32.mxu0 0.0
        %1132 = vmatmul.mubr.f32.gmra.mxu0 %v1059
        %v1133 = vpop.f32.mrf.mxu0
        %v1134 = vadd.f32 0.0, %v1133
        %v1135 = vpop.f32.mrf.mxu0
        %1136 = vmatprep.mubr.f32.mxu0 0.0
        %1137 = vmatmul.mubr.f32.gmra.mxu0 %v1061
        %v1138 = vpop.f32.mrf.mxu0
        %v1139 = vadd.f32 0.0, %v1138
        %v1140 = vpop.f32.mrf.mxu0
        %1141 = vdwg.mxu0
        %v1142 = vmul.f32 %v885, 0.17677669
        %v1143 = vmul.f32 %v890, 0.17677669
        %v1144 = vmul.f32 %v968, 0.17677669
        %v1145 = vmul.f32 %v973, 0.17677669
        %v1146 = vmul.f32 %v1051, 0.17677669
        %v1147 = vmul.f32 %v1056, 0.17677669
        %v1148 = vmul.f32 %v1134, 0.17677669
        %v1149 = vmul.f32 %v1139, 0.17677669
        %v1150 = vadd.f32 %v1142, %v562
        %v1151 = vadd.f32 %v1143, %v563
        %v1152 = vadd.f32 %v1144, %v564
        %v1153 = vadd.f32 %v1145, %v565
        %v1154 = vadd.f32 %v1146, %v566
        %v1155 = vadd.f32 %v1147, %v567
        %v1156 = vadd.f32 %v1148, %v568
        %v1157 = vadd.f32 %v1149, %v569
        %vm1158 = vcmask 130048
        %v1159 = vsel %vm1158, %v1150, -inf
        %1160 = vmax.xlane.f32.xlu0 %v1159
        %v1161 = vpop.xlane.xlu0 %1160
        %v1162 = vsel %vm1158, %v1151, -inf
        %1163 = vmax.xlane.f32.xlu0 %v1162
        %v1164 = vpop.xlane.xlu0 %1163
        %v1165 = vsel %vm1158, %v1152, -inf
        %1166 = vmax.xlane.f32.xlu0 %v1165
        %v1167 = vpop.xlane.xlu0 %1166
        %v1168 = vsel %vm1158, %v1153, -inf
        %1169 = vmax.xlane.f32.xlu0 %v1168
        %v1170 = vpop.xlane.xlu0 %1169
        %v1171 = vsel %vm1158, %v1154, -inf
        %1172 = vmax.xlane.f32.xlu0 %v1171
        %v1173 = vpop.xlane.xlu0 %1172
        %v1174 = vsel %vm1158, %v1155, -inf
        %1175 = vmax.xlane.f32.xlu0 %v1174
        %v1176 = vpop.xlane.xlu0 %1175
        %v1177 = vsel %vm1158, %v1156, -inf
        %1178 = vmax.xlane.f32.xlu0 %v1177
        %v1179 = vpop.xlane.xlu0 %1178
        %v1180 = vsel %vm1158, %v1157, -inf
        %1181 = vmax.xlane.f32.xlu0 %v1180
        %v1182 = vpop.xlane.xlu0 %1181
        %v1183 = vsub.f32 %v1150, %v1161
        %v1184 = vsub.f32 %v1151, %v1164
        %v1185 = vsub.f32 %v1152, %v1167
        %v1186 = vsub.f32 %v1153, %v1170
        %v1187 = vsub.f32 %v1154, %v1173
        %v1188 = vsub.f32 %v1155, %v1176
        %v1189 = vsub.f32 %v1156, %v1179
        %v1190 = vsub.f32 %v1157, %v1182
        %v1191 = vmul.f32 %v1183, 1.442695
        %v1192 = vpow.pop %v1191
        %v1193 = vmul.f32 %v1184, 1.442695
        %v1194 = vpow.pop %v1193
        %v1195 = vmul.f32 %v1185, 1.442695
        %v1196 = vpow.pop %v1195
        %v1197 = vmul.f32 %v1186, 1.442695
        %v1198 = vpow.pop %v1197
        %v1199 = vmul.f32 %v1187, 1.442695
        %v1200 = vpow.pop %v1199
        %v1201 = vmul.f32 %v1188, 1.442695
        %v1202 = vpow.pop %v1201
        %v1203 = vmul.f32 %v1189, 1.442695
        %v1204 = vpow.pop %v1203
        %v1205 = vmul.f32 %v1190, 1.442695
        %v1206 = vpow.pop %v1205
        %v1207 = vsel %vm1158, %v1192, 0.0
        %1208 = vadd.xlane.f32.xlu0 %v1207
        %v1209 = vpop.xlane.xlu0 %1208
        %v1210 = vsel %vm1158, %v1194, 0.0
        %1211 = vadd.xlane.f32.xlu0 %v1210
        %v1212 = vpop.xlane.xlu0 %1211
        %v1213 = vsel %vm1158, %v1196, 0.0
        %1214 = vadd.xlane.f32.xlu0 %v1213
        %v1215 = vpop.xlane.xlu0 %1214
        %v1216 = vsel %vm1158, %v1198, 0.0
        %1217 = vadd.xlane.f32.xlu0 %v1216
        %v1218 = vpop.xlane.xlu0 %1217
        %v1219 = vsel %vm1158, %v1200, 0.0
        %1220 = vadd.xlane.f32.xlu0 %v1219
        %v1221 = vpop.xlane.xlu0 %1220
        %v1222 = vsel %vm1158, %v1202, 0.0
        %1223 = vadd.xlane.f32.xlu0 %v1222
        %v1224 = vpop.xlane.xlu0 %1223
        %v1225 = vsel %vm1158, %v1204, 0.0
        %1226 = vadd.xlane.f32.xlu0 %v1225
        %v1227 = vpop.xlane.xlu0 %1226
        %v1228 = vsel %vm1158, %v1206, 0.0
        %1229 = vadd.xlane.f32.xlu0 %v1228
        %v1230 = vpop.xlane.xlu0 %1229
        %v1231 = vrcp.pop %v1209
        %v1232 = vrcp.pop %v1212
        %v1233 = vrcp.pop %v1215
        %v1234 = vrcp.pop %v1218
        %v1235 = vrcp.pop %v1221
        %v1236 = vrcp.pop %v1224
        %v1237 = vrcp.pop %v1227
        %v1238 = vrcp.pop %v1230
        %v1239 = vmul.f32 %v1192, %v1231
        %v1240 = vmul.f32 %v1194, %v1232
        %v1241 = vmul.f32 %v1196, %v1233
        %v1242 = vmul.f32 %v1198, %v1234
        %v1243 = vmul.f32 %v1200, %v1235
        %v1244 = vmul.f32 %v1202, %v1236
        %v1245 = vmul.f32 %v1204, %v1237
        %v1246 = vmul.f32 %v1206, %v1238
        %v1248 = vsel %vm1158, %v1239, 0
        %v1251 = vsel %vm1158, %v1240, 0
        %1253 = vmatprep.subr.mxu0 0.0
        %1254 = vmatpush1.msra.mxu0 0.0
        %1255 = vmatprep.subr.mxu0 0.0
        %1256 = vmatpush1.msra.mxu0 0.0
        %1257 = vmatprep.subr.mxu0 0.0
        %1258 = vmatpush1.msra.mxu0 0.0
        %1259 = vmatprep.subr.mxu0 0.0
        %1260 = vmatpush1.msra.mxu0 0.0
        %1261 = vmatprep.subr.mxu0 0.0
        %1262 = vmatpush1.msra.mxu0 0.0
        %1263 = vmatprep.subr.mxu0 0.0
        %1264 = vmatpush1.msra.mxu0 0.0
        %1265 = vmatprep.subr.mxu0 0.0
        %1266 = vmatpush1.msra.mxu0 0.0
        %1267 = vmatprep.subr.mxu0 0.0
        %1268 = vmatpush1.msra.mxu0 0.0
        %1269 = vmatprep.subr.mxu0 0.0
        %1270 = vmatpush1.msra.mxu0 0.0
        %1271 = vmatprep.subr.mxu0 0.0
        %1272 = vmatpush1.msra.mxu0 0.0
        %1273 = vmatprep.subr.mxu0 0.0
        %1274 = vmatpush1.msra.mxu0 0.0
        %1275 = vmatprep.subr.mxu0 0.0
        %1276 = vmatpush1.msra.mxu0 0.0
        %1277 = vmatprep.subr.mxu0 0.0
        %1278 = vmatpush1.msra.mxu0 0.0
        %1279 = vmatprep.subr.mxu0 0.0
        %1280 = vmatpush1.msra.mxu0 0.0
        %1281 = vmatprep.subr.mxu0 0.0
        %1282 = vmatpush1.msra.mxu0 %v758
        %1283 = vmatprep.subr.mxu0 0.0
        %1284 = vmatpush1.msra.mxu0 %v753
        %1285 = vmatprep.subr.mxu0 0.0
        %1286 = vmatpush2.msra.mxu0 0.0
        %1287 = vmatprep.subr.mxu0 0.0
        %1288 = vmatpush2.msra.mxu0 0.0
        %1289 = vmatprep.subr.mxu0 0.0
        %1290 = vmatpush2.msra.mxu0 0.0
        %1291 = vmatprep.subr.mxu0 0.0
        %1292 = vmatpush2.msra.mxu0 0.0
        %1293 = vmatprep.subr.mxu0 0.0
        %1294 = vmatpush2.msra.mxu0 0.0
        %1295 = vmatprep.subr.mxu0 0.0
        %1296 = vmatpush2.msra.mxu0 0.0
        %1297 = vmatprep.subr.mxu0 0.0
        %1298 = vmatpush2.msra.mxu0 0.0
        %1299 = vmatprep.subr.mxu0 0.0
        %1300 = vmatpush2.msra.mxu0 0.0
        %1301 = vmatprep.subr.mxu0 0.0
        %1302 = vmatpush2.msra.mxu0 0.0
        %1303 = vmatprep.subr.mxu0 0.0
        %1304 = vmatpush2.msra.mxu0 0.0
        %1305 = vmatprep.subr.mxu0 0.0
        %1306 = vmatpush2.msra.mxu0 0.0
        %1307 = vmatprep.subr.mxu0 0.0
        %1308 = vmatpush2.msra.mxu0 0.0
        %1309 = vmatprep.subr.mxu0 0.0
        %1310 = vmatpush2.msra.mxu0 0.0
        %1311 = vmatprep.subr.mxu0 0.0
        %1312 = vmatpush2.msra.mxu0 0.0
        %1313 = vmatprep.subr.mxu0 0.0
        %1314 = vmatpush2.msra.mxu0 0.0
        %1315 = vmatprep.subr.mxu0 0.0
        %1316 = vmatpush2.msra.mxu0 0.0
        %1317 = vmatprep.mubr.f32.mxu0 0.0
        %1318 = vmatmul.mubr.f32.gmra.mxu0 %v1248
        %v1319 = vpop.f32.mrf.mxu0
        %v1320 = vadd.f32 0.0, %v1319
        %v1321 = vpop.f32.mrf.mxu0
        %1322 = vmatprep.mubr.f32.mxu0 0.0
        %1323 = vmatmul.mubr.f32.gmra.mxu0 %v1251
        %v1324 = vpop.f32.mrf.mxu0
        %v1325 = vadd.f32 0.0, %v1324
        %v1326 = vpop.f32.mrf.mxu0
        %1327 = vdwg.mxu0
        %v1329 = vsel %vm1158, %v1241, 0
        %v1332 = vsel %vm1158, %v1242, 0
        %1334 = vmatprep.subr.mxu0 0.0
        %1335 = vmatpush1.msra.mxu0 0.0
        %1336 = vmatprep.subr.mxu0 0.0
        %1337 = vmatpush1.msra.mxu0 0.0
        %1338 = vmatprep.subr.mxu0 0.0
        %1339 = vmatpush1.msra.mxu0 0.0
        %1340 = vmatprep.subr.mxu0 0.0
        %1341 = vmatpush1.msra.mxu0 0.0
        %1342 = vmatprep.subr.mxu0 0.0
        %1343 = vmatpush1.msra.mxu0 0.0
        %1344 = vmatprep.subr.mxu0 0.0
        %1345 = vmatpush1.msra.mxu0 0.0
        %1346 = vmatprep.subr.mxu0 0.0
        %1347 = vmatpush1.msra.mxu0 0.0
        %1348 = vmatprep.subr.mxu0 0.0
        %1349 = vmatpush1.msra.mxu0 0.0
        %1350 = vmatprep.subr.mxu0 0.0
        %1351 = vmatpush1.msra.mxu0 0.0
        %1352 = vmatprep.subr.mxu0 0.0
        %1353 = vmatpush1.msra.mxu0 0.0
        %1354 = vmatprep.subr.mxu0 0.0
        %1355 = vmatpush1.msra.mxu0 0.0
        %1356 = vmatprep.subr.mxu0 0.0
        %1357 = vmatpush1.msra.mxu0 0.0
        %1358 = vmatprep.subr.mxu0 0.0
        %1359 = vmatpush1.msra.mxu0 0.0
        %1360 = vmatprep.subr.mxu0 0.0
        %1361 = vmatpush1.msra.mxu0 0.0
        %1362 = vmatprep.subr.mxu0 0.0
        %1363 = vmatpush1.msra.mxu0 %v794
        %1364 = vmatprep.subr.mxu0 0.0
        %1365 = vmatpush1.msra.mxu0 %v792
        %1366 = vmatprep.subr.mxu0 0.0
        %1367 = vmatpush2.msra.mxu0 0.0
        %1368 = vmatprep.subr.mxu0 0.0
        %1369 = vmatpush2.msra.mxu0 0.0
        %1370 = vmatprep.subr.mxu0 0.0
        %1371 = vmatpush2.msra.mxu0 0.0
        %1372 = vmatprep.subr.mxu0 0.0
        %1373 = vmatpush2.msra.mxu0 0.0
        %1374 = vmatprep.subr.mxu0 0.0
        %1375 = vmatpush2.msra.mxu0 0.0
        %1376 = vmatprep.subr.mxu0 0.0
        %1377 = vmatpush2.msra.mxu0 0.0
        %1378 = vmatprep.subr.mxu0 0.0
        %1379 = vmatpush2.msra.mxu0 0.0
        %1380 = vmatprep.subr.mxu0 0.0
        %1381 = vmatpush2.msra.mxu0 0.0
        %1382 = vmatprep.subr.mxu0 0.0
        %1383 = vmatpush2.msra.mxu0 0.0
        %1384 = vmatprep.subr.mxu0 0.0
        %1385 = vmatpush2.msra.mxu0 0.0
        %1386 = vmatprep.subr.mxu0 0.0
        %1387 = vmatpush2.msra.mxu0 0.0
        %1388 = vmatprep.subr.mxu0 0.0
        %1389 = vmatpush2.msra.mxu0 0.0
        %1390 = vmatprep.subr.mxu0 0.0
        %1391 = vmatpush2.msra.mxu0 0.0
        %1392 = vmatprep.subr.mxu0 0.0
        %1393 = vmatpush2.msra.mxu0 0.0
        %1394 = vmatprep.subr.mxu0 0.0
        %1395 = vmatpush2.msra.mxu0 0.0
        %1396 = vmatprep.subr.mxu0 0.0
        %1397 = vmatpush2.msra.mxu0 0.0
        %1398 = vmatprep.mubr.f32.mxu0 0.0
        %1399 = vmatmul.mubr.f32.gmra.mxu0 %v1329
        %v1400 = vpop.f32.mrf.mxu0
        %v1401 = vadd.f32 0.0, %v1400
        %v1402 = vpop.f32.mrf.mxu0
        %1403 = vmatprep.mubr.f32.mxu0 0.0
        %1404 = vmatmul.mubr.f32.gmra.mxu0 %v1332
        %v1405 = vpop.f32.mrf.mxu0
        %v1406 = vadd.f32 0.0, %v1405
        %v1407 = vpop.f32.mrf.mxu0
        %1408 = vdwg.mxu0
        %v1410 = vsel %vm1158, %v1243, 0
        %v1413 = vsel %vm1158, %v1244, 0
        %1415 = vmatprep.subr.mxu0 0.0
        %1416 = vmatpush1.msra.mxu0 0.0
        %1417 = vmatprep.subr.mxu0 0.0
        %1418 = vmatpush1.msra.mxu0 0.0
        %1419 = vmatprep.subr.mxu0 0.0
        %1420 = vmatpush1.msra.mxu0 0.0
        %1421 = vmatprep.subr.mxu0 0.0
        %1422 = vmatpush1.msra.mxu0 0.0
        %1423 = vmatprep.subr.mxu0 0.0
        %1424 = vmatpush1.msra.mxu0 0.0
        %1425 = vmatprep.subr.mxu0 0.0
        %1426 = vmatpush1.msra.mxu0 0.0
        %1427 = vmatprep.subr.mxu0 0.0
        %1428 = vmatpush1.msra.mxu0 0.0
        %1429 = vmatprep.subr.mxu0 0.0
        %1430 = vmatpush1.msra.mxu0 0.0
        %1431 = vmatprep.subr.mxu0 0.0
        %1432 = vmatpush1.msra.mxu0 0.0
        %1433 = vmatprep.subr.mxu0 0.0
        %1434 = vmatpush1.msra.mxu0 0.0
        %1435 = vmatprep.subr.mxu0 0.0
        %1436 = vmatpush1.msra.mxu0 0.0
        %1437 = vmatprep.subr.mxu0 0.0
        %1438 = vmatpush1.msra.mxu0 0.0
        %1439 = vmatprep.subr.mxu0 0.0
        %1440 = vmatpush1.msra.mxu0 0.0
        %1441 = vmatprep.subr.mxu0 0.0
        %1442 = vmatpush1.msra.mxu0 0.0
        %1443 = vmatprep.subr.mxu0 0.0
        %1444 = vmatpush1.msra.mxu0 %v800
        %1445 = vmatprep.subr.mxu0 0.0
        %1446 = vmatpush1.msra.mxu0 %v798
        %1447 = vmatprep.subr.mxu0 0.0
        %1448 = vmatpush2.msra.mxu0 0.0
        %1449 = vmatprep.subr.mxu0 0.0
        %1450 = vmatpush2.msra.mxu0 0.0
        %1451 = vmatprep.subr.mxu0 0.0
        %1452 = vmatpush2.msra.mxu0 0.0
        %1453 = vmatprep.subr.mxu0 0.0
        %1454 = vmatpush2.msra.mxu0 0.0
        %1455 = vmatprep.subr.mxu0 0.0
        %1456 = vmatpush2.msra.mxu0 0.0
        %1457 = vmatprep.subr.mxu0 0.0
        %1458 = vmatpush2.msra.mxu0 0.0
        %1459 = vmatprep.subr.mxu0 0.0
        %1460 = vmatpush2.msra.mxu0 0.0
        %1461 = vmatprep.subr.mxu0 0.0
        %1462 = vmatpush2.msra.mxu0 0.0
        %1463 = vmatprep.subr.mxu0 0.0
        %1464 = vmatpush2.msra.mxu0 0.0
        %1465 = vmatprep.subr.mxu0 0.0
        %1466 = vmatpush2.msra.mxu0 0.0
        %1467 = vmatprep.subr.mxu0 0.0
        %1468 = vmatpush2.msra.mxu0 0.0
        %1469 = vmatprep.subr.mxu0 0.0
        %1470 = vmatpush2.msra.mxu0 0.0
        %1471 = vmatprep.subr.mxu0 0.0
        %1472 = vmatpush2.msra.mxu0 0.0
        %1473 = vmatprep.subr.mxu0 0.0
        %1474 = vmatpush2.msra.mxu0 0.0
        %1475 = vmatprep.subr.mxu0 0.0
        %1476 = vmatpush2.msra.mxu0 0.0
        %1477 = vmatprep.subr.mxu0 0.0
        %1478 = vmatpush2.msra.mxu0 0.0
        %1479 = vmatprep.mubr.f32.mxu0 0.0
        %1480 = vmatmul.mubr.f32.gmra.mxu0 %v1410
        %v1481 = vpop.f32.mrf.mxu0
        %v1482 = vadd.f32 0.0, %v1481
        %v1483 = vpop.f32.mrf.mxu0
        %1484 = vmatprep.mubr.f32.mxu0 0.0
        %1485 = vmatmul.mubr.f32.gmra.mxu0 %v1413
        %v1486 = vpop.f32.mrf.mxu0
        %v1487 = vadd.f32 0.0, %v1486
        %v1488 = vpop.f32.mrf.mxu0
        %1489 = vdwg.mxu0
        %v1491 = vsel %vm1158, %v1245, 0
        %v1494 = vsel %vm1158, %v1246, 0
        %1496 = vmatprep.subr.mxu0 0.0
        %1497 = vmatpush1.msra.mxu0 0.0
        %1498 = vmatprep.subr.mxu0 0.0
        %1499 = vmatpush1.msra.mxu0 0.0
        %1500 = vmatprep.subr.mxu0 0.0
        %1501 = vmatpush1.msra.mxu0 0.0
        %1502 = vmatprep.subr.mxu0 0.0
        %1503 = vmatpush1.msra.mxu0 0.0
        %1504 = vmatprep.subr.mxu0 0.0
        %1505 = vmatpush1.msra.mxu0 0.0
        %1506 = vmatprep.subr.mxu0 0.0
        %1507 = vmatpush1.msra.mxu0 0.0
        %1508 = vmatprep.subr.mxu0 0.0
        %1509 = vmatpush1.msra.mxu0 0.0
        %1510 = vmatprep.subr.mxu0 0.0
        %1511 = vmatpush1.msra.mxu0 0.0
        %1512 = vmatprep.subr.mxu0 0.0
        %1513 = vmatpush1.msra.mxu0 0.0
        %1514 = vmatprep.subr.mxu0 0.0
        %1515 = vmatpush1.msra.mxu0 0.0
        %1516 = vmatprep.subr.mxu0 0.0
        %1517 = vmatpush1.msra.mxu0 0.0
        %1518 = vmatprep.subr.mxu0 0.0
        %1519 = vmatpush1.msra.mxu0 0.0
        %1520 = vmatprep.subr.mxu0 0.0
        %1521 = vmatpush1.msra.mxu0 0.0
        %1522 = vmatprep.subr.mxu0 0.0
        %1523 = vmatpush1.msra.mxu0 0.0
        %1524 = vmatprep.subr.mxu0 0.0
        %1525 = vmatpush1.msra.mxu0 %v806
        %1526 = vmatprep.subr.mxu0 0.0
        %1527 = vmatpush1.msra.mxu0 %v804
        %1528 = vmatprep.subr.mxu0 0.0
        %1529 = vmatpush2.msra.mxu0 0.0
        %1530 = vmatprep.subr.mxu0 0.0
        %1531 = vmatpush2.msra.mxu0 0.0
        %1532 = vmatprep.subr.mxu0 0.0
        %1533 = vmatpush2.msra.mxu0 0.0
        %1534 = vmatprep.subr.mxu0 0.0
        %1535 = vmatpush2.msra.mxu0 0.0
        %1536 = vmatprep.subr.mxu0 0.0
        %1537 = vmatpush2.msra.mxu0 0.0
        %1538 = vmatprep.subr.mxu0 0.0
        %1539 = vmatpush2.msra.mxu0 0.0
        %1540 = vmatprep.subr.mxu0 0.0
        %1541 = vmatpush2.msra.mxu0 0.0
        %1542 = vmatprep.subr.mxu0 0.0
        %1543 = vmatpush2.msra.mxu0 0.0
        %1544 = vmatprep.subr.mxu0 0.0
        %1545 = vmatpush2.msra.mxu0 0.0
        %1546 = vmatprep.subr.mxu0 0.0
        %1547 = vmatpush2.msra.mxu0 0.0
        %1548 = vmatprep.subr.mxu0 0.0
        %1549 = vmatpush2.msra.mxu0 0.0
        %1550 = vmatprep.subr.mxu0 0.0
        %1551 = vmatpush2.msra.mxu0 0.0
        %1552 = vmatprep.subr.mxu0 0.0
        %1553 = vmatpush2.msra.mxu0 0.0
        %1554 = vmatprep.subr.mxu0 0.0
        %1555 = vmatpush2.msra.mxu0 0.0
        %1556 = vmatprep.subr.mxu0 0.0
        %1557 = vmatpush2.msra.mxu0 0.0
        %1558 = vmatprep.subr.mxu0 0.0
        %1559 = vmatpush2.msra.mxu0 0.0
        %1560 = vmatprep.mubr.f32.mxu0 0.0
        %1561 = vmatmul.mubr.f32.gmra.mxu0 %v1491
        %v1562 = vpop.f32.mrf.mxu0
        %v1563 = vadd.f32 0.0, %v1562
        %v1564 = vpop.f32.mrf.mxu0
        %1565 = vmatprep.mubr.f32.mxu0 0.0
        %1566 = vmatmul.mubr.f32.gmra.mxu0 %v1494
        %v1567 = vpop.f32.mrf.mxu0
        %v1568 = vadd.f32 0.0, %v1567
        %v1569 = vpop.f32.mrf.mxu0
        %1570 = vdwg.mxu0
        %v1572 = vsel %vm809, %v1320, 0
        %v1575 = vsel %vm809, %v1325, 0
        %1577 = vmatprep.subr.mxu0 0.0
        %1578 = vmatpush1.msra.mxu0 0.0
        %1579 = vmatprep.subr.mxu0 0.0
        %1580 = vmatpush1.msra.mxu0 0.0
        %1581 = vmatprep.subr.mxu0 0.0
        %1582 = vmatpush1.msra.mxu0 0.0
        %1583 = vmatprep.subr.mxu0 0.0
        %1584 = vmatpush1.msra.mxu0 0.0
        %1585 = vmatprep.subr.mxu0 0.0
        %1586 = vmatpush1.msra.mxu0 0.0
        %1587 = vmatprep.subr.mxu0 0.0
        %1588 = vmatpush1.msra.mxu0 0.0
        %1589 = vmatprep.subr.mxu0 0.0
        %1590 = vmatpush1.msra.mxu0 0.0
        %1591 = vmatprep.subr.mxu0 0.0
        %1592 = vmatpush1.msra.mxu0 0.0
        %1593 = vmatprep.subr.mxu0 0.0
        %1594 = vmatpush1.msra.mxu0 0.0
        %1595 = vmatprep.subr.mxu0 0.0
        %1596 = vmatpush1.msra.mxu0 0.0
        %1597 = vmatprep.subr.mxu0 0.0
        %1598 = vmatpush1.msra.mxu0 0.0
        %1599 = vmatprep.subr.mxu0 0.0
        %1600 = vmatpush1.msra.mxu0 0.0
        %1601 = vmatprep.subr.mxu0 0.0
        %1602 = vmatpush1.msra.mxu0 %v548
        %1603 = vmatprep.subr.mxu0 0.0
        %1604 = vmatpush1.msra.mxu0 %v547
        %1605 = vmatprep.subr.mxu0 0.0
        %1606 = vmatpush1.msra.mxu0 %v546
        %1607 = vmatprep.subr.mxu0 0.0
        %1608 = vmatpush1.msra.mxu0 %v545
        %1609 = vmatprep.subr.mxu0 0.0
        %1610 = vmatpush2.msra.mxu0 0.0
        %1611 = vmatprep.subr.mxu0 0.0
        %1612 = vmatpush2.msra.mxu0 0.0
        %1613 = vmatprep.subr.mxu0 0.0
        %1614 = vmatpush2.msra.mxu0 0.0
        %1615 = vmatprep.subr.mxu0 0.0
        %1616 = vmatpush2.msra.mxu0 0.0
        %1617 = vmatprep.subr.mxu0 0.0
        %1618 = vmatpush2.msra.mxu0 0.0
        %1619 = vmatprep.subr.mxu0 0.0
        %1620 = vmatpush2.msra.mxu0 0.0
        %1621 = vmatprep.subr.mxu0 0.0
        %1622 = vmatpush2.msra.mxu0 0.0
        %1623 = vmatprep.subr.mxu0 0.0
        %1624 = vmatpush2.msra.mxu0 0.0
        %1625 = vmatprep.subr.mxu0 0.0
        %1626 = vmatpush2.msra.mxu0 0.0
        %1627 = vmatprep.subr.mxu0 0.0
        %1628 = vmatpush2.msra.mxu0 0.0
        %1629 = vmatprep.subr.mxu0 0.0
        %1630 = vmatpush2.msra.mxu0 0.0
        %1631 = vmatprep.subr.mxu0 0.0
        %1632 = vmatpush2.msra.mxu0 0.0
        %1633 = vmatprep.subr.mxu0 0.0
        %1634 = vmatpush2.msra.mxu0 0.0
        %1635 = vmatprep.subr.mxu0 0.0
        %1636 = vmatpush2.msra.mxu0 0.0
        %1637 = vmatprep.subr.mxu0 0.0
        %1638 = vmatpush2.msra.mxu0 0.0
        %1639 = vmatprep.subr.mxu0 0.0
        %1640 = vmatpush2.msra.mxu0 0.0
        %1641 = vmatprep.mubr.f32.mxu0 0.0
        %1642 = vmatmul.mubr.f32.gmra.mxu0 %v1572
        %v1643 = vpop.f32.mrf.mxu0
        %v1644 = vadd.f32 0.0, %v1643
        %v1645 = vpop.f32.mrf.mxu0
        %1646 = vmatprep.mubr.f32.mxu0 0.0
        %1647 = vmatmul.mubr.f32.gmra.mxu0 %v1575
        %v1648 = vpop.f32.mrf.mxu0
        %v1649 = vadd.f32 0.0, %v1648
        %v1650 = vpop.f32.mrf.mxu0
        %1651 = vdwg.mxu0
        %v1653 = vsel %vm809, %v1401, 0
        %v1656 = vsel %vm809, %v1406, 0
        %1658 = vmatprep.subr.mxu0 0.0
        %1659 = vmatpush1.msra.mxu0 0.0
        %1660 = vmatprep.subr.mxu0 0.0
        %1661 = vmatpush1.msra.mxu0 0.0
        %1662 = vmatprep.subr.mxu0 0.0
        %1663 = vmatpush1.msra.mxu0 0.0
        %1664 = vmatprep.subr.mxu0 0.0
        %1665 = vmatpush1.msra.mxu0 0.0
        %1666 = vmatprep.subr.mxu0 0.0
        %1667 = vmatpush1.msra.mxu0 0.0
        %1668 = vmatprep.subr.mxu0 0.0
        %1669 = vmatpush1.msra.mxu0 0.0
        %1670 = vmatprep.subr.mxu0 0.0
        %1671 = vmatpush1.msra.mxu0 0.0
        %1672 = vmatprep.subr.mxu0 0.0
        %1673 = vmatpush1.msra.mxu0 0.0
        %1674 = vmatprep.subr.mxu0 0.0
        %1675 = vmatpush1.msra.mxu0 0.0
        %1676 = vmatprep.subr.mxu0 0.0
        %1677 = vmatpush1.msra.mxu0 0.0
        %1678 = vmatprep.subr.mxu0 0.0
        %1679 = vmatpush1.msra.mxu0 0.0
        %1680 = vmatprep.subr.mxu0 0.0
        %1681 = vmatpush1.msra.mxu0 0.0
        %1682 = vmatprep.subr.mxu0 0.0
        %1683 = vmatpush1.msra.mxu0 %v552
        %1684 = vmatprep.subr.mxu0 0.0
        %1685 = vmatpush1.msra.mxu0 %v551
        %1686 = vmatprep.subr.mxu0 0.0
        %1687 = vmatpush1.msra.mxu0 %v550
        %1688 = vmatprep.subr.mxu0 0.0
        %1689 = vmatpush1.msra.mxu0 %v549
        %1690 = vmatprep.subr.mxu0 0.0
        %1691 = vmatpush2.msra.mxu0 0.0
        %1692 = vmatprep.subr.mxu0 0.0
        %1693 = vmatpush2.msra.mxu0 0.0
        %1694 = vmatprep.subr.mxu0 0.0
        %1695 = vmatpush2.msra.mxu0 0.0
        %1696 = vmatprep.subr.mxu0 0.0
        %1697 = vmatpush2.msra.mxu0 0.0
        %1698 = vmatprep.subr.mxu0 0.0
        %1699 = vmatpush2.msra.mxu0 0.0
        %1700 = vmatprep.subr.mxu0 0.0
        %1701 = vmatpush2.msra.mxu0 0.0
        %1702 = vmatprep.subr.mxu0 0.0
        %1703 = vmatpush2.msra.mxu0 0.0
        %1704 = vmatprep.subr.mxu0 0.0
        %1705 = vmatpush2.msra.mxu0 0.0
        %1706 = vmatprep.subr.mxu0 0.0
        %1707 = vmatpush2.msra.mxu0 0.0
        %1708 = vmatprep.subr.mxu0 0.0
        %1709 = vmatpush2.msra.mxu0 0.0
        %1710 = vmatprep.subr.mxu0 0.0
        %1711 = vmatpush2.msra.mxu0 0.0
        %1712 = vmatprep.subr.mxu0 0.0
        %1713 = vmatpush2.msra.mxu0 0.0
        %1714 = vmatprep.subr.mxu0 0.0
        %1715 = vmatpush2.msra.mxu0 0.0
        %1716 = vmatprep.subr.mxu0 0.0
        %1717 = vmatpush2.msra.mxu0 0.0
        %1718 = vmatprep.subr.mxu0 0.0
        %1719 = vmatpush2.msra.mxu0 0.0
        %1720 = vmatprep.subr.mxu0 0.0
        %1721 = vmatpush2.msra.mxu0 0.0
        %1722 = vmatprep.mubr.f32.mxu0 0.0
        %1723 = vmatmul.mubr.f32.gmra.mxu0 %v1653
        %v1724 = vpop.f32.mrf.mxu0
        %v1725 = vadd.f32 0.0, %v1724
        %v1726 = vpop.f32.mrf.mxu0
        %1727 = vmatprep.mubr.f32.mxu0 0.0
        %1728 = vmatmul.mubr.f32.gmra.mxu0 %v1656
        %v1729 = vpop.f32.mrf.mxu0
        %v1730 = vadd.f32 0.0, %v1729
        %v1731 = vpop.f32.mrf.mxu0
        %1732 = vdwg.mxu0
        %v1734 = vsel %vm809, %v1482, 0
        %v1737 = vsel %vm809, %v1487, 0
        %1739 = vmatprep.subr.mxu0 0.0
        %1740 = vmatpush1.msra.mxu0 0.0
        %1741 = vmatprep.subr.mxu0 0.0
        %1742 = vmatpush1.msra.mxu0 0.0
        %1743 = vmatprep.subr.mxu0 0.0
        %1744 = vmatpush1.msra.mxu0 0.0
        %1745 = vmatprep.subr.mxu0 0.0
        %1746 = vmatpush1.msra.mxu0 0.0
        %1747 = vmatprep.subr.mxu0 0.0
        %1748 = vmatpush1.msra.mxu0 0.0
        %1749 = vmatprep.subr.mxu0 0.0
        %1750 = vmatpush1.msra.mxu0 0.0
        %1751 = vmatprep.subr.mxu0 0.0
        %1752 = vmatpush1.msra.mxu0 0.0
        %1753 = vmatprep.subr.mxu0 0.0
        %1754 = vmatpush1.msra.mxu0 0.0
        %1755 = vmatprep.subr.mxu0 0.0
        %1756 = vmatpush1.msra.mxu0 0.0
        %1757 = vmatprep.subr.mxu0 0.0
        %1758 = vmatpush1.msra.mxu0 0.0
        %1759 = vmatprep.subr.mxu0 0.0
        %1760 = vmatpush1.msra.mxu0 0.0
        %1761 = vmatprep.subr.mxu0 0.0
        %1762 = vmatpush1.msra.mxu0 0.0
        %1763 = vmatprep.subr.mxu0 0.0
        %1764 = vmatpush1.msra.mxu0 %v556
        %1765 = vmatprep.subr.mxu0 0.0
        %1766 = vmatpush1.msra.mxu0 %v555
        %1767 = vmatprep.subr.mxu0 0.0
        %1768 = vmatpush1.msra.mxu0 %v554
        %1769 = vmatprep.subr.mxu0 0.0
        %1770 = vmatpush1.msra.mxu0 %v553
        %1771 = vmatprep.subr.mxu0 0.0
        %1772 = vmatpush2.msra.mxu0 0.0
        %1773 = vmatprep.subr.mxu0 0.0
        %1774 = vmatpush2.msra.mxu0 0.0
        %1775 = vmatprep.subr.mxu0 0.0
        %1776 = vmatpush2.msra.mxu0 0.0
        %1777 = vmatprep.subr.mxu0 0.0
        %1778 = vmatpush2.msra.mxu0 0.0
        %1779 = vmatprep.subr.mxu0 0.0
        %1780 = vmatpush2.msra.mxu0 0.0
        %1781 = vmatprep.subr.mxu0 0.0
        %1782 = vmatpush2.msra.mxu0 0.0
        %1783 = vmatprep.subr.mxu0 0.0
        %1784 = vmatpush2.msra.mxu0 0.0
        %1785 = vmatprep.subr.mxu0 0.0
        %1786 = vmatpush2.msra.mxu0 0.0
        %1787 = vmatprep.subr.mxu0 0.0
        %1788 = vmatpush2.msra.mxu0 0.0
        %1789 = vmatprep.subr.mxu0 0.0
        %1790 = vmatpush2.msra.mxu0 0.0
        %1791 = vmatprep.subr.mxu0 0.0
        %1792 = vmatpush2.msra.mxu0 0.0
        %1793 = vmatprep.subr.mxu0 0.0
        %1794 = vmatpush2.msra.mxu0 0.0
        %1795 = vmatprep.subr.mxu0 0.0
        %1796 = vmatpush2.msra.mxu0 0.0
        %1797 = vmatprep.subr.mxu0 0.0
        %1798 = vmatpush2.msra.mxu0 0.0
        %1799 = vmatprep.subr.mxu0 0.0
        %1800 = vmatpush2.msra.mxu0 0.0
        %1801 = vmatprep.subr.mxu0 0.0
        %1802 = vmatpush2.msra.mxu0 0.0
        %1803 = vmatprep.mubr.f32.mxu0 0.0
        %1804 = vmatmul.mubr.f32.gmra.mxu0 %v1734
        %v1805 = vpop.f32.mrf.mxu0
        %v1806 = vadd.f32 0.0, %v1805
        %v1807 = vpop.f32.mrf.mxu0
        %1808 = vmatprep.mubr.f32.mxu0 0.0
        %1809 = vmatmul.mubr.f32.gmra.mxu0 %v1737
        %v1810 = vpop.f32.mrf.mxu0
        %v1811 = vadd.f32 0.0, %v1810
        %v1812 = vpop.f32.mrf.mxu0
        %1813 = vdwg.mxu0
        %v1815 = vsel %vm809, %v1563, 0
        %v1818 = vsel %vm809, %v1568, 0
        %1820 = vmatprep.subr.mxu0 0.0
        %1821 = vmatpush1.msra.mxu0 0.0
        %1822 = vmatprep.subr.mxu0 0.0
        %1823 = vmatpush1.msra.mxu0 0.0
        %1824 = vmatprep.subr.mxu0 0.0
        %1825 = vmatpush1.msra.mxu0 0.0
        %1826 = vmatprep.subr.mxu0 0.0
        %1827 = vmatpush1.msra.mxu0 0.0
        %1828 = vmatprep.subr.mxu0 0.0
        %1829 = vmatpush1.msra.mxu0 0.0
        %1830 = vmatprep.subr.mxu0 0.0
        %1831 = vmatpush1.msra.mxu0 0.0
        %1832 = vmatprep.subr.mxu0 0.0
        %1833 = vmatpush1.msra.mxu0 0.0
        %1834 = vmatprep.subr.mxu0 0.0
        %1835 = vmatpush1.msra.mxu0 0.0
        %1836 = vmatprep.subr.mxu0 0.0
        %1837 = vmatpush1.msra.mxu0 0.0
        %1838 = vmatprep.subr.mxu0 0.0
        %1839 = vmatpush1.msra.mxu0 0.0
        %1840 = vmatprep.subr.mxu0 0.0
        %1841 = vmatpush1.msra.mxu0 0.0
        %1842 = vmatprep.subr.mxu0 0.0
        %1843 = vmatpush1.msra.mxu0 0.0
        %1844 = vmatprep.subr.mxu0 0.0
        %1845 = vmatpush1.msra.mxu0 %v560
        %1846 = vmatprep.subr.mxu0 0.0
        %1847 = vmatpush1.msra.mxu0 %v559
        %1848 = vmatprep.subr.mxu0 0.0
        %1849 = vmatpush1.msra.mxu0 %v558
        %1850 = vmatprep.subr.mxu0 0.0
        %1851 = vmatpush1.msra.mxu0 %v557
        %1852 = vmatprep.subr.mxu0 0.0
        %1853 = vmatpush2.msra.mxu0 0.0
        %1854 = vmatprep.subr.mxu0 0.0
        %1855 = vmatpush2.msra.mxu0 0.0
        %1856 = vmatprep.subr.mxu0 0.0
        %1857 = vmatpush2.msra.mxu0 0.0
        %1858 = vmatprep.subr.mxu0 0.0
        %1859 = vmatpush2.msra.mxu0 0.0
        %1860 = vmatprep.subr.mxu0 0.0
        %1861 = vmatpush2.msra.mxu0 0.0
        %1862 = vmatprep.subr.mxu0 0.0
        %1863 = vmatpush2.msra.mxu0 0.0
        %1864 = vmatprep.subr.mxu0 0.0
        %1865 = vmatpush2.msra.mxu0 0.0
        %1866 = vmatprep.subr.mxu0 0.0
        %1867 = vmatpush2.msra.mxu0 0.0
        %1868 = vmatprep.subr.mxu0 0.0
        %1869 = vmatpush2.msra.mxu0 0.0
        %1870 = vmatprep.subr.mxu0 0.0
        %1871 = vmatpush2.msra.mxu0 0.0
        %1872 = vmatprep.subr.mxu0 0.0
        %1873 = vmatpush2.msra.mxu0 0.0
        %1874 = vmatprep.subr.mxu0 0.0
        %1875 = vmatpush2.msra.mxu0 0.0
        %1876 = vmatprep.subr.mxu0 0.0
        %1877 = vmatpush2.msra.mxu0 0.0
        %1878 = vmatprep.subr.mxu0 0.0
        %1879 = vmatpush2.msra.mxu0 0.0
        %1880 = vmatprep.subr.mxu0 0.0
        %1881 = vmatpush2.msra.mxu0 0.0
        %1882 = vmatprep.subr.mxu0 0.0
        %1883 = vmatpush2.msra.mxu0 0.0
        %1884 = vmatprep.mubr.f32.mxu0 0.0
        %1885 = vmatmul.mubr.f32.gmra.mxu0 %v1815
        %v1886 = vpop.f32.mrf.mxu0
        %v1887 = vadd.f32 0.0, %v1886
        %v1888 = vpop.f32.mrf.mxu0
        %1889 = vmatprep.mubr.f32.mxu0 0.0
        %1890 = vmatmul.mubr.f32.gmra.mxu0 %v1818
        %v1891 = vpop.f32.mrf.mxu0
        %v1892 = vadd.f32 0.0, %v1891
        %v1893 = vpop.f32.mrf.mxu0
        %1894 = vdwg.mxu0
        %v1895 = vadd.f32 %v1644, %v1725
        %v1896 = vadd.f32 %v1895, %v1806
        %v1897 = vadd.f32 %v1896, %v1887
        %v1898 = vadd.f32 %v1649, %v1730
        %v1899 = vadd.f32 %v1898, %v1811
        %v1900 = vadd.f32 %v1899, %v1892
        %v1902 = vlaneseq
        %v1903 = vshrl.u32 %v1902, 7
        %v1904 = vsub.s32 0, %v1903
        %v1905 = vrot.slane %v561, %v1904
        %v1907 = vadd.f32 %v1897, %v1905
        %v1908 = vadd.f32 %v1900, %v1905
        %v1909 = vadd.f32 %v493, %v1907
        %v1910 = vadd.f32 %v494, %v1908
        %v1911 = vld [vmem:[%s7] sm:$0xff]
        %v1912 = vld [vmem:[%s7 + $0x8] sm:$0xff]
        %v1913 = vld [vmem:[%s7 + $0x10] sm:$0xff]
        %v1914 = vld [vmem:[%s7 + $0x18] sm:$0xff]
        %v1915 = vld [vmem:[%s7 + $0x20] sm:$0xff]
        %v1916 = vld [vmem:[%s7 + $0x28] sm:$0xff]
        %v1917 = vld [vmem:[%s7 + $0x30] sm:$0xff]
        %v1918 = vld [vmem:[%s7 + $0x38] sm:$0xff]
        %v1919 = vld [vmem:[%s7 + $0x40] sm:$0xff]
        %v1920 = vld [vmem:[%s7 + $0x48] sm:$0xff]
        %v1921 = vld [vmem:[%s7 + $0x50] sm:$0xff]
        %v1922 = vld [vmem:[%s7 + $0x58] sm:$0xff]
        %v1923 = vld [vmem:[%s7 + $0x60] sm:$0xff]
        %v1924 = vld [vmem:[%s7 + $0x68] sm:$0xff]
        %v1925 = vld [vmem:[%s7 + $0x70] sm:$0xff]
        %v1926 = vld [vmem:[%s7 + $0x78] sm:$0xff]
        %v1927 = vld [vmem:[%s7 + $0x80] sm:$0xff]
        %v1928 = vld [vmem:[%s7 + $0x88] sm:$0xff]
        %v1929 = vld [vmem:[%s7 + $0x90] sm:$0xff]
        %v1930 = vld [vmem:[%s7 + $0x98] sm:$0xff]
        %v1931 = vld [vmem:[%s7 + $0xa0] sm:$0xff]
        %v1932 = vld [vmem:[%s7 + $0xa8] sm:$0xff]
        %v1933 = vld [vmem:[%s7 + $0xb0] sm:$0xff]
        %v1934 = vld [vmem:[%s7 + $0xb8] sm:$0xff]
        %v1935 = vld [vmem:[%s7 + $0xc0] sm:$0xff]
        %v1936 = vld [vmem:[%s7 + $0xc8] sm:$0xff]
        %v1937 = vld [vmem:[%s7 + $0xd0] sm:$0xff]
        %v1938 = vld [vmem:[%s7 + $0xd8] sm:$0xff]
        %v1939 = vld [vmem:[%s7 + $0xe0] sm:$0xff]
        %v1940 = vld [vmem:[%s7 + $0xe8] sm:$0xff]
        %v1941 = vld [vmem:[%s7 + $0xf0] sm:$0xff]
        %v1942 = vld [vmem:[%s7 + $0xf8] sm:$0xff]
        %v1943 = vld [vmem:[%s7 + $0x100] sm:$0xff]
        %v1944 = vld [vmem:[%s7 + $0x108] sm:$0xff]
        %v1945 = vld [vmem:[%s7 + $0x110] sm:$0xff]
        %v1946 = vld [vmem:[%s7 + $0x118] sm:$0xff]
        %v1947 = vld [vmem:[%s7 + $0x120] sm:$0xff]
        %v1948 = vld [vmem:[%s7 + $0x128] sm:$0xff]
        %v1949 = vld [vmem:[%s7 + $0x130] sm:$0xff]
        %v1950 = vld [vmem:[%s7 + $0x138] sm:$0xff]
        %v1951 = vld [vmem:[%s7 + $0x140] sm:$0xff]
        %v1952 = vld [vmem:[%s7 + $0x148] sm:$0xff]
        %v1953 = vld [vmem:[%s7 + $0x150] sm:$0xff]
        %v1954 = vld [vmem:[%s7 + $0x158] sm:$0xff]
        %v1955 = vld [vmem:[%s7 + $0x160] sm:$0xff]
        %v1956 = vld [vmem:[%s7 + $0x168] sm:$0xff]
        %v1957 = vld [vmem:[%s7 + $0x170] sm:$0xff]
        %v1958 = vld [vmem:[%s7 + $0x178] sm:$0xff]
        %v1959 = vld [vmem:[%s8] sm:$0x7]
        %v1960 = vld [vmem:[%s9] sm:$0xff]
        %v1961 = vld [vmem:[%s9 + $0x8] sm:$0xff]
        %v1962 = vld [vmem:[%s9 + $0x10] sm:$0xff]
        %v1963 = vld [vmem:[%s9 + $0x18] sm:$0xff]
        %v1964 = vld [vmem:[%s9 + $0x20] sm:$0xff]
        %v1965 = vld [vmem:[%s9 + $0x28] sm:$0xff]
        %v1966 = vld [vmem:[%s9 + $0x30] sm:$0xff]
        %v1967 = vld [vmem:[%s9 + $0x38] sm:$0xff]
        %v1968 = vld [vmem:[%s9 + $0x40] sm:$0xff]
        %v1969 = vld [vmem:[%s9 + $0x48] sm:$0xff]
        %v1970 = vld [vmem:[%s9 + $0x50] sm:$0xff]
        %v1971 = vld [vmem:[%s9 + $0x58] sm:$0xff]
        %v1972 = vld [vmem:[%s9 + $0x60] sm:$0xff]
        %v1973 = vld [vmem:[%s9 + $0x68] sm:$0xff]
        %v1974 = vld [vmem:[%s9 + $0x70] sm:$0xff]
        %v1975 = vld [vmem:[%s9 + $0x78] sm:$0xff]
        %v1976 = vld [vmem:[%s10] sm:$0x1]
        %v1977 = vmul.f32 %v1909, %v1909
        %v1978 = vmul.f32 %v1910, %v1910
        %1979 = vadd.xlane.f32.xlu0 %v1977
        %v1980 = vpop.xlane.xlu0 %1979
        %1981 = vadd.xlane.f32.xlu0 %v1978
        %v1982 = vpop.xlane.xlu0 %1981
        %v1983 = vmul.f32 %v1980, %v576
        %v1984 = vmul.f32 %v1982, %v576
        %v1985 = vadd.f32 %v1983, 1e-06
        %v1986 = vadd.f32 %v1984, 1e-06
        %v1987 = vrsqrt.pop %v1985
        %v1988 = vrsqrt.pop %v1986
        %v1989 = vmul.f32 %v1909, %v1987
        %v1990 = vmul.f32 %v1910, %v1988
        %v1991 = vmul.f32 %v589, %v1989
        %v1992 = vmul.f32 %v589, %v1990
        %v1994 = vlaneseq
        %v1995 = vshrl.u32 %v1994, 7
        %v1996 = vsub.s32 0, %v1995
        %v1997 = vrot.slane %v1959, %v1996
        %v1998 = vlaneseq
        %v1999 = vshrl.u32 %v1998, 7
        %v2000 = vsub.s32 1, %v1999
        %v2001 = vrot.slane %v1959, %v2000
        %v2002 = vlaneseq
        %v2003 = vshrl.u32 %v2002, 7
        %v2004 = vsub.s32 2, %v2003
        %v2005 = vrot.slane %v1959, %v2004
        %2009 = vmatprep.subr.mxu0 %v1957
        %2010 = vmatpush1.msra.mxu0 %v1956
        %2011 = vmatprep.subr.mxu0 %v1954
        %2012 = vmatpush1.msra.mxu0 %v1953
        %2013 = vmatprep.subr.mxu0 %v1951
        %2014 = vmatpush1.msra.mxu0 %v1950
        %2015 = vmatprep.subr.mxu0 %v1948
        %2016 = vmatpush1.msra.mxu0 %v1947
        %2017 = vmatprep.subr.mxu0 %v1945
        %2018 = vmatpush1.msra.mxu0 %v1944
        %2019 = vmatprep.subr.mxu0 %v1942
        %2020 = vmatpush1.msra.mxu0 %v1941
        %2021 = vmatprep.subr.mxu0 %v1939
        %2022 = vmatpush1.msra.mxu0 %v1938
        %2023 = vmatprep.subr.mxu0 %v1936
        %2024 = vmatpush1.msra.mxu0 %v1935
        %2025 = vmatprep.subr.mxu0 %v1933
        %2026 = vmatpush1.msra.mxu0 %v1932
        %2027 = vmatprep.subr.mxu0 %v1930
        %2028 = vmatpush1.msra.mxu0 %v1929
        %2029 = vmatprep.subr.mxu0 %v1927
        %2030 = vmatpush1.msra.mxu0 %v1926
        %2031 = vmatprep.subr.mxu0 %v1924
        %2032 = vmatpush1.msra.mxu0 %v1923
        %2033 = vmatprep.subr.mxu0 %v1921
        %2034 = vmatpush1.msra.mxu0 %v1920
        %2035 = vmatprep.subr.mxu0 %v1918
        %2036 = vmatpush1.msra.mxu0 %v1917
        %2037 = vmatprep.subr.mxu0 %v1915
        %2038 = vmatpush1.msra.mxu0 %v1914
        %2039 = vmatprep.subr.mxu0 %v1912
        %2040 = vmatpush1.msra.mxu0 %v1911
        %2041 = vmatprep.subr.mxu0 0.0
        %2042 = vmatpush2.msra.mxu0 0.0
        %2043 = vmatprep.subr.mxu0 0.0
        %2044 = vmatpush2.msra.mxu0 0.0
        %2045 = vmatprep.subr.mxu0 0.0
        %2046 = vmatpush2.msra.mxu0 0.0
        %2047 = vmatprep.subr.mxu0 0.0
        %2048 = vmatpush2.msra.mxu0 0.0
        %2049 = vmatprep.subr.mxu0 0.0
        %2050 = vmatpush2.msra.mxu0 0.0
        %2051 = vmatprep.subr.mxu0 0.0
        %2052 = vmatpush2.msra.mxu0 0.0
        %2053 = vmatprep.subr.mxu0 0.0
        %2054 = vmatpush2.msra.mxu0 0.0
        %2055 = vmatprep.subr.mxu0 0.0
        %2056 = vmatpush2.msra.mxu0 0.0
        %2057 = vmatprep.subr.mxu0 0.0
        %2058 = vmatpush2.msra.mxu0 0.0
        %2059 = vmatprep.subr.mxu0 0.0
        %2060 = vmatpush2.msra.mxu0 0.0
        %2061 = vmatprep.subr.mxu0 0.0
        %2062 = vmatpush2.msra.mxu0 0.0
        %2063 = vmatprep.subr.mxu0 0.0
        %2064 = vmatpush2.msra.mxu0 0.0
        %2065 = vmatprep.subr.mxu0 0.0
        %2066 = vmatpush2.msra.mxu0 0.0
        %2067 = vmatprep.subr.mxu0 0.0
        %2068 = vmatpush2.msra.mxu0 0.0
        %2069 = vmatprep.subr.mxu0 0.0
        %2070 = vmatpush2.msra.mxu0 0.0
        %2071 = vmatprep.subr.mxu0 0.0
        %2072 = vmatpush2.msra.mxu0 0.0
        %2073 = vmatprep.mubr.f32.mxu0 0.0
        %2074 = vmatmul.mubr.f32.gmra.mxu0 %v1991
        %v2075 = vpop.f32.mrf.mxu0
        %v2076 = vadd.f32 %v1997, %v2075
        %v2077 = vpop.f32.mrf.mxu0
        %v2078 = vadd.f32 %v2001, %v2077
        %2079 = vmatprep.mubr.f32.mxu0 0.0
        %2080 = vmatmul.mubr.f32.gmra.mxu0 %v1992
        %v2081 = vpop.f32.mrf.mxu0
        %v2082 = vadd.f32 %v1997, %v2081
        %v2083 = vpop.f32.mrf.mxu0
        %v2084 = vadd.f32 %v2001, %v2083
        %2085 = vdwg.mxu0
        %2086 = vmatprep.subr.mxu0 0.0
        %2087 = vmatpush1.msra.mxu0 %v1958
        %2088 = vmatprep.subr.mxu0 0.0
        %2089 = vmatpush1.msra.mxu0 %v1955
        %2090 = vmatprep.subr.mxu0 0.0
        %2091 = vmatpush1.msra.mxu0 %v1952
        %2092 = vmatprep.subr.mxu0 0.0
        %2093 = vmatpush1.msra.mxu0 %v1949
        %2094 = vmatprep.subr.mxu0 0.0
        %2095 = vmatpush1.msra.mxu0 %v1946
        %2096 = vmatprep.subr.mxu0 0.0
        %2097 = vmatpush1.msra.mxu0 %v1943
        %2098 = vmatprep.subr.mxu0 0.0
        %2099 = vmatpush1.msra.mxu0 %v1940
        %2100 = vmatprep.subr.mxu0 0.0
        %2101 = vmatpush1.msra.mxu0 %v1937
        %2102 = vmatprep.subr.mxu0 0.0
        %2103 = vmatpush1.msra.mxu0 %v1934
        %2104 = vmatprep.subr.mxu0 0.0
        %2105 = vmatpush1.msra.mxu0 %v1931
        %2106 = vmatprep.subr.mxu0 0.0
        %2107 = vmatpush1.msra.mxu0 %v1928
        %2108 = vmatprep.subr.mxu0 0.0
        %2109 = vmatpush1.msra.mxu0 %v1925
        %2110 = vmatprep.subr.mxu0 0.0
        %2111 = vmatpush1.msra.mxu0 %v1922
        %2112 = vmatprep.subr.mxu0 0.0
        %2113 = vmatpush1.msra.mxu0 %v1919
        %2114 = vmatprep.subr.mxu0 0.0
        %2115 = vmatpush1.msra.mxu0 %v1916
        %2116 = vmatprep.subr.mxu0 0.0
        %2117 = vmatpush1.msra.mxu0 %v1913
        %2118 = vmatprep.subr.mxu0 0.0
        %2119 = vmatpush2.msra.mxu0 0.0
        %2120 = vmatprep.subr.mxu0 0.0
        %2121 = vmatpush2.msra.mxu0 0.0
        %2122 = vmatprep.subr.mxu0 0.0
        %2123 = vmatpush2.msra.mxu0 0.0
        %2124 = vmatprep.subr.mxu0 0.0
        %2125 = vmatpush2.msra.mxu0 0.0
        %2126 = vmatprep.subr.mxu0 0.0
        %2127 = vmatpush2.msra.mxu0 0.0
        %2128 = vmatprep.subr.mxu0 0.0
        %2129 = vmatpush2.msra.mxu0 0.0
        %2130 = vmatprep.subr.mxu0 0.0
        %2131 = vmatpush2.msra.mxu0 0.0
        %2132 = vmatprep.subr.mxu0 0.0
        %2133 = vmatpush2.msra.mxu0 0.0
        %2134 = vmatprep.subr.mxu0 0.0
        %2135 = vmatpush2.msra.mxu0 0.0
        %2136 = vmatprep.subr.mxu0 0.0
        %2137 = vmatpush2.msra.mxu0 0.0
        %2138 = vmatprep.subr.mxu0 0.0
        %2139 = vmatpush2.msra.mxu0 0.0
        %2140 = vmatprep.subr.mxu0 0.0
        %2141 = vmatpush2.msra.mxu0 0.0
        %2142 = vmatprep.subr.mxu0 0.0
        %2143 = vmatpush2.msra.mxu0 0.0
        %2144 = vmatprep.subr.mxu0 0.0
        %2145 = vmatpush2.msra.mxu0 0.0
        %2146 = vmatprep.subr.mxu0 0.0
        %2147 = vmatpush2.msra.mxu0 0.0
        %2148 = vmatprep.subr.mxu0 0.0
        %2149 = vmatpush2.msra.mxu0 0.0
        %2150 = vmatprep.mubr.f32.mxu0 0.0
        %2151 = vmatmul.mubr.f32.gmra.mxu0 %v1991
        %v2152 = vpop.f32.mrf.mxu0
        %v2153 = vadd.f32 %v2005, %v2152
        %v2154 = vpop.f32.mrf.mxu0
        %2155 = vmatprep.mubr.f32.mxu0 0.0
        %2156 = vmatmul.mubr.f32.gmra.mxu0 %v1992
        %v2157 = vpop.f32.mrf.mxu0
        %v2158 = vadd.f32 %v2005, %v2157
        %v2159 = vpop.f32.mrf.mxu0
        %2160 = vdwg.mxu0
        %2163 = vrot.lane.b32.xlu0 %v2076, 96
        %v2164 = vpop.permute.xlu0 %2163
        %2165 = vrot.lane.b32.xlu0 %v2082, 96
        %v2166 = vpop.permute.xlu0 %2165
        %2167 = vrot.lane.b32.xlu0 %v2076, 64
        %v2168 = vpop.permute.xlu0 %2167
        %2169 = vrot.lane.b32.xlu0 %v2082, 64
        %v2170 = vpop.permute.xlu0 %2169
        %2171 = vrot.lane.b32.xlu0 %v2076, 32
        %v2172 = vpop.permute.xlu0 %2171
        %2173 = vrot.lane.b32.xlu0 %v2082, 32
        %v2174 = vpop.permute.xlu0 %2173
        %2177 = vrot.lane.b32.xlu0 %v2078, 96
        %v2178 = vpop.permute.xlu0 %2177
        %2179 = vrot.lane.b32.xlu0 %v2084, 96
        %v2180 = vpop.permute.xlu0 %2179
        %2181 = vrot.lane.b32.xlu0 %v2078, 64
        %v2182 = vpop.permute.xlu0 %2181
        %2183 = vrot.lane.b32.xlu0 %v2084, 64
        %v2184 = vpop.permute.xlu0 %2183
        %2185 = vrot.lane.b32.xlu0 %v2078, 32
        %v2186 = vpop.permute.xlu0 %2185
        %2187 = vrot.lane.b32.xlu0 %v2084, 32
        %v2188 = vpop.permute.xlu0 %2187
        %2191 = vrot.lane.b32.xlu0 %v2153, 96
        %v2192 = vpop.permute.xlu0 %2191
        %2193 = vrot.lane.b32.xlu0 %v2158, 96
        %v2194 = vpop.permute.xlu0 %2193
        %2197 = vrot.lane.b32.xlu0 %v2153, 64
        %v2198 = vpop.permute.xlu0 %2197
        %2199 = vrot.lane.b32.xlu0 %v2158, 64
        %v2200 = vpop.permute.xlu0 %2199
        %2203 = vrot.lane.b32.xlu0 %v2153, 32
        %v2204 = vpop.permute.xlu0 %2203
        %2205 = vrot.lane.b32.xlu0 %v2158, 32
        %v2206 = vpop.permute.xlu0 %2205
        %v2209 = vsel %vm809, %v2076, 0
        %v2211 = vsel %vm809, %v2082, 0
        %v2213 = vsel %vm809, %v2078, 0
        %v2215 = vsel %vm809, %v2084, 0
        %2217 = vmatprep.subr.mxu0 0.0
        %2218 = vmatpush1.xpose.msra.mxu0 0.0
        %2219 = vmatprep.subr.mxu0 0.0
        %2220 = vmatpush1.xpose.msra.mxu0 0.0
        %2221 = vmatprep.subr.mxu0 0.0
        %2222 = vmatpush1.xpose.msra.mxu0 0.0
        %2223 = vmatprep.subr.mxu0 0.0
        %2224 = vmatpush1.xpose.msra.mxu0 0.0
        %2225 = vmatprep.subr.mxu0 0.0
        %2226 = vmatpush1.xpose.msra.mxu0 0.0
        %2227 = vmatprep.subr.mxu0 0.0
        %2228 = vmatpush1.xpose.msra.mxu0 0.0
        %2229 = vmatprep.subr.mxu0 0.0
        %2230 = vmatpush1.xpose.msra.mxu0 0.0
        %2231 = vmatprep.subr.mxu0 0.0
        %2232 = vmatpush1.xpose.msra.mxu0 0.0
        %2233 = vmatprep.subr.mxu0 0.0
        %2234 = vmatpush1.xpose.msra.mxu0 0.0
        %2235 = vmatprep.subr.mxu0 0.0
        %2236 = vmatpush1.xpose.msra.mxu0 0.0
        %2237 = vmatprep.subr.mxu0 0.0
        %2238 = vmatpush1.xpose.msra.mxu0 0.0
        %2239 = vmatprep.subr.mxu0 0.0
        %2240 = vmatpush1.xpose.msra.mxu0 0.0
        %2241 = vmatprep.subr.mxu0 0.0
        %2242 = vmatpush1.xpose.msra.mxu0 0.0
        %2243 = vmatprep.subr.mxu0 0.0
        %2244 = vmatpush1.xpose.msra.mxu0 0.0
        %2245 = vmatprep.subr.mxu0 0.0
        %2246 = vmatpush1.xpose.msra.mxu0 %v2215
        %2247 = vmatprep.subr.mxu0 0.0
        %2248 = vmatpush1.xpose.msra.mxu0 %v2213
        %2249 = vmatprep.subr.mxu0 0.0
        %2250 = vmatpush2.xpose.msra.mxu0 0.0
        %2251 = vmatprep.subr.mxu0 0.0
        %2252 = vmatpush2.xpose.msra.mxu0 0.0
        %2253 = vmatprep.subr.mxu0 0.0
        %2254 = vmatpush2.xpose.msra.mxu0 0.0
        %2255 = vmatprep.subr.mxu0 0.0
        %2256 = vmatpush2.xpose.msra.mxu0 0.0
        %2257 = vmatprep.subr.mxu0 0.0
        %2258 = vmatpush2.xpose.msra.mxu0 0.0
        %2259 = vmatprep.subr.mxu0 0.0
        %2260 = vmatpush2.xpose.msra.mxu0 0.0
        %2261 = vmatprep.subr.mxu0 0.0
        %2262 = vmatpush2.xpose.msra.mxu0 0.0
        %2263 = vmatprep.subr.mxu0 0.0
        %2264 = vmatpush2.xpose.msra.mxu0 0.0
        %2265 = vmatprep.subr.mxu0 0.0
        %2266 = vmatpush2.xpose.msra.mxu0 0.0
        %2267 = vmatprep.subr.mxu0 0.0
        %2268 = vmatpush2.xpose.msra.mxu0 0.0
        %2269 = vmatprep.subr.mxu0 0.0
        %2270 = vmatpush2.xpose.msra.mxu0 0.0
        %2271 = vmatprep.subr.mxu0 0.0
        %2272 = vmatpush2.xpose.msra.mxu0 0.0
        %2273 = vmatprep.subr.mxu0 0.0
        %2274 = vmatpush2.xpose.msra.mxu0 0.0
        %2275 = vmatprep.subr.mxu0 0.0
        %2276 = vmatpush2.xpose.msra.mxu0 0.0
        %2277 = vmatprep.subr.mxu0 0.0
        %2278 = vmatpush2.xpose.msra.mxu0 0.0
        %2279 = vmatprep.subr.mxu0 0.0
        %2280 = vmatpush2.xpose.msra.mxu0 0.0
        %2281 = vmatprep.mubr.f32.mxu0 0.0
        %2282 = vmatmul.mubr.f32.gmra.mxu0 %v2209
        %v2283 = vpop.f32.mrf.mxu0
        %v2284 = vadd.f32 0.0, %v2283
        %v2285 = vpop.f32.mrf.mxu0
        %2286 = vmatprep.mubr.f32.mxu0 0.0
        %2287 = vmatmul.mubr.f32.gmra.mxu0 %v2211
        %v2288 = vpop.f32.mrf.mxu0
        %v2289 = vadd.f32 0.0, %v2288
        %v2290 = vpop.f32.mrf.mxu0
        %2291 = vdwg.mxu0
        %v2292 = vsel %vm809, %v2164, 0
        %v2294 = vsel %vm809, %v2166, 0
        %v2296 = vsel %vm809, %v2178, 0
        %v2298 = vsel %vm809, %v2180, 0
        %2300 = vmatprep.subr.mxu0 0.0
        %2301 = vmatpush1.xpose.msra.mxu0 0.0
        %2302 = vmatprep.subr.mxu0 0.0
        %2303 = vmatpush1.xpose.msra.mxu0 0.0
        %2304 = vmatprep.subr.mxu0 0.0
        %2305 = vmatpush1.xpose.msra.mxu0 0.0
        %2306 = vmatprep.subr.mxu0 0.0
        %2307 = vmatpush1.xpose.msra.mxu0 0.0
        %2308 = vmatprep.subr.mxu0 0.0
        %2309 = vmatpush1.xpose.msra.mxu0 0.0
        %2310 = vmatprep.subr.mxu0 0.0
        %2311 = vmatpush1.xpose.msra.mxu0 0.0
        %2312 = vmatprep.subr.mxu0 0.0
        %2313 = vmatpush1.xpose.msra.mxu0 0.0
        %2314 = vmatprep.subr.mxu0 0.0
        %2315 = vmatpush1.xpose.msra.mxu0 0.0
        %2316 = vmatprep.subr.mxu0 0.0
        %2317 = vmatpush1.xpose.msra.mxu0 0.0
        %2318 = vmatprep.subr.mxu0 0.0
        %2319 = vmatpush1.xpose.msra.mxu0 0.0
        %2320 = vmatprep.subr.mxu0 0.0
        %2321 = vmatpush1.xpose.msra.mxu0 0.0
        %2322 = vmatprep.subr.mxu0 0.0
        %2323 = vmatpush1.xpose.msra.mxu0 0.0
        %2324 = vmatprep.subr.mxu0 0.0
        %2325 = vmatpush1.xpose.msra.mxu0 0.0
        %2326 = vmatprep.subr.mxu0 0.0
        %2327 = vmatpush1.xpose.msra.mxu0 0.0
        %2328 = vmatprep.subr.mxu0 0.0
        %2329 = vmatpush1.xpose.msra.mxu0 %v2298
        %2330 = vmatprep.subr.mxu0 0.0
        %2331 = vmatpush1.xpose.msra.mxu0 %v2296
        %2332 = vmatprep.subr.mxu0 0.0
        %2333 = vmatpush2.xpose.msra.mxu0 0.0
        %2334 = vmatprep.subr.mxu0 0.0
        %2335 = vmatpush2.xpose.msra.mxu0 0.0
        %2336 = vmatprep.subr.mxu0 0.0
        %2337 = vmatpush2.xpose.msra.mxu0 0.0
        %2338 = vmatprep.subr.mxu0 0.0
        %2339 = vmatpush2.xpose.msra.mxu0 0.0
        %2340 = vmatprep.subr.mxu0 0.0
        %2341 = vmatpush2.xpose.msra.mxu0 0.0
        %2342 = vmatprep.subr.mxu0 0.0
        %2343 = vmatpush2.xpose.msra.mxu0 0.0
        %2344 = vmatprep.subr.mxu0 0.0
        %2345 = vmatpush2.xpose.msra.mxu0 0.0
        %2346 = vmatprep.subr.mxu0 0.0
        %2347 = vmatpush2.xpose.msra.mxu0 0.0
        %2348 = vmatprep.subr.mxu0 0.0
        %2349 = vmatpush2.xpose.msra.mxu0 0.0
        %2350 = vmatprep.subr.mxu0 0.0
        %2351 = vmatpush2.xpose.msra.mxu0 0.0
        %2352 = vmatprep.subr.mxu0 0.0
        %2353 = vmatpush2.xpose.msra.mxu0 0.0
        %2354 = vmatprep.subr.mxu0 0.0
        %2355 = vmatpush2.xpose.msra.mxu0 0.0
        %2356 = vmatprep.subr.mxu0 0.0
        %2357 = vmatpush2.xpose.msra.mxu0 0.0
        %2358 = vmatprep.subr.mxu0 0.0
        %2359 = vmatpush2.xpose.msra.mxu0 0.0
        %2360 = vmatprep.subr.mxu0 0.0
        %2361 = vmatpush2.xpose.msra.mxu0 0.0
        %2362 = vmatprep.subr.mxu0 0.0
        %2363 = vmatpush2.xpose.msra.mxu0 0.0
        %2364 = vmatprep.mubr.f32.mxu0 0.0
        %2365 = vmatmul.mubr.f32.gmra.mxu0 %v2292
        %v2366 = vpop.f32.mrf.mxu0
        %v2367 = vadd.f32 0.0, %v2366
        %v2368 = vpop.f32.mrf.mxu0
        %2369 = vmatprep.mubr.f32.mxu0 0.0
        %2370 = vmatmul.mubr.f32.gmra.mxu0 %v2294
        %v2371 = vpop.f32.mrf.mxu0
        %v2372 = vadd.f32 0.0, %v2371
        %v2373 = vpop.f32.mrf.mxu0
        %2374 = vdwg.mxu0
        %v2375 = vsel %vm809, %v2168, 0
        %v2377 = vsel %vm809, %v2170, 0
        %v2379 = vsel %vm809, %v2182, 0
        %v2381 = vsel %vm809, %v2184, 0
        %2383 = vmatprep.subr.mxu0 0.0
        %2384 = vmatpush1.xpose.msra.mxu0 0.0
        %2385 = vmatprep.subr.mxu0 0.0
        %2386 = vmatpush1.xpose.msra.mxu0 0.0
        %2387 = vmatprep.subr.mxu0 0.0
        %2388 = vmatpush1.xpose.msra.mxu0 0.0
        %2389 = vmatprep.subr.mxu0 0.0
        %2390 = vmatpush1.xpose.msra.mxu0 0.0
        %2391 = vmatprep.subr.mxu0 0.0
        %2392 = vmatpush1.xpose.msra.mxu0 0.0
        %2393 = vmatprep.subr.mxu0 0.0
        %2394 = vmatpush1.xpose.msra.mxu0 0.0
        %2395 = vmatprep.subr.mxu0 0.0
        %2396 = vmatpush1.xpose.msra.mxu0 0.0
        %2397 = vmatprep.subr.mxu0 0.0
        %2398 = vmatpush1.xpose.msra.mxu0 0.0
        %2399 = vmatprep.subr.mxu0 0.0
        %2400 = vmatpush1.xpose.msra.mxu0 0.0
        %2401 = vmatprep.subr.mxu0 0.0
        %2402 = vmatpush1.xpose.msra.mxu0 0.0
        %2403 = vmatprep.subr.mxu0 0.0
        %2404 = vmatpush1.xpose.msra.mxu0 0.0
        %2405 = vmatprep.subr.mxu0 0.0
        %2406 = vmatpush1.xpose.msra.mxu0 0.0
        %2407 = vmatprep.subr.mxu0 0.0
        %2408 = vmatpush1.xpose.msra.mxu0 0.0
        %2409 = vmatprep.subr.mxu0 0.0
        %2410 = vmatpush1.xpose.msra.mxu0 0.0
        %2411 = vmatprep.subr.mxu0 0.0
        %2412 = vmatpush1.xpose.msra.mxu0 %v2381
        %2413 = vmatprep.subr.mxu0 0.0
        %2414 = vmatpush1.xpose.msra.mxu0 %v2379
        %2415 = vmatprep.subr.mxu0 0.0
        %2416 = vmatpush2.xpose.msra.mxu0 0.0
        %2417 = vmatprep.subr.mxu0 0.0
        %2418 = vmatpush2.xpose.msra.mxu0 0.0
        %2419 = vmatprep.subr.mxu0 0.0
        %2420 = vmatpush2.xpose.msra.mxu0 0.0
        %2421 = vmatprep.subr.mxu0 0.0
        %2422 = vmatpush2.xpose.msra.mxu0 0.0
        %2423 = vmatprep.subr.mxu0 0.0
        %2424 = vmatpush2.xpose.msra.mxu0 0.0
        %2425 = vmatprep.subr.mxu0 0.0
        %2426 = vmatpush2.xpose.msra.mxu0 0.0
        %2427 = vmatprep.subr.mxu0 0.0
        %2428 = vmatpush2.xpose.msra.mxu0 0.0
        %2429 = vmatprep.subr.mxu0 0.0
        %2430 = vmatpush2.xpose.msra.mxu0 0.0
        %2431 = vmatprep.subr.mxu0 0.0
        %2432 = vmatpush2.xpose.msra.mxu0 0.0
        %2433 = vmatprep.subr.mxu0 0.0
        %2434 = vmatpush2.xpose.msra.mxu0 0.0
        %2435 = vmatprep.subr.mxu0 0.0
        %2436 = vmatpush2.xpose.msra.mxu0 0.0
        %2437 = vmatprep.subr.mxu0 0.0
        %2438 = vmatpush2.xpose.msra.mxu0 0.0
        %2439 = vmatprep.subr.mxu0 0.0
        %2440 = vmatpush2.xpose.msra.mxu0 0.0
        %2441 = vmatprep.subr.mxu0 0.0
        %2442 = vmatpush2.xpose.msra.mxu0 0.0
        %2443 = vmatprep.subr.mxu0 0.0
        %2444 = vmatpush2.xpose.msra.mxu0 0.0
        %2445 = vmatprep.subr.mxu0 0.0
        %2446 = vmatpush2.xpose.msra.mxu0 0.0
        %2447 = vmatprep.mubr.f32.mxu0 0.0
        %2448 = vmatmul.mubr.f32.gmra.mxu0 %v2375
        %v2449 = vpop.f32.mrf.mxu0
        %v2450 = vadd.f32 0.0, %v2449
        %v2451 = vpop.f32.mrf.mxu0
        %2452 = vmatprep.mubr.f32.mxu0 0.0
        %2453 = vmatmul.mubr.f32.gmra.mxu0 %v2377
        %v2454 = vpop.f32.mrf.mxu0
        %v2455 = vadd.f32 0.0, %v2454
        %v2456 = vpop.f32.mrf.mxu0
        %2457 = vdwg.mxu0
        %v2458 = vsel %vm809, %v2172, 0
        %v2460 = vsel %vm809, %v2174, 0
        %v2462 = vsel %vm809, %v2186, 0
        %v2464 = vsel %vm809, %v2188, 0
        %2466 = vmatprep.subr.mxu0 0.0
        %2467 = vmatpush1.xpose.msra.mxu0 0.0
        %2468 = vmatprep.subr.mxu0 0.0
        %2469 = vmatpush1.xpose.msra.mxu0 0.0
        %2470 = vmatprep.subr.mxu0 0.0
        %2471 = vmatpush1.xpose.msra.mxu0 0.0
        %2472 = vmatprep.subr.mxu0 0.0
        %2473 = vmatpush1.xpose.msra.mxu0 0.0
        %2474 = vmatprep.subr.mxu0 0.0
        %2475 = vmatpush1.xpose.msra.mxu0 0.0
        %2476 = vmatprep.subr.mxu0 0.0
        %2477 = vmatpush1.xpose.msra.mxu0 0.0
        %2478 = vmatprep.subr.mxu0 0.0
        %2479 = vmatpush1.xpose.msra.mxu0 0.0
        %2480 = vmatprep.subr.mxu0 0.0
        %2481 = vmatpush1.xpose.msra.mxu0 0.0
        %2482 = vmatprep.subr.mxu0 0.0
        %2483 = vmatpush1.xpose.msra.mxu0 0.0
        %2484 = vmatprep.subr.mxu0 0.0
        %2485 = vmatpush1.xpose.msra.mxu0 0.0
        %2486 = vmatprep.subr.mxu0 0.0
        %2487 = vmatpush1.xpose.msra.mxu0 0.0
        %2488 = vmatprep.subr.mxu0 0.0
        %2489 = vmatpush1.xpose.msra.mxu0 0.0
        %2490 = vmatprep.subr.mxu0 0.0
        %2491 = vmatpush1.xpose.msra.mxu0 0.0
        %2492 = vmatprep.subr.mxu0 0.0
        %2493 = vmatpush1.xpose.msra.mxu0 0.0
        %2494 = vmatprep.subr.mxu0 0.0
        %2495 = vmatpush1.xpose.msra.mxu0 %v2464
        %2496 = vmatprep.subr.mxu0 0.0
        %2497 = vmatpush1.xpose.msra.mxu0 %v2462
        %2498 = vmatprep.subr.mxu0 0.0
        %2499 = vmatpush2.xpose.msra.mxu0 0.0
        %2500 = vmatprep.subr.mxu0 0.0
        %2501 = vmatpush2.xpose.msra.mxu0 0.0
        %2502 = vmatprep.subr.mxu0 0.0
        %2503 = vmatpush2.xpose.msra.mxu0 0.0
        %2504 = vmatprep.subr.mxu0 0.0
        %2505 = vmatpush2.xpose.msra.mxu0 0.0
        %2506 = vmatprep.subr.mxu0 0.0
        %2507 = vmatpush2.xpose.msra.mxu0 0.0
        %2508 = vmatprep.subr.mxu0 0.0
        %2509 = vmatpush2.xpose.msra.mxu0 0.0
        %2510 = vmatprep.subr.mxu0 0.0
        %2511 = vmatpush2.xpose.msra.mxu0 0.0
        %2512 = vmatprep.subr.mxu0 0.0
        %2513 = vmatpush2.xpose.msra.mxu0 0.0
        %2514 = vmatprep.subr.mxu0 0.0
        %2515 = vmatpush2.xpose.msra.mxu0 0.0
        %2516 = vmatprep.subr.mxu0 0.0
        %2517 = vmatpush2.xpose.msra.mxu0 0.0
        %2518 = vmatprep.subr.mxu0 0.0
        %2519 = vmatpush2.xpose.msra.mxu0 0.0
        %2520 = vmatprep.subr.mxu0 0.0
        %2521 = vmatpush2.xpose.msra.mxu0 0.0
        %2522 = vmatprep.subr.mxu0 0.0
        %2523 = vmatpush2.xpose.msra.mxu0 0.0
        %2524 = vmatprep.subr.mxu0 0.0
        %2525 = vmatpush2.xpose.msra.mxu0 0.0
        %2526 = vmatprep.subr.mxu0 0.0
        %2527 = vmatpush2.xpose.msra.mxu0 0.0
        %2528 = vmatprep.subr.mxu0 0.0
        %2529 = vmatpush2.xpose.msra.mxu0 0.0
        %2530 = vmatprep.mubr.f32.mxu0 0.0
        %2531 = vmatmul.mubr.f32.gmra.mxu0 %v2458
        %v2532 = vpop.f32.mrf.mxu0
        %v2533 = vadd.f32 0.0, %v2532
        %v2534 = vpop.f32.mrf.mxu0
        %2535 = vmatprep.mubr.f32.mxu0 0.0
        %2536 = vmatmul.mubr.f32.gmra.mxu0 %v2460
        %v2537 = vpop.f32.mrf.mxu0
        %v2538 = vadd.f32 0.0, %v2537
        %v2539 = vpop.f32.mrf.mxu0
        %2540 = vdwg.mxu0
        %v2541 = vmul.f32 %v2284, 0.17677669
        %v2542 = vmul.f32 %v2289, 0.17677669
        %v2543 = vmul.f32 %v2367, 0.17677669
        %v2544 = vmul.f32 %v2372, 0.17677669
        %v2545 = vmul.f32 %v2450, 0.17677669
        %v2546 = vmul.f32 %v2455, 0.17677669
        %v2547 = vmul.f32 %v2533, 0.17677669
        %v2548 = vmul.f32 %v2538, 0.17677669
        %v2549 = vsel %vm1158, %v2541, -inf
        %2550 = vmax.xlane.f32.xlu0 %v2549
        %v2551 = vpop.xlane.xlu0 %2550
        %v2552 = vsel %vm1158, %v2542, -inf
        %2553 = vmax.xlane.f32.xlu0 %v2552
        %v2554 = vpop.xlane.xlu0 %2553
        %v2555 = vsel %vm1158, %v2543, -inf
        %2556 = vmax.xlane.f32.xlu0 %v2555
        %v2557 = vpop.xlane.xlu0 %2556
        %v2558 = vsel %vm1158, %v2544, -inf
        %2559 = vmax.xlane.f32.xlu0 %v2558
        %v2560 = vpop.xlane.xlu0 %2559
        %v2561 = vsel %vm1158, %v2545, -inf
        %2562 = vmax.xlane.f32.xlu0 %v2561
        %v2563 = vpop.xlane.xlu0 %2562
        %v2564 = vsel %vm1158, %v2546, -inf
        %2565 = vmax.xlane.f32.xlu0 %v2564
        %v2566 = vpop.xlane.xlu0 %2565
        %v2567 = vsel %vm1158, %v2547, -inf
        %2568 = vmax.xlane.f32.xlu0 %v2567
        %v2569 = vpop.xlane.xlu0 %2568
        %v2570 = vsel %vm1158, %v2548, -inf
        %2571 = vmax.xlane.f32.xlu0 %v2570
        %v2572 = vpop.xlane.xlu0 %2571
        %v2573 = vsub.f32 %v2541, %v2551
        %v2574 = vsub.f32 %v2542, %v2554
        %v2575 = vsub.f32 %v2543, %v2557
        %v2576 = vsub.f32 %v2544, %v2560
        %v2577 = vsub.f32 %v2545, %v2563
        %v2578 = vsub.f32 %v2546, %v2566
        %v2579 = vsub.f32 %v2547, %v2569
        %v2580 = vsub.f32 %v2548, %v2572
        %v2581 = vmul.f32 %v2573, 1.442695
        %v2582 = vpow.pop %v2581
        %v2583 = vmul.f32 %v2574, 1.442695
        %v2584 = vpow.pop %v2583
        %v2585 = vmul.f32 %v2575, 1.442695
        %v2586 = vpow.pop %v2585
        %v2587 = vmul.f32 %v2576, 1.442695
        %v2588 = vpow.pop %v2587
        %v2589 = vmul.f32 %v2577, 1.442695
        %v2590 = vpow.pop %v2589
        %v2591 = vmul.f32 %v2578, 1.442695
        %v2592 = vpow.pop %v2591
        %v2593 = vmul.f32 %v2579, 1.442695
        %v2594 = vpow.pop %v2593
        %v2595 = vmul.f32 %v2580, 1.442695
        %v2596 = vpow.pop %v2595
        %v2597 = vsel %vm1158, %v2582, 0.0
        %2598 = vadd.xlane.f32.xlu0 %v2597
        %v2599 = vpop.xlane.xlu0 %2598
        %v2600 = vsel %vm1158, %v2584, 0.0
        %2601 = vadd.xlane.f32.xlu0 %v2600
        %v2602 = vpop.xlane.xlu0 %2601
        %v2603 = vsel %vm1158, %v2586, 0.0
        %2604 = vadd.xlane.f32.xlu0 %v2603
        %v2605 = vpop.xlane.xlu0 %2604
        %v2606 = vsel %vm1158, %v2588, 0.0
        %2607 = vadd.xlane.f32.xlu0 %v2606
        %v2608 = vpop.xlane.xlu0 %2607
        %v2609 = vsel %vm1158, %v2590, 0.0
        %2610 = vadd.xlane.f32.xlu0 %v2609
        %v2611 = vpop.xlane.xlu0 %2610
        %v2612 = vsel %vm1158, %v2592, 0.0
        %2613 = vadd.xlane.f32.xlu0 %v2612
        %v2614 = vpop.xlane.xlu0 %2613
        %v2615 = vsel %vm1158, %v2594, 0.0
        %2616 = vadd.xlane.f32.xlu0 %v2615
        %v2617 = vpop.xlane.xlu0 %2616
        %v2618 = vsel %vm1158, %v2596, 0.0
        %2619 = vadd.xlane.f32.xlu0 %v2618
        %v2620 = vpop.xlane.xlu0 %2619
        %v2621 = vrcp.pop %v2599
        %v2622 = vrcp.pop %v2602
        %v2623 = vrcp.pop %v2605
        %v2624 = vrcp.pop %v2608
        %v2625 = vrcp.pop %v2611
        %v2626 = vrcp.pop %v2614
        %v2627 = vrcp.pop %v2617
        %v2628 = vrcp.pop %v2620
        %v2629 = vmul.f32 %v2582, %v2621
        %v2630 = vmul.f32 %v2584, %v2622
        %v2631 = vmul.f32 %v2586, %v2623
        %v2632 = vmul.f32 %v2588, %v2624
        %v2633 = vmul.f32 %v2590, %v2625
        %v2634 = vmul.f32 %v2592, %v2626
        %v2635 = vmul.f32 %v2594, %v2627
        %v2636 = vmul.f32 %v2596, %v2628
        %v2638 = vsel %vm1158, %v2629, 0
        %v2641 = vsel %vm1158, %v2630, 0
        %2643 = vmatprep.subr.mxu0 0.0
        %2644 = vmatpush1.msra.mxu0 0.0
        %2645 = vmatprep.subr.mxu0 0.0
        %2646 = vmatpush1.msra.mxu0 0.0
        %2647 = vmatprep.subr.mxu0 0.0
        %2648 = vmatpush1.msra.mxu0 0.0
        %2649 = vmatprep.subr.mxu0 0.0
        %2650 = vmatpush1.msra.mxu0 0.0
        %2651 = vmatprep.subr.mxu0 0.0
        %2652 = vmatpush1.msra.mxu0 0.0
        %2653 = vmatprep.subr.mxu0 0.0
        %2654 = vmatpush1.msra.mxu0 0.0
        %2655 = vmatprep.subr.mxu0 0.0
        %2656 = vmatpush1.msra.mxu0 0.0
        %2657 = vmatprep.subr.mxu0 0.0
        %2658 = vmatpush1.msra.mxu0 0.0
        %2659 = vmatprep.subr.mxu0 0.0
        %2660 = vmatpush1.msra.mxu0 0.0
        %2661 = vmatprep.subr.mxu0 0.0
        %2662 = vmatpush1.msra.mxu0 0.0
        %2663 = vmatprep.subr.mxu0 0.0
        %2664 = vmatpush1.msra.mxu0 0.0
        %2665 = vmatprep.subr.mxu0 0.0
        %2666 = vmatpush1.msra.mxu0 0.0
        %2667 = vmatprep.subr.mxu0 0.0
        %2668 = vmatpush1.msra.mxu0 0.0
        %2669 = vmatprep.subr.mxu0 0.0
        %2670 = vmatpush1.msra.mxu0 0.0
        %2671 = vmatprep.subr.mxu0 0.0
        %2672 = vmatpush1.msra.mxu0 %v2158
        %2673 = vmatprep.subr.mxu0 0.0
        %2674 = vmatpush1.msra.mxu0 %v2153
        %2675 = vmatprep.subr.mxu0 0.0
        %2676 = vmatpush2.msra.mxu0 0.0
        %2677 = vmatprep.subr.mxu0 0.0
        %2678 = vmatpush2.msra.mxu0 0.0
        %2679 = vmatprep.subr.mxu0 0.0
        %2680 = vmatpush2.msra.mxu0 0.0
        %2681 = vmatprep.subr.mxu0 0.0
        %2682 = vmatpush2.msra.mxu0 0.0
        %2683 = vmatprep.subr.mxu0 0.0
        %2684 = vmatpush2.msra.mxu0 0.0
        %2685 = vmatprep.subr.mxu0 0.0
        %2686 = vmatpush2.msra.mxu0 0.0
        %2687 = vmatprep.subr.mxu0 0.0
        %2688 = vmatpush2.msra.mxu0 0.0
        %2689 = vmatprep.subr.mxu0 0.0
        %2690 = vmatpush2.msra.mxu0 0.0
        %2691 = vmatprep.subr.mxu0 0.0
        %2692 = vmatpush2.msra.mxu0 0.0
        %2693 = vmatprep.subr.mxu0 0.0
        %2694 = vmatpush2.msra.mxu0 0.0
        %2695 = vmatprep.subr.mxu0 0.0
        %2696 = vmatpush2.msra.mxu0 0.0
        %2697 = vmatprep.subr.mxu0 0.0
        %2698 = vmatpush2.msra.mxu0 0.0
        %2699 = vmatprep.subr.mxu0 0.0
        %2700 = vmatpush2.msra.mxu0 0.0
        %2701 = vmatprep.subr.mxu0 0.0
        %2702 = vmatpush2.msra.mxu0 0.0
        %2703 = vmatprep.subr.mxu0 0.0
        %2704 = vmatpush2.msra.mxu0 0.0
        %2705 = vmatprep.subr.mxu0 0.0
        %2706 = vmatpush2.msra.mxu0 0.0
        %2707 = vmatprep.mubr.f32.mxu0 0.0
        %2708 = vmatmul.mubr.f32.gmra.mxu0 %v2638
        %v2709 = vpop.f32.mrf.mxu0
        %v2710 = vadd.f32 0.0, %v2709
        %v2711 = vpop.f32.mrf.mxu0
        %2712 = vmatprep.mubr.f32.mxu0 0.0
        %2713 = vmatmul.mubr.f32.gmra.mxu0 %v2641
        %v2714 = vpop.f32.mrf.mxu0
        %v2715 = vadd.f32 0.0, %v2714
        %v2716 = vpop.f32.mrf.mxu0
        %2717 = vdwg.mxu0
        %v2719 = vsel %vm1158, %v2631, 0
        %v2722 = vsel %vm1158, %v2632, 0
        %2724 = vmatprep.subr.mxu0 0.0
        %2725 = vmatpush1.msra.mxu0 0.0
        %2726 = vmatprep.subr.mxu0 0.0
        %2727 = vmatpush1.msra.mxu0 0.0
        %2728 = vmatprep.subr.mxu0 0.0
        %2729 = vmatpush1.msra.mxu0 0.0
        %2730 = vmatprep.subr.mxu0 0.0
        %2731 = vmatpush1.msra.mxu0 0.0
        %2732 = vmatprep.subr.mxu0 0.0
        %2733 = vmatpush1.msra.mxu0 0.0
        %2734 = vmatprep.subr.mxu0 0.0
        %2735 = vmatpush1.msra.mxu0 0.0
        %2736 = vmatprep.subr.mxu0 0.0
        %2737 = vmatpush1.msra.mxu0 0.0
        %2738 = vmatprep.subr.mxu0 0.0
        %2739 = vmatpush1.msra.mxu0 0.0
        %2740 = vmatprep.subr.mxu0 0.0
        %2741 = vmatpush1.msra.mxu0 0.0
        %2742 = vmatprep.subr.mxu0 0.0
        %2743 = vmatpush1.msra.mxu0 0.0
        %2744 = vmatprep.subr.mxu0 0.0
        %2745 = vmatpush1.msra.mxu0 0.0
        %2746 = vmatprep.subr.mxu0 0.0
        %2747 = vmatpush1.msra.mxu0 0.0
        %2748 = vmatprep.subr.mxu0 0.0
        %2749 = vmatpush1.msra.mxu0 0.0
        %2750 = vmatprep.subr.mxu0 0.0
        %2751 = vmatpush1.msra.mxu0 0.0
        %2752 = vmatprep.subr.mxu0 0.0
        %2753 = vmatpush1.msra.mxu0 %v2194
        %2754 = vmatprep.subr.mxu0 0.0
        %2755 = vmatpush1.msra.mxu0 %v2192
        %2756 = vmatprep.subr.mxu0 0.0
        %2757 = vmatpush2.msra.mxu0 0.0
        %2758 = vmatprep.subr.mxu0 0.0
        %2759 = vmatpush2.msra.mxu0 0.0
        %2760 = vmatprep.subr.mxu0 0.0
        %2761 = vmatpush2.msra.mxu0 0.0
        %2762 = vmatprep.subr.mxu0 0.0
        %2763 = vmatpush2.msra.mxu0 0.0
        %2764 = vmatprep.subr.mxu0 0.0
        %2765 = vmatpush2.msra.mxu0 0.0
        %2766 = vmatprep.subr.mxu0 0.0
        %2767 = vmatpush2.msra.mxu0 0.0
        %2768 = vmatprep.subr.mxu0 0.0
        %2769 = vmatpush2.msra.mxu0 0.0
        %2770 = vmatprep.subr.mxu0 0.0
        %2771 = vmatpush2.msra.mxu0 0.0
        %2772 = vmatprep.subr.mxu0 0.0
        %2773 = vmatpush2.msra.mxu0 0.0
        %2774 = vmatprep.subr.mxu0 0.0
        %2775 = vmatpush2.msra.mxu0 0.0
        %2776 = vmatprep.subr.mxu0 0.0
        %2777 = vmatpush2.msra.mxu0 0.0
        %2778 = vmatprep.subr.mxu0 0.0
        %2779 = vmatpush2.msra.mxu0 0.0
        %2780 = vmatprep.subr.mxu0 0.0
        %2781 = vmatpush2.msra.mxu0 0.0
        %2782 = vmatprep.subr.mxu0 0.0
        %2783 = vmatpush2.msra.mxu0 0.0
        %2784 = vmatprep.subr.mxu0 0.0
        %2785 = vmatpush2.msra.mxu0 0.0
        %2786 = vmatprep.subr.mxu0 0.0
        %2787 = vmatpush2.msra.mxu0 0.0
        %2788 = vmatprep.mubr.f32.mxu0 0.0
        %2789 = vmatmul.mubr.f32.gmra.mxu0 %v2719
        %v2790 = vpop.f32.mrf.mxu0
        %v2791 = vadd.f32 0.0, %v2790
        %v2792 = vpop.f32.mrf.mxu0
        %2793 = vmatprep.mubr.f32.mxu0 0.0
        %2794 = vmatmul.mubr.f32.gmra.mxu0 %v2722
        %v2795 = vpop.f32.mrf.mxu0
        %v2796 = vadd.f32 0.0, %v2795
        %v2797 = vpop.f32.mrf.mxu0
        %2798 = vdwg.mxu0
        %v2800 = vsel %vm1158, %v2633, 0
        %v2803 = vsel %vm1158, %v2634, 0
        %2805 = vmatprep.subr.mxu0 0.0
        %2806 = vmatpush1.msra.mxu0 0.0
        %2807 = vmatprep.subr.mxu0 0.0
        %2808 = vmatpush1.msra.mxu0 0.0
        %2809 = vmatprep.subr.mxu0 0.0
        %2810 = vmatpush1.msra.mxu0 0.0
        %2811 = vmatprep.subr.mxu0 0.0
        %2812 = vmatpush1.msra.mxu0 0.0
        %2813 = vmatprep.subr.mxu0 0.0
        %2814 = vmatpush1.msra.mxu0 0.0
        %2815 = vmatprep.subr.mxu0 0.0
        %2816 = vmatpush1.msra.mxu0 0.0
        %2817 = vmatprep.subr.mxu0 0.0
        %2818 = vmatpush1.msra.mxu0 0.0
        %2819 = vmatprep.subr.mxu0 0.0
        %2820 = vmatpush1.msra.mxu0 0.0
        %2821 = vmatprep.subr.mxu0 0.0
        %2822 = vmatpush1.msra.mxu0 0.0
        %2823 = vmatprep.subr.mxu0 0.0
        %2824 = vmatpush1.msra.mxu0 0.0
        %2825 = vmatprep.subr.mxu0 0.0
        %2826 = vmatpush1.msra.mxu0 0.0
        %2827 = vmatprep.subr.mxu0 0.0
        %2828 = vmatpush1.msra.mxu0 0.0
        %2829 = vmatprep.subr.mxu0 0.0
        %2830 = vmatpush1.msra.mxu0 0.0
        %2831 = vmatprep.subr.mxu0 0.0
        %2832 = vmatpush1.msra.mxu0 0.0
        %2833 = vmatprep.subr.mxu0 0.0
        %2834 = vmatpush1.msra.mxu0 %v2200
        %2835 = vmatprep.subr.mxu0 0.0
        %2836 = vmatpush1.msra.mxu0 %v2198
        %2837 = vmatprep.subr.mxu0 0.0
        %2838 = vmatpush2.msra.mxu0 0.0
        %2839 = vmatprep.subr.mxu0 0.0
        %2840 = vmatpush2.msra.mxu0 0.0
        %2841 = vmatprep.subr.mxu0 0.0
        %2842 = vmatpush2.msra.mxu0 0.0
        %2843 = vmatprep.subr.mxu0 0.0
        %2844 = vmatpush2.msra.mxu0 0.0
        %2845 = vmatprep.subr.mxu0 0.0
        %2846 = vmatpush2.msra.mxu0 0.0
        %2847 = vmatprep.subr.mxu0 0.0
        %2848 = vmatpush2.msra.mxu0 0.0
        %2849 = vmatprep.subr.mxu0 0.0
        %2850 = vmatpush2.msra.mxu0 0.0
        %2851 = vmatprep.subr.mxu0 0.0
        %2852 = vmatpush2.msra.mxu0 0.0
        %2853 = vmatprep.subr.mxu0 0.0
        %2854 = vmatpush2.msra.mxu0 0.0
        %2855 = vmatprep.subr.mxu0 0.0
        %2856 = vmatpush2.msra.mxu0 0.0
        %2857 = vmatprep.subr.mxu0 0.0
        %2858 = vmatpush2.msra.mxu0 0.0
        %2859 = vmatprep.subr.mxu0 0.0
        %2860 = vmatpush2.msra.mxu0 0.0
        %2861 = vmatprep.subr.mxu0 0.0
        %2862 = vmatpush2.msra.mxu0 0.0
        %2863 = vmatprep.subr.mxu0 0.0
        %2864 = vmatpush2.msra.mxu0 0.0
        %2865 = vmatprep.subr.mxu0 0.0
        %2866 = vmatpush2.msra.mxu0 0.0
        %2867 = vmatprep.subr.mxu0 0.0
        %2868 = vmatpush2.msra.mxu0 0.0
        %2869 = vmatprep.mubr.f32.mxu0 0.0
        %2870 = vmatmul.mubr.f32.gmra.mxu0 %v2800
        %v2871 = vpop.f32.mrf.mxu0
        %v2872 = vadd.f32 0.0, %v2871
        %v2873 = vpop.f32.mrf.mxu0
        %2874 = vmatprep.mubr.f32.mxu0 0.0
        %2875 = vmatmul.mubr.f32.gmra.mxu0 %v2803
        %v2876 = vpop.f32.mrf.mxu0
        %v2877 = vadd.f32 0.0, %v2876
        %v2878 = vpop.f32.mrf.mxu0
        %2879 = vdwg.mxu0
        %v2881 = vsel %vm1158, %v2635, 0
        %v2884 = vsel %vm1158, %v2636, 0
        %2886 = vmatprep.subr.mxu0 0.0
        %2887 = vmatpush1.msra.mxu0 0.0
        %2888 = vmatprep.subr.mxu0 0.0
        %2889 = vmatpush1.msra.mxu0 0.0
        %2890 = vmatprep.subr.mxu0 0.0
        %2891 = vmatpush1.msra.mxu0 0.0
        %2892 = vmatprep.subr.mxu0 0.0
        %2893 = vmatpush1.msra.mxu0 0.0
        %2894 = vmatprep.subr.mxu0 0.0
        %2895 = vmatpush1.msra.mxu0 0.0
        %2896 = vmatprep.subr.mxu0 0.0
        %2897 = vmatpush1.msra.mxu0 0.0
        %2898 = vmatprep.subr.mxu0 0.0
        %2899 = vmatpush1.msra.mxu0 0.0
        %2900 = vmatprep.subr.mxu0 0.0
        %2901 = vmatpush1.msra.mxu0 0.0
        %2902 = vmatprep.subr.mxu0 0.0
        %2903 = vmatpush1.msra.mxu0 0.0
        %2904 = vmatprep.subr.mxu0 0.0
        %2905 = vmatpush1.msra.mxu0 0.0
        %2906 = vmatprep.subr.mxu0 0.0
        %2907 = vmatpush1.msra.mxu0 0.0
        %2908 = vmatprep.subr.mxu0 0.0
        %2909 = vmatpush1.msra.mxu0 0.0
        %2910 = vmatprep.subr.mxu0 0.0
        %2911 = vmatpush1.msra.mxu0 0.0
        %2912 = vmatprep.subr.mxu0 0.0
        %2913 = vmatpush1.msra.mxu0 0.0
        %2914 = vmatprep.subr.mxu0 0.0
        %2915 = vmatpush1.msra.mxu0 %v2206
        %2916 = vmatprep.subr.mxu0 0.0
        %2917 = vmatpush1.msra.mxu0 %v2204
        %2918 = vmatprep.subr.mxu0 0.0
        %2919 = vmatpush2.msra.mxu0 0.0
        %2920 = vmatprep.subr.mxu0 0.0
        %2921 = vmatpush2.msra.mxu0 0.0
        %2922 = vmatprep.subr.mxu0 0.0
        %2923 = vmatpush2.msra.mxu0 0.0
        %2924 = vmatprep.subr.mxu0 0.0
        %2925 = vmatpush2.msra.mxu0 0.0
        %2926 = vmatprep.subr.mxu0 0.0
        %2927 = vmatpush2.msra.mxu0 0.0
        %2928 = vmatprep.subr.mxu0 0.0
        %2929 = vmatpush2.msra.mxu0 0.0
        %2930 = vmatprep.subr.mxu0 0.0
        %2931 = vmatpush2.msra.mxu0 0.0
        %2932 = vmatprep.subr.mxu0 0.0
        %2933 = vmatpush2.msra.mxu0 0.0
        %2934 = vmatprep.subr.mxu0 0.0
        %2935 = vmatpush2.msra.mxu0 0.0
        %2936 = vmatprep.subr.mxu0 0.0
        %2937 = vmatpush2.msra.mxu0 0.0
        %2938 = vmatprep.subr.mxu0 0.0
        %2939 = vmatpush2.msra.mxu0 0.0
        %2940 = vmatprep.subr.mxu0 0.0
        %2941 = vmatpush2.msra.mxu0 0.0
        %2942 = vmatprep.subr.mxu0 0.0
        %2943 = vmatpush2.msra.mxu0 0.0
        %2944 = vmatprep.subr.mxu0 0.0
        %2945 = vmatpush2.msra.mxu0 0.0
        %2946 = vmatprep.subr.mxu0 0.0
        %2947 = vmatpush2.msra.mxu0 0.0
        %2948 = vmatprep.subr.mxu0 0.0
        %2949 = vmatpush2.msra.mxu0 0.0
        %2950 = vmatprep.mubr.f32.mxu0 0.0
        %2951 = vmatmul.mubr.f32.gmra.mxu0 %v2881
        %v2952 = vpop.f32.mrf.mxu0
        %v2953 = vadd.f32 0.0, %v2952
        %v2954 = vpop.f32.mrf.mxu0
        %2955 = vmatprep.mubr.f32.mxu0 0.0
        %2956 = vmatmul.mubr.f32.gmra.mxu0 %v2884
        %v2957 = vpop.f32.mrf.mxu0
        %v2958 = vadd.f32 0.0, %v2957
        %v2959 = vpop.f32.mrf.mxu0
        %2960 = vdwg.mxu0
        %v2962 = vsel %vm809, %v2710, 0
        %v2965 = vsel %vm809, %v2715, 0
        %2967 = vmatprep.subr.mxu0 0.0
        %2968 = vmatpush1.msra.mxu0 0.0
        %2969 = vmatprep.subr.mxu0 0.0
        %2970 = vmatpush1.msra.mxu0 0.0
        %2971 = vmatprep.subr.mxu0 0.0
        %2972 = vmatpush1.msra.mxu0 0.0
        %2973 = vmatprep.subr.mxu0 0.0
        %2974 = vmatpush1.msra.mxu0 0.0
        %2975 = vmatprep.subr.mxu0 0.0
        %2976 = vmatpush1.msra.mxu0 0.0
        %2977 = vmatprep.subr.mxu0 0.0
        %2978 = vmatpush1.msra.mxu0 0.0
        %2979 = vmatprep.subr.mxu0 0.0
        %2980 = vmatpush1.msra.mxu0 0.0
        %2981 = vmatprep.subr.mxu0 0.0
        %2982 = vmatpush1.msra.mxu0 0.0
        %2983 = vmatprep.subr.mxu0 0.0
        %2984 = vmatpush1.msra.mxu0 0.0
        %2985 = vmatprep.subr.mxu0 0.0
        %2986 = vmatpush1.msra.mxu0 0.0
        %2987 = vmatprep.subr.mxu0 0.0
        %2988 = vmatpush1.msra.mxu0 0.0
        %2989 = vmatprep.subr.mxu0 0.0
        %2990 = vmatpush1.msra.mxu0 0.0
        %2991 = vmatprep.subr.mxu0 0.0
        %2992 = vmatpush1.msra.mxu0 %v1963
        %2993 = vmatprep.subr.mxu0 0.0
        %2994 = vmatpush1.msra.mxu0 %v1962
        %2995 = vmatprep.subr.mxu0 0.0
        %2996 = vmatpush1.msra.mxu0 %v1961
        %2997 = vmatprep.subr.mxu0 0.0
        %2998 = vmatpush1.msra.mxu0 %v1960
        %2999 = vmatprep.subr.mxu0 0.0
        %3000 = vmatpush2.msra.mxu0 0.0
        %3001 = vmatprep.subr.mxu0 0.0
        %3002 = vmatpush2.msra.mxu0 0.0
        %3003 = vmatprep.subr.mxu0 0.0
        %3004 = vmatpush2.msra.mxu0 0.0
        %3005 = vmatprep.subr.mxu0 0.0
        %3006 = vmatpush2.msra.mxu0 0.0
        %3007 = vmatprep.subr.mxu0 0.0
        %3008 = vmatpush2.msra.mxu0 0.0
        %3009 = vmatprep.subr.mxu0 0.0
        %3010 = vmatpush2.msra.mxu0 0.0
        %3011 = vmatprep.subr.mxu0 0.0
        %3012 = vmatpush2.msra.mxu0 0.0
        %3013 = vmatprep.subr.mxu0 0.0
        %3014 = vmatpush2.msra.mxu0 0.0
        %3015 = vmatprep.subr.mxu0 0.0
        %3016 = vmatpush2.msra.mxu0 0.0
        %3017 = vmatprep.subr.mxu0 0.0
        %3018 = vmatpush2.msra.mxu0 0.0
        %3019 = vmatprep.subr.mxu0 0.0
        %3020 = vmatpush2.msra.mxu0 0.0
        %3021 = vmatprep.subr.mxu0 0.0
        %3022 = vmatpush2.msra.mxu0 0.0
        %3023 = vmatprep.subr.mxu0 0.0
        %3024 = vmatpush2.msra.mxu0 0.0
        %3025 = vmatprep.subr.mxu0 0.0
        %3026 = vmatpush2.msra.mxu0 0.0
        %3027 = vmatprep.subr.mxu0 0.0
        %3028 = vmatpush2.msra.mxu0 0.0
        %3029 = vmatprep.subr.mxu0 0.0
        %3030 = vmatpush2.msra.mxu0 0.0
        %3031 = vmatprep.mubr.f32.mxu0 0.0
        %3032 = vmatmul.mubr.f32.gmra.mxu0 %v2962
        %v3033 = vpop.f32.mrf.mxu0
        %v3034 = vadd.f32 0.0, %v3033
        %v3035 = vpop.f32.mrf.mxu0
        %3036 = vmatprep.mubr.f32.mxu0 0.0
        %3037 = vmatmul.mubr.f32.gmra.mxu0 %v2965
        %v3038 = vpop.f32.mrf.mxu0
        %v3039 = vadd.f32 0.0, %v3038
        %v3040 = vpop.f32.mrf.mxu0
        %3041 = vdwg.mxu0
        %v3043 = vsel %vm809, %v2791, 0
        %v3046 = vsel %vm809, %v2796, 0
        %3048 = vmatprep.subr.mxu0 0.0
        %3049 = vmatpush1.msra.mxu0 0.0
        %3050 = vmatprep.subr.mxu0 0.0
        %3051 = vmatpush1.msra.mxu0 0.0
        %3052 = vmatprep.subr.mxu0 0.0
        %3053 = vmatpush1.msra.mxu0 0.0
        %3054 = vmatprep.subr.mxu0 0.0
        %3055 = vmatpush1.msra.mxu0 0.0
        %3056 = vmatprep.subr.mxu0 0.0
        %3057 = vmatpush1.msra.mxu0 0.0
        %3058 = vmatprep.subr.mxu0 0.0
        %3059 = vmatpush1.msra.mxu0 0.0
        %3060 = vmatprep.subr.mxu0 0.0
        %3061 = vmatpush1.msra.mxu0 0.0
        %3062 = vmatprep.subr.mxu0 0.0
        %3063 = vmatpush1.msra.mxu0 0.0
        %3064 = vmatprep.subr.mxu0 0.0
        %3065 = vmatpush1.msra.mxu0 0.0
        %3066 = vmatprep.subr.mxu0 0.0
        %3067 = vmatpush1.msra.mxu0 0.0
        %3068 = vmatprep.subr.mxu0 0.0
        %3069 = vmatpush1.msra.mxu0 0.0
        %3070 = vmatprep.subr.mxu0 0.0
        %3071 = vmatpush1.msra.mxu0 0.0
        %3072 = vmatprep.subr.mxu0 0.0
        %3073 = vmatpush1.msra.mxu0 %v1967
        %3074 = vmatprep.subr.mxu0 0.0
        %3075 = vmatpush1.msra.mxu0 %v1966
        %3076 = vmatprep.subr.mxu0 0.0
        %3077 = vmatpush1.msra.mxu0 %v1965
        %3078 = vmatprep.subr.mxu0 0.0
        %3079 = vmatpush1.msra.mxu0 %v1964
        %3080 = vmatprep.subr.mxu0 0.0
        %3081 = vmatpush2.msra.mxu0 0.0
        %3082 = vmatprep.subr.mxu0 0.0
        %3083 = vmatpush2.msra.mxu0 0.0
        %3084 = vmatprep.subr.mxu0 0.0
        %3085 = vmatpush2.msra.mxu0 0.0
        %3086 = vmatprep.subr.mxu0 0.0
        %3087 = vmatpush2.msra.mxu0 0.0
        %3088 = vmatprep.subr.mxu0 0.0
        %3089 = vmatpush2.msra.mxu0 0.0
        %3090 = vmatprep.subr.mxu0 0.0
        %3091 = vmatpush2.msra.mxu0 0.0
        %3092 = vmatprep.subr.mxu0 0.0
        %3093 = vmatpush2.msra.mxu0 0.0
        %3094 = vmatprep.subr.mxu0 0.0
        %3095 = vmatpush2.msra.mxu0 0.0
        %3096 = vmatprep.subr.mxu0 0.0
        %3097 = vmatpush2.msra.mxu0 0.0
        %3098 = vmatprep.subr.mxu0 0.0
        %3099 = vmatpush2.msra.mxu0 0.0
        %3100 = vmatprep.subr.mxu0 0.0
        %3101 = vmatpush2.msra.mxu0 0.0
        %3102 = vmatprep.subr.mxu0 0.0
        %3103 = vmatpush2.msra.mxu0 0.0
        %3104 = vmatprep.subr.mxu0 0.0
        %3105 = vmatpush2.msra.mxu0 0.0
        %3106 = vmatprep.subr.mxu0 0.0
        %3107 = vmatpush2.msra.mxu0 0.0
        %3108 = vmatprep.subr.mxu0 0.0
        %3109 = vmatpush2.msra.mxu0 0.0
        %3110 = vmatprep.subr.mxu0 0.0
        %3111 = vmatpush2.msra.mxu0 0.0
        %3112 = vmatprep.mubr.f32.mxu0 0.0
        %3113 = vmatmul.mubr.f32.gmra.mxu0 %v3043
        %v3114 = vpop.f32.mrf.mxu0
        %v3115 = vadd.f32 0.0, %v3114
        %v3116 = vpop.f32.mrf.mxu0
        %3117 = vmatprep.mubr.f32.mxu0 0.0
        %3118 = vmatmul.mubr.f32.gmra.mxu0 %v3046
        %v3119 = vpop.f32.mrf.mxu0
        %v3120 = vadd.f32 0.0, %v3119
        %v3121 = vpop.f32.mrf.mxu0
        %3122 = vdwg.mxu0
        %v3124 = vsel %vm809, %v2872, 0
        %v3127 = vsel %vm809, %v2877, 0
        %3129 = vmatprep.subr.mxu0 0.0
        %3130 = vmatpush1.msra.mxu0 0.0
        %3131 = vmatprep.subr.mxu0 0.0
        %3132 = vmatpush1.msra.mxu0 0.0
        %3133 = vmatprep.subr.mxu0 0.0
        %3134 = vmatpush1.msra.mxu0 0.0
        %3135 = vmatprep.subr.mxu0 0.0
        %3136 = vmatpush1.msra.mxu0 0.0
        %3137 = vmatprep.subr.mxu0 0.0
        %3138 = vmatpush1.msra.mxu0 0.0
        %3139 = vmatprep.subr.mxu0 0.0
        %3140 = vmatpush1.msra.mxu0 0.0
        %3141 = vmatprep.subr.mxu0 0.0
        %3142 = vmatpush1.msra.mxu0 0.0
        %3143 = vmatprep.subr.mxu0 0.0
        %3144 = vmatpush1.msra.mxu0 0.0
        %3145 = vmatprep.subr.mxu0 0.0
        %3146 = vmatpush1.msra.mxu0 0.0
        %3147 = vmatprep.subr.mxu0 0.0
        %3148 = vmatpush1.msra.mxu0 0.0
        %3149 = vmatprep.subr.mxu0 0.0
        %3150 = vmatpush1.msra.mxu0 0.0
        %3151 = vmatprep.subr.mxu0 0.0
        %3152 = vmatpush1.msra.mxu0 0.0
        %3153 = vmatprep.subr.mxu0 0.0
        %3154 = vmatpush1.msra.mxu0 %v1971
        %3155 = vmatprep.subr.mxu0 0.0
        %3156 = vmatpush1.msra.mxu0 %v1970
        %3157 = vmatprep.subr.mxu0 0.0
        %3158 = vmatpush1.msra.mxu0 %v1969
        %3159 = vmatprep.subr.mxu0 0.0
        %3160 = vmatpush1.msra.mxu0 %v1968
        %3161 = vmatprep.subr.mxu0 0.0
        %3162 = vmatpush2.msra.mxu0 0.0
        %3163 = vmatprep.subr.mxu0 0.0
        %3164 = vmatpush2.msra.mxu0 0.0
        %3165 = vmatprep.subr.mxu0 0.0
        %3166 = vmatpush2.msra.mxu0 0.0
        %3167 = vmatprep.subr.mxu0 0.0
        %3168 = vmatpush2.msra.mxu0 0.0
        %3169 = vmatprep.subr.mxu0 0.0
        %3170 = vmatpush2.msra.mxu0 0.0
        %3171 = vmatprep.subr.mxu0 0.0
        %3172 = vmatpush2.msra.mxu0 0.0
        %3173 = vmatprep.subr.mxu0 0.0
        %3174 = vmatpush2.msra.mxu0 0.0
        %3175 = vmatprep.subr.mxu0 0.0
        %3176 = vmatpush2.msra.mxu0 0.0
        %3177 = vmatprep.subr.mxu0 0.0
        %3178 = vmatpush2.msra.mxu0 0.0
        %3179 = vmatprep.subr.mxu0 0.0
        %3180 = vmatpush2.msra.mxu0 0.0
        %3181 = vmatprep.subr.mxu0 0.0
        %3182 = vmatpush2.msra.mxu0 0.0
        %3183 = vmatprep.subr.mxu0 0.0
        %3184 = vmatpush2.msra.mxu0 0.0
        %3185 = vmatprep.subr.mxu0 0.0
        %3186 = vmatpush2.msra.mxu0 0.0
        %3187 = vmatprep.subr.mxu0 0.0
        %3188 = vmatpush2.msra.mxu0 0.0
        %3189 = vmatprep.subr.mxu0 0.0
        %3190 = vmatpush2.msra.mxu0 0.0
        %3191 = vmatprep.subr.mxu0 0.0
        %3192 = vmatpush2.msra.mxu0 0.0
        %3193 = vmatprep.mubr.f32.mxu0 0.0
        %3194 = vmatmul.mubr.f32.gmra.mxu0 %v3124
        %v3195 = vpop.f32.mrf.mxu0
        %v3196 = vadd.f32 0.0, %v3195
        %v3197 = vpop.f32.mrf.mxu0
        %3198 = vmatprep.mubr.f32.mxu0 0.0
        %3199 = vmatmul.mubr.f32.gmra.mxu0 %v3127
        %v3200 = vpop.f32.mrf.mxu0
        %v3201 = vadd.f32 0.0, %v3200
        %v3202 = vpop.f32.mrf.mxu0
        %3203 = vdwg.mxu0
        %v3205 = vsel %vm809, %v2953, 0
        %v3208 = vsel %vm809, %v2958, 0
        %3210 = vmatprep.subr.mxu0 0.0
        %3211 = vmatpush1.msra.mxu0 0.0
        %3212 = vmatprep.subr.mxu0 0.0
        %3213 = vmatpush1.msra.mxu0 0.0
        %3214 = vmatprep.subr.mxu0 0.0
        %3215 = vmatpush1.msra.mxu0 0.0
        %3216 = vmatprep.subr.mxu0 0.0
        %3217 = vmatpush1.msra.mxu0 0.0
        %3218 = vmatprep.subr.mxu0 0.0
        %3219 = vmatpush1.msra.mxu0 0.0
        %3220 = vmatprep.subr.mxu0 0.0
        %3221 = vmatpush1.msra.mxu0 0.0
        %3222 = vmatprep.subr.mxu0 0.0
        %3223 = vmatpush1.msra.mxu0 0.0
        %3224 = vmatprep.subr.mxu0 0.0
        %3225 = vmatpush1.msra.mxu0 0.0
        %3226 = vmatprep.subr.mxu0 0.0
        %3227 = vmatpush1.msra.mxu0 0.0
        %3228 = vmatprep.subr.mxu0 0.0
        %3229 = vmatpush1.msra.mxu0 0.0
        %3230 = vmatprep.subr.mxu0 0.0
        %3231 = vmatpush1.msra.mxu0 0.0
        %3232 = vmatprep.subr.mxu0 0.0
        %3233 = vmatpush1.msra.mxu0 0.0
        %3234 = vmatprep.subr.mxu0 0.0
        %3235 = vmatpush1.msra.mxu0 %v1975
        %3236 = vmatprep.subr.mxu0 0.0
        %3237 = vmatpush1.msra.mxu0 %v1974
        %3238 = vmatprep.subr.mxu0 0.0
        %3239 = vmatpush1.msra.mxu0 %v1973
        %3240 = vmatprep.subr.mxu0 0.0
        %3241 = vmatpush1.msra.mxu0 %v1972
        %3242 = vmatprep.subr.mxu0 0.0
        %3243 = vmatpush2.msra.mxu0 0.0
        %3244 = vmatprep.subr.mxu0 0.0
        %3245 = vmatpush2.msra.mxu0 0.0
        %3246 = vmatprep.subr.mxu0 0.0
        %3247 = vmatpush2.msra.mxu0 0.0
        %3248 = vmatprep.subr.mxu0 0.0
        %3249 = vmatpush2.msra.mxu0 0.0
        %3250 = vmatprep.subr.mxu0 0.0
        %3251 = vmatpush2.msra.mxu0 0.0
        %3252 = vmatprep.subr.mxu0 0.0
        %3253 = vmatpush2.msra.mxu0 0.0
        %3254 = vmatprep.subr.mxu0 0.0
        %3255 = vmatpush2.msra.mxu0 0.0
        %3256 = vmatprep.subr.mxu0 0.0
        %3257 = vmatpush2.msra.mxu0 0.0
        %3258 = vmatprep.subr.mxu0 0.0
        %3259 = vmatpush2.msra.mxu0 0.0
        %3260 = vmatprep.subr.mxu0 0.0
        %3261 = vmatpush2.msra.mxu0 0.0
        %3262 = vmatprep.subr.mxu0 0.0
        %3263 = vmatpush2.msra.mxu0 0.0
        %3264 = vmatprep.subr.mxu0 0.0
        %3265 = vmatpush2.msra.mxu0 0.0
        %3266 = vmatprep.subr.mxu0 0.0
        %3267 = vmatpush2.msra.mxu0 0.0
        %3268 = vmatprep.subr.mxu0 0.0
        %3269 = vmatpush2.msra.mxu0 0.0
        %3270 = vmatprep.subr.mxu0 0.0
        %3271 = vmatpush2.msra.mxu0 0.0
        %3272 = vmatprep.subr.mxu0 0.0
        %3273 = vmatpush2.msra.mxu0 0.0
        %3274 = vmatprep.mubr.f32.mxu0 0.0
        %3275 = vmatmul.mubr.f32.gmra.mxu0 %v3205
        %v3276 = vpop.f32.mrf.mxu0
        %v3277 = vadd.f32 0.0, %v3276
        %v3278 = vpop.f32.mrf.mxu0
        %3279 = vmatprep.mubr.f32.mxu0 0.0
        %3280 = vmatmul.mubr.f32.gmra.mxu0 %v3208
        %v3281 = vpop.f32.mrf.mxu0
        %v3282 = vadd.f32 0.0, %v3281
        %v3283 = vpop.f32.mrf.mxu0
        %3284 = vdwg.mxu0
        %v3285 = vadd.f32 %v3034, %v3115
        %v3286 = vadd.f32 %v3285, %v3196
        %v3287 = vadd.f32 %v3286, %v3277
        %v3288 = vadd.f32 %v3039, %v3120
        %v3289 = vadd.f32 %v3288, %v3201
        %v3290 = vadd.f32 %v3289, %v3282
        %v3292 = vlaneseq
        %v3293 = vshrl.u32 %v3292, 7
        %v3294 = vsub.s32 0, %v3293
        %v3295 = vrot.slane %v1976, %v3294
        %v3297 = vadd.f32 %v3287, %v3295
        %v3298 = vadd.f32 %v3290, %v3295
        %v3299 = vadd.f32 %v1909, %v3297
        %v3300 = vadd.f32 %v1910, %v3298
        %v3301 = vmul.f32 %v3299, %v3299
        %v3302 = vmul.f32 %v3300, %v3300
        %3303 = vadd.xlane.f32.xlu0 %v3301
        %v3304 = vpop.xlane.xlu0 %3303
        %3305 = vadd.xlane.f32.xlu0 %v3302
        %v3306 = vpop.xlane.xlu0 %3305
        %v3307 = vmul.f32 %v3304, %v576
        %v3308 = vmul.f32 %v3306, %v576
        %v3309 = vadd.f32 %v3307, 1e-06
        %v3310 = vadd.f32 %v3308, 1e-06
        %v3311 = vrsqrt.pop %v3309
        %v3312 = vrsqrt.pop %v3310
        %v3313 = vmul.f32 %v3299, %v3311
        %v3314 = vmul.f32 %v3300, %v3312
        %v3315 = vmul.f32 %v589, %v3313
        %v3316 = vmul.f32 %v589, %v3314
        %v3317 = vld [vmem:[%s11] sm:$0xff]
        %v3318 = vld [vmem:[%s11 + $0x8] sm:$0xff]
        %v3319 = vld [vmem:[%s11 + $0x10] sm:$0xff]
        %v3320 = vld [vmem:[%s11 + $0x18] sm:$0xff]
        %v3321 = vld [vmem:[%s11 + $0x20] sm:$0xff]
        %v3322 = vld [vmem:[%s11 + $0x28] sm:$0xff]
        %v3323 = vld [vmem:[%s11 + $0x30] sm:$0xff]
        %v3324 = vld [vmem:[%s11 + $0x38] sm:$0xff]
        %v3325 = vld [vmem:[%s11 + $0x40] sm:$0xff]
        %v3326 = vld [vmem:[%s11 + $0x48] sm:$0xff]
        %v3327 = vld [vmem:[%s11 + $0x50] sm:$0xff]
        %v3328 = vld [vmem:[%s11 + $0x58] sm:$0xff]
        %v3329 = vld [vmem:[%s11 + $0x60] sm:$0xff]
        %v3330 = vld [vmem:[%s11 + $0x68] sm:$0xff]
        %v3331 = vld [vmem:[%s11 + $0x70] sm:$0xff]
        %v3332 = vld [vmem:[%s11 + $0x78] sm:$0xff]
        %v3333 = vld [vmem:[%s11 + $0x80] sm:$0xff]
        %v3334 = vld [vmem:[%s11 + $0x88] sm:$0xff]
        %v3335 = vld [vmem:[%s11 + $0x90] sm:$0xff]
        %v3336 = vld [vmem:[%s11 + $0x98] sm:$0xff]
        %v3337 = vld [vmem:[%s11 + $0xa0] sm:$0xff]
        %v3338 = vld [vmem:[%s11 + $0xa8] sm:$0xff]
        %v3339 = vld [vmem:[%s11 + $0xb0] sm:$0xff]
        %v3340 = vld [vmem:[%s11 + $0xb8] sm:$0xff]
        %v3341 = vld [vmem:[%s11 + $0xc0] sm:$0xff]
        %v3342 = vld [vmem:[%s11 + $0xc8] sm:$0xff]
        %v3343 = vld [vmem:[%s11 + $0xd0] sm:$0xff]
        %v3344 = vld [vmem:[%s11 + $0xd8] sm:$0xff]
        %v3345 = vld [vmem:[%s11 + $0xe0] sm:$0xff]
        %v3346 = vld [vmem:[%s11 + $0xe8] sm:$0xff]
        %v3347 = vld [vmem:[%s11 + $0xf0] sm:$0xff]
        %v3348 = vld [vmem:[%s11 + $0xf8] sm:$0xff]
        %v3349 = vld [vmem:[%s12] sm:$0x3]
        %v3351 = vlaneseq
        %v3352 = vshrl.u32 %v3351, 7
        %v3353 = vsub.s32 0, %v3352
        %v3354 = vrot.slane %v3349, %v3353
        %v3355 = vlaneseq
        %v3356 = vshrl.u32 %v3355, 7
        %v3357 = vsub.s32 1, %v3356
        %v3358 = vrot.slane %v3349, %v3357
        %3361 = vmatprep.subr.mxu0 %v3348
        %3362 = vmatpush1.msra.mxu0 %v3347
        %3363 = vmatprep.subr.mxu0 %v3346
        %3364 = vmatpush1.msra.mxu0 %v3345
        %3365 = vmatprep.subr.mxu0 %v3344
        %3366 = vmatpush1.msra.mxu0 %v3343
        %3367 = vmatprep.subr.mxu0 %v3342
        %3368 = vmatpush1.msra.mxu0 %v3341
        %3369 = vmatprep.subr.mxu0 %v3340
        %3370 = vmatpush1.msra.mxu0 %v3339
        %3371 = vmatprep.subr.mxu0 %v3338
        %3372 = vmatpush1.msra.mxu0 %v3337
        %3373 = vmatprep.subr.mxu0 %v3336
        %3374 = vmatpush1.msra.mxu0 %v3335
        %3375 = vmatprep.subr.mxu0 %v3334
        %3376 = vmatpush1.msra.mxu0 %v3333
        %3377 = vmatprep.subr.mxu0 %v3332
        %3378 = vmatpush1.msra.mxu0 %v3331
        %3379 = vmatprep.subr.mxu0 %v3330
        %3380 = vmatpush1.msra.mxu0 %v3329
        %3381 = vmatprep.subr.mxu0 %v3328
        %3382 = vmatpush1.msra.mxu0 %v3327
        %3383 = vmatprep.subr.mxu0 %v3326
        %3384 = vmatpush1.msra.mxu0 %v3325
        %3385 = vmatprep.subr.mxu0 %v3324
        %3386 = vmatpush1.msra.mxu0 %v3323
        %3387 = vmatprep.subr.mxu0 %v3322
        %3388 = vmatpush1.msra.mxu0 %v3321
        %3389 = vmatprep.subr.mxu0 %v3320
        %3390 = vmatpush1.msra.mxu0 %v3319
        %3391 = vmatprep.subr.mxu0 %v3318
        %3392 = vmatpush1.msra.mxu0 %v3317
        %3393 = vmatprep.subr.mxu0 0.0
        %3394 = vmatpush2.msra.mxu0 0.0
        %3395 = vmatprep.subr.mxu0 0.0
        %3396 = vmatpush2.msra.mxu0 0.0
        %3397 = vmatprep.subr.mxu0 0.0
        %3398 = vmatpush2.msra.mxu0 0.0
        %3399 = vmatprep.subr.mxu0 0.0
        %3400 = vmatpush2.msra.mxu0 0.0
        %3401 = vmatprep.subr.mxu0 0.0
        %3402 = vmatpush2.msra.mxu0 0.0
        %3403 = vmatprep.subr.mxu0 0.0
        %3404 = vmatpush2.msra.mxu0 0.0
        %3405 = vmatprep.subr.mxu0 0.0
        %3406 = vmatpush2.msra.mxu0 0.0
        %3407 = vmatprep.subr.mxu0 0.0
        %3408 = vmatpush2.msra.mxu0 0.0
        %3409 = vmatprep.subr.mxu0 0.0
        %3410 = vmatpush2.msra.mxu0 0.0
        %3411 = vmatprep.subr.mxu0 0.0
        %3412 = vmatpush2.msra.mxu0 0.0
        %3413 = vmatprep.subr.mxu0 0.0
        %3414 = vmatpush2.msra.mxu0 0.0
        %3415 = vmatprep.subr.mxu0 0.0
        %3416 = vmatpush2.msra.mxu0 0.0
        %3417 = vmatprep.subr.mxu0 0.0
        %3418 = vmatpush2.msra.mxu0 0.0
        %3419 = vmatprep.subr.mxu0 0.0
        %3420 = vmatpush2.msra.mxu0 0.0
        %3421 = vmatprep.subr.mxu0 0.0
        %3422 = vmatpush2.msra.mxu0 0.0
        %3423 = vmatprep.subr.mxu0 0.0
        %3424 = vmatpush2.msra.mxu0 0.0
        %3425 = vmatprep.mubr.f32.mxu0 0.0
        %3426 = vmatmul.mubr.f32.gmra.mxu0 %v3315
        %v3427 = vpop.f32.mrf.mxu0
        %v3428 = vadd.f32 %v3354, %v3427
        %v3429 = vpop.f32.mrf.mxu0
        %v3430 = vadd.f32 %v3358, %v3429
        %3431 = vmatprep.mubr.f32.mxu0 0.0
        %3432 = vmatmul.mubr.f32.gmra.mxu0 %v3316
        %v3433 = vpop.f32.mrf.mxu0
        %v3434 = vadd.f32 %v3354, %v3433
        %v3435 = vpop.f32.mrf.mxu0
        %v3436 = vadd.f32 %v3358, %v3435
        %3437 = vdwg.mxu0
        %v3438 = vmax.f32 %v3428, 0.0
        %v3439 = vmax.f32 %v3430, 0.0
        %v3440 = vmax.f32 %v3434, 0.0
        %v3441 = vmax.f32 %v3436, 0.0
        %v3442 = vld [vmem:[%s13] sm:$0xff]
        %v3443 = vld [vmem:[%s13 + $0x8] sm:$0xff]
        %v3444 = vld [vmem:[%s13 + $0x10] sm:$0xff]
        %v3445 = vld [vmem:[%s13 + $0x18] sm:$0xff]
        %v3446 = vld [vmem:[%s13 + $0x20] sm:$0xff]
        %v3447 = vld [vmem:[%s13 + $0x28] sm:$0xff]
        %v3448 = vld [vmem:[%s13 + $0x30] sm:$0xff]
        %v3449 = vld [vmem:[%s13 + $0x38] sm:$0xff]
        %v3450 = vld [vmem:[%s13 + $0x40] sm:$0xff]
        %v3451 = vld [vmem:[%s13 + $0x48] sm:$0xff]
        %v3452 = vld [vmem:[%s13 + $0x50] sm:$0xff]
        %v3453 = vld [vmem:[%s13 + $0x58] sm:$0xff]
        %v3454 = vld [vmem:[%s13 + $0x60] sm:$0xff]
        %v3455 = vld [vmem:[%s13 + $0x68] sm:$0xff]
        %v3456 = vld [vmem:[%s13 + $0x70] sm:$0xff]
        %v3457 = vld [vmem:[%s13 + $0x78] sm:$0xff]
        %v3458 = vld [vmem:[%s13 + $0x80] sm:$0xff]
        %v3459 = vld [vmem:[%s13 + $0x88] sm:$0xff]
        %v3460 = vld [vmem:[%s13 + $0x90] sm:$0xff]
        %v3461 = vld [vmem:[%s13 + $0x98] sm:$0xff]
        %v3462 = vld [vmem:[%s13 + $0xa0] sm:$0xff]
        %v3463 = vld [vmem:[%s13 + $0xa8] sm:$0xff]
        %v3464 = vld [vmem:[%s13 + $0xb0] sm:$0xff]
        %v3465 = vld [vmem:[%s13 + $0xb8] sm:$0xff]
        %v3466 = vld [vmem:[%s13 + $0xc0] sm:$0xff]
        %v3467 = vld [vmem:[%s13 + $0xc8] sm:$0xff]
        %v3468 = vld [vmem:[%s13 + $0xd0] sm:$0xff]
        %v3469 = vld [vmem:[%s13 + $0xd8] sm:$0xff]
        %v3470 = vld [vmem:[%s13 + $0xe0] sm:$0xff]
        %v3471 = vld [vmem:[%s13 + $0xe8] sm:$0xff]
        %v3472 = vld [vmem:[%s13 + $0xf0] sm:$0xff]
        %v3473 = vld [vmem:[%s13 + $0xf8] sm:$0xff]
        %v3474 = vld [vmem:[%s14] sm:$0x1]
        %v3476 = vlaneseq
        %v3477 = vshrl.u32 %v3476, 7
        %v3478 = vsub.s32 0, %v3477
        %v3479 = vrot.slane %v3474, %v3478
        %3481 = vmatprep.subr.mxu0 0.0
        %3482 = vmatpush1.msra.mxu0 %v3457
        %3483 = vmatprep.subr.mxu0 0.0
        %3484 = vmatpush1.msra.mxu0 %v3456
        %3485 = vmatprep.subr.mxu0 0.0
        %3486 = vmatpush1.msra.mxu0 %v3455
        %3487 = vmatprep.subr.mxu0 0.0
        %3488 = vmatpush1.msra.mxu0 %v3454
        %3489 = vmatprep.subr.mxu0 0.0
        %3490 = vmatpush1.msra.mxu0 %v3453
        %3491 = vmatprep.subr.mxu0 0.0
        %3492 = vmatpush1.msra.mxu0 %v3452
        %3493 = vmatprep.subr.mxu0 0.0
        %3494 = vmatpush1.msra.mxu0 %v3451
        %3495 = vmatprep.subr.mxu0 0.0
        %3496 = vmatpush1.msra.mxu0 %v3450
        %3497 = vmatprep.subr.mxu0 0.0
        %3498 = vmatpush1.msra.mxu0 %v3449
        %3499 = vmatprep.subr.mxu0 0.0
        %3500 = vmatpush1.msra.mxu0 %v3448
        %3501 = vmatprep.subr.mxu0 0.0
        %3502 = vmatpush1.msra.mxu0 %v3447
        %3503 = vmatprep.subr.mxu0 0.0
        %3504 = vmatpush1.msra.mxu0 %v3446
        %3505 = vmatprep.subr.mxu0 0.0
        %3506 = vmatpush1.msra.mxu0 %v3445
        %3507 = vmatprep.subr.mxu0 0.0
        %3508 = vmatpush1.msra.mxu0 %v3444
        %3509 = vmatprep.subr.mxu0 0.0
        %3510 = vmatpush1.msra.mxu0 %v3443
        %3511 = vmatprep.subr.mxu0 0.0
        %3512 = vmatpush1.msra.mxu0 %v3442
        %3513 = vmatprep.subr.mxu0 0.0
        %3514 = vmatpush2.msra.mxu0 %v3473
        %3515 = vmatprep.subr.mxu0 0.0
        %3516 = vmatpush2.msra.mxu0 %v3472
        %3517 = vmatprep.subr.mxu0 0.0
        %3518 = vmatpush2.msra.mxu0 %v3471
        %3519 = vmatprep.subr.mxu0 0.0
        %3520 = vmatpush2.msra.mxu0 %v3470
        %3521 = vmatprep.subr.mxu0 0.0
        %3522 = vmatpush2.msra.mxu0 %v3469
        %3523 = vmatprep.subr.mxu0 0.0
        %3524 = vmatpush2.msra.mxu0 %v3468
        %3525 = vmatprep.subr.mxu0 0.0
        %3526 = vmatpush2.msra.mxu0 %v3467
        %3527 = vmatprep.subr.mxu0 0.0
        %3528 = vmatpush2.msra.mxu0 %v3466
        %3529 = vmatprep.subr.mxu0 0.0
        %3530 = vmatpush2.msra.mxu0 %v3465
        %3531 = vmatprep.subr.mxu0 0.0
        %3532 = vmatpush2.msra.mxu0 %v3464
        %3533 = vmatprep.subr.mxu0 0.0
        %3534 = vmatpush2.msra.mxu0 %v3463
        %3535 = vmatprep.subr.mxu0 0.0
        %3536 = vmatpush2.msra.mxu0 %v3462
        %3537 = vmatprep.subr.mxu0 0.0
        %3538 = vmatpush2.msra.mxu0 %v3461
        %3539 = vmatprep.subr.mxu0 0.0
        %3540 = vmatpush2.msra.mxu0 %v3460
        %3541 = vmatprep.subr.mxu0 0.0
        %3542 = vmatpush2.msra.mxu0 %v3459
        %3543 = vmatprep.subr.mxu0 0.0
        %3544 = vmatpush2.msra.mxu0 %v3458
        %3545 = vmatprep.mubr.f32.mxu0 %v3439
        %3546 = vmatmul.mubr.f32.gmra.mxu0 %v3438
        %v3547 = vpop.f32.mrf.mxu0
        %v3548 = vadd.f32 %v3479, %v3547
        %v3549 = vpop.f32.mrf.mxu0
        %3550 = vmatprep.mubr.f32.mxu0 %v3441
        %3551 = vmatmul.mubr.f32.gmra.mxu0 %v3440
        %v3552 = vpop.f32.mrf.mxu0
        %v3553 = vadd.f32 %v3479, %v3552
        %v3554 = vpop.f32.mrf.mxu0
        %3555 = vdwg.mxu0
        %v3556 = vadd.f32 %v3299, %v3548
        %v3557 = vadd.f32 %v3300, %v3553
        %3558 = vst [vmem:[%s487] sm:$0xff] %v3556
        %3559 = vst [vmem:[%s487 + $0x8] sm:$0xff] %v3557
        %s3560 = sand.u32 %s357, 1
        %s3561 = scalar_lea.sflag [#allocation3], %s3560
        %s3562 = sand.u32 %s357, 1
        %s3563 = smul.addr %s3562, 16
        %s3564 = scalar_lea.vmem [#allocation2], %s3563
        // Predicated region
        $region81: #{_t5_block_jit.1} parent=79 // pred_check
          %p3565 = pneg %p367
        $region82: #{_t5_block_jit.1} parent=79 // pred_check_branch
          %3567 = sbr.rel (%p3565) target = $region84
        $region83: #{_t5_block_jit.1} parent=79 // pred_region
          %s3569 = ssub.s32 256, 256
          %3570 = vsyncadd %s3561, %s3569
          %s3571 = smul.addr %s29, 2
          %s3572 = smul.addr %s3571, 128
          %s3573 = scalar_lea.hbm %s15, %s3572
          %s3574 = sshll.u32 %s3564, 4
          %s3575 = int_to_ptr.vmem [resolvable:$true] %s3574
          %3580 = dma.vmem_to_hbm [thread:$0]  %s3575, 256, %s3573, %s3561, 128, 128, 8
        $region84: #{_t5_block_jit.1} parent=79 // pred_fallthru
          _
      $region80: #{_t5_block_jit.1} parent=5 // pred_fallthru
        _
      %p3581 = scmp.le.s32.totalorder 2, %s24
      // Predicated region
      $region85: #{_t5_block_jit.1} parent=5 // pred_check
        %p3582 = pneg %p3581
      $region86: #{_t5_block_jit.1} parent=5 // pred_check_branch
        %3584 = sbr.rel (%p3582) target = $region88
      $region87: #{_t5_block_jit.1} parent=5 // pred_region
        %s3585 = ssub.s32 %s24, 2
        // Predicated region
        $region89: #{_t5_block_jit.1} parent=87 // pred_check
          %p3586 = pneg %p373
        $region90: #{_t5_block_jit.1} parent=87 // pred_check_branch
          %3588 = sbr.rel (%p3586) target = $region92
        $region91: #{_t5_block_jit.1} parent=87 // pred_region
          %s3589 = sand.u32 %s358, 1
          %s3590 = scalar_lea.sflag [#allocation3], %s3589
          %s3591 = sand.u32 %s358, 1
          %s3592 = smul.addr %s3591, 16
          %s3593 = scalar_lea.vmem [#allocation2], %s3592
          %3594 = dma.done %s3590, 256
        $region92: #{_t5_block_jit.1} parent=87 // pred_fallthru
          _
      $region88: #{_t5_block_jit.1} parent=5 // pred_fallthru
        _
    $region6: #{_t5_block_jit.1} parent=1 // loop_footer
      %s28 = sadd.s32 1, %s24
    $region7: #{_t5_block_jit.1} parent=1 // loop_footer_branch
      %23 = sbr.rel target = $region3
    $region8: #{_t5_block_jit.1} parent=1 // loop_exit
      _
    %3595 = vsyncpa [#allocation3], 1
    %s3596 = scalar_lea.sflag [#allocation3], 1
    %3597 = vsyncpa %s3596, 1

</llo_original>
